<compile_context>
chip_gen: v7x
topology: tpu7x:2x2x1
jax: 0.10.0
libtpu: 0.0.40
codegen_flags: <defaults>
</compile_context>

<pallas_src>
import functools

import numpy as np
import jax
import jax.numpy as jnp
from jax.experimental import pallas as pl
from jax.experimental.pallas import tpu as pltpu


def _round_up(n, m):
    return ((n + m - 1) // m) * m


def _build_fm_weights(proj, num_features, embedding_dim, project_dim):
    """Per-shift FM weights W[s, f*E+e, f'*P+p].

    prod_s[b, f*E+e] = x[b,f,e] * x[b,(f+s)%F,e]; summing prod_s @ W[s] over the
    shift set reproduces  fm[b,f,p] = sum_g gram[b,f,g] * proj[g,p]  exactly,
    with every unordered (f,g) pair (gram symmetry) accounted for exactly once.
    """
    F_, E, P = num_features, embedding_dim, project_dim
    n_shifts = F_ // 2 + 1 if F_ % 2 == 0 else (F_ + 1) // 2
    W = np.zeros((n_shifts, F_ * E, F_ * P), np.float32)
    assigned = set()
    for s in range(n_shifts):
        for a in range(F_):
            g = (a + s) % F_
            pair = (min(a, g), max(a, g))
            if pair in assigned:          # duplicate pair (e.g. second anchor at s=F/2)
                continue
            assigned.add(pair)
            f0, g0 = pair
            rows = slice(a * E, (a + 1) * E)
            # gram[f0,g0] contributes proj[g0,:] to output feature f0 ...
            W[s, rows, f0 * P:(f0 + 1) * P] += proj[g0][None, :]
            # ... and (by symmetry) proj[f0,:] to output feature g0.
            if f0 != g0:
                W[s, rows, g0 * P:(g0 + 1) * P] += proj[f0][None, :]
    assert len(assigned) == F_ * (F_ + 1) // 2, "shift set does not cover all pairs"
    return W


def _fmb_kernel(x_ref, wfm_ref, g_ref, beta_ref,
                w1_ref, b1_ref, w2_ref, b2_ref, w3_ref, b3_ref, o_ref,
                *, n_shifts, emb_dim, mxu_dtype):
    x = x_ref[...].astype(jnp.float32)                       # (bt, F*E) lane-dense
    fe = x.shape[-1]

    # --- FM stage -----------------------------------------------------------
    # Lane-rotated elementwise products (VPU + cheap lane shuffles); the
    # embedding-dim reduction and the projection are folded into one dense
    # (bt, F*E) @ (F*E, F*P) MXU matmul per shift (8 shifts for F=14).
    fm = None
    for s in range(n_shifts):
        if s == 0:
            rolled = x
        else:
            k = s * emb_dim
            rolled = jnp.concatenate([x[:, k:], x[:, :k]], axis=-1)
        prod = (x * rolled).astype(mxu_dtype)                # f32 VPU math, bf16 MXU feed
        part = jnp.dot(prod, wfm_ref[s], preferred_element_type=jnp.float32)
        fm = part if fm is None else fm + part               # (bt, F*P) f32

    # --- nn.LayerNorm(F*P): biased variance, eps=1e-5, affine (all f32) ------
    mu = jnp.mean(fm, axis=-1, keepdims=True)
    var = jnp.mean(jnp.square(fm - mu), axis=-1, keepdims=True)
    h = (fm - mu) * jax.lax.rsqrt(var + 1e-5)
    h = h * g_ref[...] + beta_ref[...]                       # (bt, F*P)

    # --- MLP: Linear->ReLU->Linear->ReLU->Linear, then final ReLU ------------
    h = jnp.maximum(jnp.dot(h.astype(mxu_dtype), w1_ref[...],
                            preferred_element_type=jnp.float32) + b1_ref[...], 0.0)
    h = jnp.maximum(jnp.dot(h.astype(mxu_dtype), w2_ref[...],
                            preferred_element_type=jnp.float32) + b2_ref[...], 0.0)
    h = jnp.maximum(jnp.dot(h.astype(mxu_dtype), w3_ref[...],
                            preferred_element_type=jnp.float32) + b3_ref[...], 0.0)
    o_ref[...] = h.astype(o_ref.dtype)                       # (bt, out_pad) full-lane store


def fmb_forward(x, params, *, num_features, embedding_dim, project_dim,
                fmb_units, fmb_dim, block_b=1024,
                input_dtype=jnp.float32, mxu_dtype=jnp.float32):
    B = x.shape[0]
    F_, E, P = num_features, embedding_dim, project_dim
    FE, FP = F_ * E, F_ * P
    U1, U2 = fmb_units
    out_pad = _round_up(fmb_dim, 128)                        # unmasked lane-dense stores

    # Batch tiling: prefer two real grid steps (megacore / v7x 2-TC), capped by block_b.
    bt = min(block_b, max(8, _round_up(-(-B // 2), 8)))
    Bp = _round_up(B, bt)

    x2 = x.reshape(B, FE).astype(input_dtype)                # 2-D lane-dense input slab
    if Bp != B:
        x2 = jnp.pad(x2, ((0, Bp - B), (0, 0)))

    wfm_np = _build_fm_weights(np.asarray(params["proj"], np.float32), F_, E, P)
    n_shifts = wfm_np.shape[0]
    wfm = jnp.asarray(wfm_np, dtype=mxu_dtype)               # (S, F*E, F*P), VMEM-resident

    g = params["ln_g"].reshape(1, FP).astype(jnp.float32)
    beta = params["ln_b"].reshape(1, FP).astype(jnp.float32)
    w1 = params["w1"].astype(mxu_dtype)                      # (F*P, U1)
    b1 = params["b1"].reshape(1, U1).astype(jnp.float32)
    w2 = params["w2"].astype(mxu_dtype)                      # (U1, U2)
    b2 = params["b2"].reshape(1, U2).astype(jnp.float32)
    # Zero-pad last Linear to 128 output lanes -> full-lane writeback.
    w3 = jnp.zeros((U2, out_pad), mxu_dtype).at[:, :fmb_dim].set(
        params["w3"].astype(mxu_dtype))
    b3 = jnp.zeros((1, out_pad), jnp.float32).at[:, :fmb_dim].set(
        params["b3"].reshape(1, fmb_dim).astype(jnp.float32))

    kernel = functools.partial(_fmb_kernel, n_shifts=n_shifts, emb_dim=E,
                               mxu_dtype=mxu_dtype)

    out = pl.pallas_call(
        kernel,
        out_shape=jax.ShapeDtypeStruct((Bp, out_pad), jnp.float32),
        grid=(Bp // bt,),
        in_specs=[
            pl.BlockSpec((bt, FE), lambda i: (i, 0)),            # x slab (per step)
            pl.BlockSpec((n_shifts, FE, FP), lambda i: (0, 0, 0)),  # FM weights (resident)
            pl.BlockSpec((1, FP), lambda i: (0, 0)),             # LN gamma
            pl.BlockSpec((1, FP), lambda i: (0, 0)),             # LN beta
            pl.BlockSpec((FP, U1), lambda i: (0, 0)),            # w1
            pl.BlockSpec((1, U1), lambda i: (0, 0)),             # b1
            pl.BlockSpec((U1, U2), lambda i: (0, 0)),            # w2
            pl.BlockSpec((1, U2), lambda i: (0, 0)),             # b2
            pl.BlockSpec((U2, out_pad), lambda i: (0, 0)),       # w3 (padded)
            pl.BlockSpec((1, out_pad), lambda i: (0, 0)),        # b3 (padded)
        ],
        out_specs=pl.BlockSpec((bt, out_pad), lambda i: (i, 0)),
        compiler_params=pltpu.CompilerParams(
            dimension_semantics=("parallel",)),
    )(x2, wfm, g, beta, w1, b1, w2, b2, w3, b3)
    return out[:B, :fmb_dim]


def fmb_reference(x, params, *, num_features, embedding_dim):
    """Pure-JAX reference mirroring the PyTorch forward."""
    B = x.shape[0]
    x3 = x.reshape(B, num_features, embedding_dim)
    projected = jnp.einsum("bfe,fp->bep", x3, params["proj"])
    fm = jnp.einsum("bfe,bep->bfp", x3, projected).reshape(B, -1)
    mu = fm.mean(-1, keepdims=True)
    var = ((fm - mu) ** 2).mean(-1, keepdims=True)
    h = (fm - mu) / jnp.sqrt(var + 1e-5) * params["ln_g"] + params["ln_b"]
    h = jax.nn.relu(h @ params["w1"] + params["b1"])
    h = jax.nn.relu(h @ params["w2"] + params["b2"])
    h = jax.nn.relu(h @ params["w3"] + params["b3"])
    return h


def init_params(key, num_features, project_dim, fmb_units, fmb_dim):
    F_, P = num_features, project_dim
    d_in = F_ * P
    U1, U2 = fmb_units
    ks = jax.random.split(key, 9)

    def lin_w(k, fan_in, fan_out):
        bound = 1.0 / float(np.sqrt(fan_in))
        return jax.random.uniform(k, (fan_in, fan_out), jnp.float32, -bound, bound)

    return {
        "proj": jax.random.normal(ks[0], (F_, P), jnp.float32),   # nn.Parameter randn
        "ln_g": 1.0 + 0.1 * jax.random.normal(ks[1], (d_in,), jnp.float32),
        "ln_b": 0.1 * jax.random.normal(ks[2], (d_in,), jnp.float32),
        "w1": lin_w(ks[3], d_in, U1),
        "b1": 0.1 * jax.random.normal(ks[4], (U1,), jnp.float32),
        "w2": lin_w(ks[5], U1, U2),
        "b2": 0.1 * jax.random.normal(ks[6], (U2,), jnp.float32),
        "w3": lin_w(ks[7], U2, fmb_dim),
        "b3": 0.1 * jax.random.normal(ks[8], (fmb_dim,), jnp.float32),
    }


if __name__ == "__main__":
    num_features, embedding_dim, project_dim = 14, 16, 8
    fmb_units, fmb_dim = [32, 32], 40
    batch = 300   # -> bt=152, grid=2 (both steps carry real samples), 4 pad rows

    key = jax.random.PRNGKey(0)
    kx, kp = jax.random.split(key)
    x = jax.random.normal(kx, (batch, num_features * embedding_dim), jnp.float32)
    params = init_params(kp, num_features, project_dim, fmb_units, fmb_dim)

    ref = fmb_reference(x, params, num_features=num_features,
                        embedding_dim=embedding_dim)

    # Strict-accuracy path: f32 operands end-to-end.
    out_f32 = fmb_forward(x, params,
                          num_features=num_features, embedding_dim=embedding_dim,
                          project_dim=project_dim, fmb_units=fmb_units,
                          fmb_dim=fmb_dim,
                          input_dtype=jnp.float32, mxu_dtype=jnp.float32)
    out_f32 = jax.block_until_ready(out_f32)
    assert out_f32.shape == (batch, fmb_dim), out_f32.shape
    err_f32 = float(jnp.max(jnp.abs(out_f32 - ref)))
    assert jnp.allclose(out_f32, ref, atol=2e-3, rtol=2e-3), f"f32 max abs err {err_f32}"

    # Production path: bf16 x stream + bf16 MXU operands (f32 accumulation and
    # f32 LayerNorm/ReLU).  bf16 operands give ~2-digit accuracy, so the
    # tolerance is loosened accordingly (per review correctness note).
    out_bf16 = fmb_forward(x, params,
                           num_features=num_features, embedding_dim=embedding_dim,
                           project_dim=project_dim, fmb_units=fmb_units,
                           fmb_dim=fmb_dim,
                           input_dtype=jnp.bfloat16, mxu_dtype=jnp.bfloat16)
    out_bf16 = jax.block_until_ready(out_bf16)
    err_bf16 = float(jnp.max(jnp.abs(out_bf16 - ref)))
    assert jnp.allclose(out_bf16, ref, atol=1e-1, rtol=1e-1), f"bf16 max abs err {err_bf16}"

    print("KERNEL_OK")
</pallas_src>

<mosaic_0001>
module attributes {stable_mosaic.version = 11 : i64} {
  func.func @_fmb_kernel(%arg0: i32, %arg1: memref<152x224xf32, #tpu.memory_space<vmem>>, %arg2: memref<8x224x112xf32, #tpu.memory_space<vmem>>, %arg3: memref<1x112xf32, #tpu.memory_space<vmem>>, %arg4: memref<1x112xf32, #tpu.memory_space<vmem>>, %arg5: memref<112x32xf32, #tpu.memory_space<vmem>>, %arg6: memref<1x32xf32, #tpu.memory_space<vmem>>, %arg7: memref<32x32xf32, #tpu.memory_space<vmem>>, %arg8: memref<1x32xf32, #tpu.memory_space<vmem>>, %arg9: memref<32x128xf32, #tpu.memory_space<vmem>>, %arg10: memref<1x128xf32, #tpu.memory_space<vmem>>, %arg11: memref<152x128xf32, #tpu.memory_space<vmem>>) attributes {dimension_semantics = [#tpu.dimension_semantics<parallel>], iteration_bounds = array<i64: 2>, scalar_prefetch = 0 : i64, scratch_operands = 0 : i64, tpu.core_type = #tpu.core_type<tc>, window_params = [{transform_indices = @transform_0, window_bounds = array<i64: 152, 224>}, {pipeline_mode = #tpu.pipeline_mode<synchronous>, transform_indices = @transform_1, window_bounds = array<i64: 8, 224, 112>}, {pipeline_mode = #tpu.pipeline_mode<synchronous>, transform_indices = @transform_2, window_bounds = array<i64: 1, 112>}, {pipeline_mode = #tpu.pipeline_mode<synchronous>, transform_indices = @transform_3, window_bounds = array<i64: 1, 112>}, {pipeline_mode = #tpu.pipeline_mode<synchronous>, transform_indices = @transform_4, window_bounds = array<i64: 112, 32>}, {pipeline_mode = #tpu.pipeline_mode<synchronous>, transform_indices = @transform_5, window_bounds = array<i64: 1, 32>}, {pipeline_mode = #tpu.pipeline_mode<synchronous>, transform_indices = @transform_6, window_bounds = array<i64: 32, 32>}, {pipeline_mode = #tpu.pipeline_mode<synchronous>, transform_indices = @transform_7, window_bounds = array<i64: 1, 32>}, {pipeline_mode = #tpu.pipeline_mode<synchronous>, transform_indices = @transform_8, window_bounds = array<i64: 32, 128>}, {pipeline_mode = #tpu.pipeline_mode<synchronous>, transform_indices = @transform_9, window_bounds = array<i64: 1, 128>}, {transform_indices = @transform_10, window_bounds = array<i64: 152, 128>}]} {
    %c0 = arith.constant 0 : index
    %c0_0 = arith.constant 0 : index
    %0 = vector.load %arg1[%c0, %c0_0] : memref<152x224xf32, #tpu.memory_space<vmem>>, vector<152x224xf32>
    %1 = arith.mulf %0, %0 : vector<152x224xf32>
    %c0_1 = arith.constant 0 : index
    %c0_2 = arith.constant 0 : index
    %c0_3 = arith.constant 0 : index
    %2 = vector.load %arg2[%c0_1, %c0_2, %c0_3] : memref<8x224x112xf32, #tpu.memory_space<vmem>>, vector<1x224x112xf32>
    %3 = vector.shape_cast %2 : vector<1x224x112xf32> to vector<224x112xf32>
    %cst = arith.constant dense<0.000000e+00> : vector<152x112xf32>
    %4 = tpu.matmul %1, %3, %cst {dimension_numbers = #tpu.dot_dimension_numbers<[1], [0], [0], [1], [0, 0, 1, 1], [], []>} : vector<152x224xf32>, vector<224x112xf32>, vector<152x112xf32> -> vector<152x112xf32>
    %5 = vector.extract_strided_slice %0 {offsets = [0, 16], sizes = [152, 208], strides = [1, 1]} : vector<152x224xf32> to vector<152x208xf32>
    %6 = vector.extract_strided_slice %0 {offsets = [0, 0], sizes = [152, 16], strides = [1, 1]} : vector<152x224xf32> to vector<152x16xf32>
    %7 = tpu.concatenate %5, %6 in 1 : vector<152x208xf32>, vector<152x16xf32> -> vector<152x224xf32>
    %8 = arith.mulf %0, %7 : vector<152x224xf32>
    %c1 = arith.constant 1 : index
    %c0_4 = arith.constant 0 : index
    %c0_5 = arith.constant 0 : index
    %9 = vector.load %arg2[%c1, %c0_4, %c0_5] : memref<8x224x112xf32, #tpu.memory_space<vmem>>, vector<1x224x112xf32>
    %10 = vector.shape_cast %9 : vector<1x224x112xf32> to vector<224x112xf32>
    %cst_6 = arith.constant dense<0.000000e+00> : vector<152x112xf32>
    %11 = tpu.matmul %8, %10, %cst_6 {dimension_numbers = #tpu.dot_dimension_numbers<[1], [0], [0], [1], [0, 0, 1, 1], [], []>} : vector<152x224xf32>, vector<224x112xf32>, vector<152x112xf32> -> vector<152x112xf32>
    %12 = arith.addf %4, %11 : vector<152x112xf32>
    %13 = vector.extract_strided_slice %0 {offsets = [0, 32], sizes = [152, 192], strides = [1, 1]} : vector<152x224xf32> to vector<152x192xf32>
    %14 = vector.extract_strided_slice %0 {offsets = [0, 0], sizes = [152, 32], strides = [1, 1]} : vector<152x224xf32> to vector<152x32xf32>
    %15 = tpu.concatenate %13, %14 in 1 : vector<152x192xf32>, vector<152x32xf32> -> vector<152x224xf32>
    %16 = arith.mulf %0, %15 : vector<152x224xf32>
    %c2 = arith.constant 2 : index
    %c0_7 = arith.constant 0 : index
    %c0_8 = arith.constant 0 : index
    %17 = vector.load %arg2[%c2, %c0_7, %c0_8] : memref<8x224x112xf32, #tpu.memory_space<vmem>>, vector<1x224x112xf32>
    %18 = vector.shape_cast %17 : vector<1x224x112xf32> to vector<224x112xf32>
    %cst_9 = arith.constant dense<0.000000e+00> : vector<152x112xf32>
    %19 = tpu.matmul %16, %18, %cst_9 {dimension_numbers = #tpu.dot_dimension_numbers<[1], [0], [0], [1], [0, 0, 1, 1], [], []>} : vector<152x224xf32>, vector<224x112xf32>, vector<152x112xf32> -> vector<152x112xf32>
    %20 = arith.addf %12, %19 : vector<152x112xf32>
    %21 = vector.extract_strided_slice %0 {offsets = [0, 48], sizes = [152, 176], strides = [1, 1]} : vector<152x224xf32> to vector<152x176xf32>
    %22 = vector.extract_strided_slice %0 {offsets = [0, 0], sizes = [152, 48], strides = [1, 1]} : vector<152x224xf32> to vector<152x48xf32>
    %23 = tpu.concatenate %21, %22 in 1 : vector<152x176xf32>, vector<152x48xf32> -> vector<152x224xf32>
    %24 = arith.mulf %0, %23 : vector<152x224xf32>
    %c3 = arith.constant 3 : index
    %c0_10 = arith.constant 0 : index
    %c0_11 = arith.constant 0 : index
    %25 = vector.load %arg2[%c3, %c0_10, %c0_11] : memref<8x224x112xf32, #tpu.memory_space<vmem>>, vector<1x224x112xf32>
    %26 = vector.shape_cast %25 : vector<1x224x112xf32> to vector<224x112xf32>
    %cst_12 = arith.constant dense<0.000000e+00> : vector<152x112xf32>
    %27 = tpu.matmul %24, %26, %cst_12 {dimension_numbers = #tpu.dot_dimension_numbers<[1], [0], [0], [1], [0, 0, 1, 1], [], []>} : vector<152x224xf32>, vector<224x112xf32>, vector<152x112xf32> -> vector<152x112xf32>
    %28 = arith.addf %20, %27 : vector<152x112xf32>
    %29 = vector.extract_strided_slice %0 {offsets = [0, 64], sizes = [152, 160], strides = [1, 1]} : vector<152x224xf32> to vector<152x160xf32>
    %30 = vector.extract_strided_slice %0 {offsets = [0, 0], sizes = [152, 64], strides = [1, 1]} : vector<152x224xf32> to vector<152x64xf32>
    %31 = tpu.concatenate %29, %30 in 1 : vector<152x160xf32>, vector<152x64xf32> -> vector<152x224xf32>
    %32 = arith.mulf %0, %31 : vector<152x224xf32>
    %c4 = arith.constant 4 : index
    %c0_13 = arith.constant 0 : index
    %c0_14 = arith.constant 0 : index
    %33 = vector.load %arg2[%c4, %c0_13, %c0_14] : memref<8x224x112xf32, #tpu.memory_space<vmem>>, vector<1x224x112xf32>
    %34 = vector.shape_cast %33 : vector<1x224x112xf32> to vector<224x112xf32>
    %cst_15 = arith.constant dense<0.000000e+00> : vector<152x112xf32>
    %35 = tpu.matmul %32, %34, %cst_15 {dimension_numbers = #tpu.dot_dimension_numbers<[1], [0], [0], [1], [0, 0, 1, 1], [], []>} : vector<152x224xf32>, vector<224x112xf32>, vector<152x112xf32> -> vector<152x112xf32>
    %36 = arith.addf %28, %35 : vector<152x112xf32>
    %37 = vector.extract_strided_slice %0 {offsets = [0, 80], sizes = [152, 144], strides = [1, 1]} : vector<152x224xf32> to vector<152x144xf32>
    %38 = vector.extract_strided_slice %0 {offsets = [0, 0], sizes = [152, 80], strides = [1, 1]} : vector<152x224xf32> to vector<152x80xf32>
    %39 = tpu.concatenate %37, %38 in 1 : vector<152x144xf32>, vector<152x80xf32> -> vector<152x224xf32>
    %40 = arith.mulf %0, %39 : vector<152x224xf32>
    %c5 = arith.constant 5 : index
    %c0_16 = arith.constant 0 : index
    %c0_17 = arith.constant 0 : index
    %41 = vector.load %arg2[%c5, %c0_16, %c0_17] : memref<8x224x112xf32, #tpu.memory_space<vmem>>, vector<1x224x112xf32>
    %42 = vector.shape_cast %41 : vector<1x224x112xf32> to vector<224x112xf32>
    %cst_18 = arith.constant dense<0.000000e+00> : vector<152x112xf32>
    %43 = tpu.matmul %40, %42, %cst_18 {dimension_numbers = #tpu.dot_dimension_numbers<[1], [0], [0], [1], [0, 0, 1, 1], [], []>} : vector<152x224xf32>, vector<224x112xf32>, vector<152x112xf32> -> vector<152x112xf32>
    %44 = arith.addf %36, %43 : vector<152x112xf32>
    %45 = vector.extract_strided_slice %0 {offsets = [0, 96], sizes = [152, 128], strides = [1, 1]} : vector<152x224xf32> to vector<152x128xf32>
    %46 = vector.extract_strided_slice %0 {offsets = [0, 0], sizes = [152, 96], strides = [1, 1]} : vector<152x224xf32> to vector<152x96xf32>
    %47 = tpu.concatenate %45, %46 in 1 : vector<152x128xf32>, vector<152x96xf32> -> vector<152x224xf32>
    %48 = arith.mulf %0, %47 : vector<152x224xf32>
    %c6 = arith.constant 6 : index
    %c0_19 = arith.constant 0 : index
    %c0_20 = arith.constant 0 : index
    %49 = vector.load %arg2[%c6, %c0_19, %c0_20] : memref<8x224x112xf32, #tpu.memory_space<vmem>>, vector<1x224x112xf32>
    %50 = vector.shape_cast %49 : vector<1x224x112xf32> to vector<224x112xf32>
    %cst_21 = arith.constant dense<0.000000e+00> : vector<152x112xf32>
    %51 = tpu.matmul %48, %50, %cst_21 {dimension_numbers = #tpu.dot_dimension_numbers<[1], [0], [0], [1], [0, 0, 1, 1], [], []>} : vector<152x224xf32>, vector<224x112xf32>, vector<152x112xf32> -> vector<152x112xf32>
    %52 = arith.addf %44, %51 : vector<152x112xf32>
    %53 = vector.extract_strided_slice %0 {offsets = [0, 112], sizes = [152, 112], strides = [1, 1]} : vector<152x224xf32> to vector<152x112xf32>
    %54 = vector.extract_strided_slice %0 {offsets = [0, 0], sizes = [152, 112], strides = [1, 1]} : vector<152x224xf32> to vector<152x112xf32>
    %55 = tpu.concatenate %53, %54 in 1 : vector<152x112xf32>, vector<152x112xf32> -> vector<152x224xf32>
    %56 = arith.mulf %0, %55 : vector<152x224xf32>
    %c7 = arith.constant 7 : index
    %c0_22 = arith.constant 0 : index
    %c0_23 = arith.constant 0 : index
    %57 = vector.load %arg2[%c7, %c0_22, %c0_23] : memref<8x224x112xf32, #tpu.memory_space<vmem>>, vector<1x224x112xf32>
    %58 = vector.shape_cast %57 : vector<1x224x112xf32> to vector<224x112xf32>
    %cst_24 = arith.constant dense<0.000000e+00> : vector<152x112xf32>
    %59 = tpu.matmul %56, %58, %cst_24 {dimension_numbers = #tpu.dot_dimension_numbers<[1], [0], [0], [1], [0, 0, 1, 1], [], []>} : vector<152x224xf32>, vector<224x112xf32>, vector<152x112xf32> -> vector<152x112xf32>
    %60 = arith.addf %52, %59 : vector<152x112xf32>
    %cst_25 = arith.constant dense<0.000000e+00> : vector<152xf32>
    %61 = vector.multi_reduction <add>, %60, %cst_25 [1] : vector<152x112xf32> to vector<152xf32>
    %62 = vector.shape_cast %61 : vector<152xf32> to vector<152x1xf32>
    %cst_26 = arith.constant 1.120000e+02 : f32
    %63 = vector.broadcast %cst_26 : f32 to vector<152x1xf32>
    %64 = arith.divf %62, %63 : vector<152x1xf32>
    %65 = vector.broadcast %64 : vector<152x1xf32> to vector<152x112xf32>
    %66 = arith.subf %60, %65 : vector<152x112xf32>
    %67 = arith.mulf %66, %66 : vector<152x112xf32>
    %cst_27 = arith.constant dense<0.000000e+00> : vector<152xf32>
    %68 = vector.multi_reduction <add>, %67, %cst_27 [1] : vector<152x112xf32> to vector<152xf32>
    %69 = vector.shape_cast %68 : vector<152xf32> to vector<152x1xf32>
    %cst_28 = arith.constant 1.120000e+02 : f32
    %70 = vector.broadcast %cst_28 : f32 to vector<152x1xf32>
    %71 = arith.divf %69, %70 : vector<152x1xf32>
    %72 = vector.broadcast %64 : vector<152x1xf32> to vector<152x112xf32>
    %73 = arith.subf %60, %72 : vector<152x112xf32>
    %cst_29 = arith.constant 9.99999974E-6 : f32
    %74 = vector.broadcast %cst_29 : f32 to vector<152x1xf32>
    %75 = arith.addf %71, %74 : vector<152x1xf32>
    %76 = math.rsqrt %75 : vector<152x1xf32>
    %77 = vector.broadcast %76 : vector<152x1xf32> to vector<152x112xf32>
    %78 = arith.mulf %73, %77 : vector<152x112xf32>
    %c0_30 = arith.constant 0 : index
    %c0_31 = arith.constant 0 : index
    %79 = vector.load %arg3[%c0_30, %c0_31] : memref<1x112xf32, #tpu.memory_space<vmem>>, vector<1x112xf32>
    %80 = vector.broadcast %79 : vector<1x112xf32> to vector<152x112xf32>
    %81 = arith.mulf %78, %80 : vector<152x112xf32>
    %c0_32 = arith.constant 0 : index
    %c0_33 = arith.constant 0 : index
    %82 = vector.load %arg4[%c0_32, %c0_33] : memref<1x112xf32, #tpu.memory_space<vmem>>, vector<1x112xf32>
    %83 = vector.broadcast %82 : vector<1x112xf32> to vector<152x112xf32>
    %84 = arith.addf %81, %83 : vector<152x112xf32>
    %c0_34 = arith.constant 0 : index
    %c0_35 = arith.constant 0 : index
    %85 = vector.load %arg5[%c0_34, %c0_35] : memref<112x32xf32, #tpu.memory_space<vmem>>, vector<112x32xf32>
    %cst_36 = arith.constant dense<0.000000e+00> : vector<152x32xf32>
    %86 = tpu.matmul %84, %85, %cst_36 {dimension_numbers = #tpu.dot_dimension_numbers<[1], [0], [0], [1], [0, 0, 1, 1], [], []>} : vector<152x112xf32>, vector<112x32xf32>, vector<152x32xf32> -> vector<152x32xf32>
    %c0_37 = arith.constant 0 : index
    %c0_38 = arith.constant 0 : index
    %87 = vector.load %arg6[%c0_37, %c0_38] : memref<1x32xf32, #tpu.memory_space<vmem>>, vector<1x32xf32>
    %88 = vector.broadcast %87 : vector<1x32xf32> to vector<152x32xf32>
    %89 = arith.addf %86, %88 : vector<152x32xf32>
    %cst_39 = arith.constant 0.000000e+00 : f32
    %90 = vector.broadcast %cst_39 : f32 to vector<152x32xf32>
    %91 = arith.maximumf %89, %90 : vector<152x32xf32>
    %c0_40 = arith.constant 0 : index
    %c0_41 = arith.constant 0 : index
    %92 = vector.load %arg7[%c0_40, %c0_41] : memref<32x32xf32, #tpu.memory_space<vmem>>, vector<32x32xf32>
    %cst_42 = arith.constant dense<0.000000e+00> : vector<152x32xf32>
    %93 = tpu.matmul %91, %92, %cst_42 {dimension_numbers = #tpu.dot_dimension_numbers<[1], [0], [0], [1], [0, 0, 1, 1], [], []>} : vector<152x32xf32>, vector<32x32xf32>, vector<152x32xf32> -> vector<152x32xf32>
    %c0_43 = arith.constant 0 : index
    %c0_44 = arith.constant 0 : index
    %94 = vector.load %arg8[%c0_43, %c0_44] : memref<1x32xf32, #tpu.memory_space<vmem>>, vector<1x32xf32>
    %95 = vector.broadcast %94 : vector<1x32xf32> to vector<152x32xf32>
    %96 = arith.addf %93, %95 : vector<152x32xf32>
    %cst_45 = arith.constant 0.000000e+00 : f32
    %97 = vector.broadcast %cst_45 : f32 to vector<152x32xf32>
    %98 = arith.maximumf %96, %97 : vector<152x32xf32>
    %c0_46 = arith.constant 0 : index
    %c0_47 = arith.constant 0 : index
    %99 = vector.load %arg9[%c0_46, %c0_47] : memref<32x128xf32, #tpu.memory_space<vmem>>, vector<32x128xf32>
    %cst_48 = arith.constant dense<0.000000e+00> : vector<152x128xf32>
    %100 = tpu.matmul %98, %99, %cst_48 {dimension_numbers = #tpu.dot_dimension_numbers<[1], [0], [0], [1], [0, 0, 1, 1], [], []>} : vector<152x32xf32>, vector<32x128xf32>, vector<152x128xf32> -> vector<152x128xf32>
    %c0_49 = arith.constant 0 : index
    %c0_50 = arith.constant 0 : index
    %101 = vector.load %arg10[%c0_49, %c0_50] : memref<1x128xf32, #tpu.memory_space<vmem>>, vector<1x128xf32>
    %102 = vector.broadcast %101 : vector<1x128xf32> to vector<152x128xf32>
    %103 = arith.addf %100, %102 : vector<152x128xf32>
    %cst_51 = arith.constant 0.000000e+00 : f32
    %104 = vector.broadcast %cst_51 : f32 to vector<152x128xf32>
    %105 = arith.maximumf %103, %104 : vector<152x128xf32>
    %c0_52 = arith.constant 0 : index
    %c0_53 = arith.constant 0 : index
    %106 = vector.load %arg11[%c0_52, %c0_53] : memref<152x128xf32, #tpu.memory_space<vmem>>, vector<152x128xf32>
    tpu.vector_store %arg11[%c0_52, %c0_53], %105 {strides = array<i32>} : memref<152x128xf32, #tpu.memory_space<vmem>>, vector<152x128xf32>,
    return
  }
  func.func @transform_0(%arg0: i32) -> (i32, i32) {
    %c0_i32 = arith.constant 0 : i32
    %c0_i32_0 = arith.constant 0 : i32
    return %arg0, %c0_i32 : i32, i32
  }
  func.func @transform_1(%arg0: i32) -> (i32, i32, i32) {
    %c0_i32 = arith.constant 0 : i32
    %c0_i32_0 = arith.constant 0 : i32
    %c0_i32_1 = arith.constant 0 : i32
    %c0_i32_2 = arith.constant 0 : i32
    return %c0_i32, %c0_i32_0, %c0_i32_1 : i32, i32, i32
  }
  func.func @transform_2(%arg0: i32) -> (i32, i32) {
    %c0_i32 = arith.constant 0 : i32
    %c0_i32_0 = arith.constant 0 : i32
    %c0_i32_1 = arith.constant 0 : i32
    return %c0_i32, %c0_i32_0 : i32, i32
  }
  func.func @transform_3(%arg0: i32) -> (i32, i32) {
    %c0_i32 = arith.constant 0 : i32
    %c0_i32_0 = arith.constant 0 : i32
    %c0_i32_1 = arith.constant 0 : i32
    return %c0_i32, %c0_i32_0 : i32, i32
  }
  func.func @transform_4(%arg0: i32) -> (i32, i32) {
    %c0_i32 = arith.constant 0 : i32
    %c0_i32_0 = arith.constant 0 : i32
    %c0_i32_1 = arith.constant 0 : i32
    return %c0_i32, %c0_i32_0 : i32, i32
  }
  func.func @transform_5(%arg0: i32) -> (i32, i32) {
    %c0_i32 = arith.constant 0 : i32
    %c0_i32_0 = arith.constant 0 : i32
    %c0_i32_1 = arith.constant 0 : i32
    return %c0_i32, %c0_i32_0 : i32, i32
  }
  func.func @transform_6(%arg0: i32) -> (i32, i32) {
    %c0_i32 = arith.constant 0 : i32
    %c0_i32_0 = arith.constant 0 : i32
    %c0_i32_1 = arith.constant 0 : i32
    return %c0_i32, %c0_i32_0 : i32, i32
  }
  func.func @transform_7(%arg0: i32) -> (i32, i32) {
    %c0_i32 = arith.constant 0 : i32
    %c0_i32_0 = arith.constant 0 : i32
    %c0_i32_1 = arith.constant 0 : i32
    return %c0_i32, %c0_i32_0 : i32, i32
  }
  func.func @transform_8(%arg0: i32) -> (i32, i32) {
    %c0_i32 = arith.constant 0 : i32
    %c0_i32_0 = arith.constant 0 : i32
    %c0_i32_1 = arith.constant 0 : i32
    return %c0_i32, %c0_i32_0 : i32, i32
  }
  func.func @transform_9(%arg0: i32) -> (i32, i32) {
    %c0_i32 = arith.constant 0 : i32
    %c0_i32_0 = arith.constant 0 : i32
    %c0_i32_1 = arith.constant 0 : i32
    return %c0_i32, %c0_i32_0 : i32, i32
  }
  func.func @transform_10(%arg0: i32) -> (i32, i32) {
    %c0_i32 = arith.constant 0 : i32
    %c0_i32_0 = arith.constant 0 : i32
    return %arg0, %c0_i32 : i32, i32
  }
}

</mosaic_0001>

<llo_original>
// kernel: tpu_custom_call.1
$region0: #{tpu_custom_call.1}
  #allocation0 [shape = 'u32[]', space=smem, size = 0x4, offset = 0x4, fixed_abs, tag = 'smem constant byte address 0x4 - core index']
  #allocation1 [shape = 'u32[144,128]{1,0:T(1,128)}', space=vmem, size = 0x12000, scoped, tag = 'internal scratch']
  %s0 = inlined_call_operand.hbm [shape: f32[304,224], index: 0, kind: input, shape index: {}]
  %s1 = inlined_call_operand.hbm [shape: f32[8,224,112], index: 1, kind: input, shape index: {}]
  %s2 = inlined_call_operand.vmem [shape: f32[1,112], index: 2, kind: input, shape index: {}]
  %s3 = inlined_call_operand.vmem [shape: f32[1,112], index: 3, kind: input, shape index: {}]
  %s4 = inlined_call_operand.vmem [shape: f32[112,32], index: 4, kind: input, shape index: {}]
  %s5 = inlined_call_operand.vmem [shape: f32[1,32], index: 5, kind: input, shape index: {}]
  %s6 = inlined_call_operand.vmem [shape: f32[32,32], index: 6, kind: input, shape index: {}]
  %s7 = inlined_call_operand.vmem [shape: f32[1,32], index: 7, kind: input, shape index: {}]
  %s8 = inlined_call_operand.vmem [shape: f32[32,128], index: 8, kind: input, shape index: {}]
  %s9 = inlined_call_operand.vmem [shape: f32[1,128], index: 9, kind: input, shape index: {}]
  %s10 = inlined_call_operand.hbm [shape: f32[304,128], index: 10, kind: output, shape index: {}]
  %s11 = sld [smem:[#allocation0]]
  $region81: #{tpu_custom_call.1} parent=0
    _
  %s13 = ssub.s32 1, %s11
  %s14 = scalar_select 0, %s13, %s11
  $region1: #{tpu_custom_call.1} parent=0
    #allocation2 [shape = 'u8[311296]{0}', space=vmem, size = 0x4c000, scoped, tag = 'input window, operand 0']
    #allocation3 [shape = 's32[2]{0}', space=sflag, size = 0x8, scoped, tag = 'scoped memory for tpu_custom_call.1']
    #allocation4 [shape = 's32[2]{0}', space=sflag, size = 0x8, scoped, tag = 'scoped memory for tpu_custom_call.1']
    #allocation5 [shape = 'u8[917504]{0}', space=vmem, size = 0xe0000, scoped, tag = 'input window, operand 1, single buffered']
    #allocation6 [shape = 's32[1]{0}', space=sflag, size = 0x4, scoped, tag = 'scoped memory for tpu_custom_call.1']
    #allocation7 [shape = 'u8[155648]{0}', space=vmem, size = 0x26000, scoped, tag = 'output window, operand 0']
    %15 = vsyncpa [#allocation3], 0
    %s16 = scalar_lea.sflag [#allocation3], 1
    %17 = vsyncpa %s16, 0
    %18 = vsyncpa [#allocation6], 0
    %19 = vsyncpa [#allocation4], 0
    %s20 = scalar_lea.sflag [#allocation4], 1
    %21 = vsyncpa %s20, 0
    loop: start=0, step=1, limit=4
    $region2: #{tpu_custom_call.1} parent=1 // loop_pre_header
      _
    $region3: #{tpu_custom_call.1} parent=1 // loop_header
      %s23 = sphi 0, %s27
      %p24 = scmp.ge.s32.totalorder %s23, 4
      %s33 = sphi 0, %s35
      %s36 = sphi 0, %s33
      %s37 = sphi 0, %s36
      %s53 = sphi 0, %s37
      %s57 = sphi 0, %s57
      %s59 = sphi 0, %s57
      %s60 = sphi 0, %s59
      %s74 = sphi 0, %s60
      %s78 = sphi 0, %s78
      %s80 = sphi 0, %s78
      %s81 = sphi 0, %s80
      %s95 = sphi 0, %s81
      %s99 = sphi 0, %s99
      %s101 = sphi 0, %s99
      %s102 = sphi 0, %s101
      %s116 = sphi 0, %s102
      %s120 = sphi 0, %s120
      %s122 = sphi 0, %s120
      %s123 = sphi 0, %s122
      %s137 = sphi 0, %s123
      %s141 = sphi 0, %s141
      %s143 = sphi 0, %s141
      %s144 = sphi 0, %s143
      %s158 = sphi 0, %s144
      %s162 = sphi 0, %s162
      %s164 = sphi 0, %s162
      %s165 = sphi 0, %s164
      %s179 = sphi 0, %s165
      %s183 = sphi 0, %s183
      %s185 = sphi 0, %s183
      %s186 = sphi 0, %s185
      %s200 = sphi 0, %s186
      %s204 = sphi 0, %s204
      %s206 = sphi 0, %s204
      %s207 = sphi 0, %s206
      %s221 = sphi 0, %s207
      %s225 = sphi 0, %s225
      %s227 = sphi 0, %s225
      %s228 = sphi 0, %s227
      %s242 = sphi 0, %s228
      %s248 = sphi 0, %s250
      %s251 = sphi 0, %s248
      %s252 = sphi 0, %s251
      %s268 = sphi 0, %s252
    $region4: #{tpu_custom_call.1} parent=1 // loop_header_branch
      %26 = sbr.rel (%p24) target = $region8
    $region5: #{tpu_custom_call.1} parent=1 // loop_body
      %s28 = ssub.s32 %s23, 1
      %s29 = ssub.s32 %s23, 2
      %s30 = sadd.s32 %s23, 1
      %s31 = ssub.s32 %s23, %s30
      %p32 = scmp.eq.s32.totalorder %s31, 0
      %s34 = sadd.s32 %s33, 1
      %s35 = scalar_select %p32, %s33, %s34
      %p38 = pneg %p32
      %p39 = scmp.eq.s32.totalorder %s23, 1
      %p40 = por %p38, %p39
      %p41 = scmp.ne.s32.totalorder %s33, %s36
      %p42 = scmp.eq.s32.totalorder %s23, 0
      %p43 = por %p41, %p42
      %p44 = scmp.ne.s32.totalorder %s33, %s36
      %p45 = scmp.eq.s32.totalorder %s28, 1
      %p46 = por %p44, %p45
      %p47 = scmp.ne.s32.totalorder %s36, %s37
      %p48 = scmp.eq.s32.totalorder %s28, 0
      %p49 = por %p47, %p48
      %p50 = scmp.ne.s32.totalorder %s36, %s37
      %p51 = scmp.eq.s32.totalorder %s29, 1
      %p52 = por %p50, %p51
      %p54 = scmp.ne.s32.totalorder %s37, %s53
      %p55 = scmp.eq.s32.totalorder %s29, 0
      %p56 = por %p54, %p55
      %s58 = sadd.s32 %s57, 1
      %p61 = scmp.eq.s32.totalorder %s23, 1
      %p62 = scmp.ne.s32.totalorder %s57, %s59
      %p63 = scmp.eq.s32.totalorder %s23, 0
      %p64 = por %p62, %p63
      %p65 = scmp.ne.s32.totalorder %s57, %s59
      %p66 = scmp.eq.s32.totalorder %s28, 1
      %p67 = por %p65, %p66
      %p68 = scmp.ne.s32.totalorder %s59, %s60
      %p69 = scmp.eq.s32.totalorder %s28, 0
      %p70 = por %p68, %p69
      %p71 = scmp.ne.s32.totalorder %s59, %s60
      %p72 = scmp.eq.s32.totalorder %s29, 1
      %p73 = por %p71, %p72
      %p75 = scmp.ne.s32.totalorder %s60, %s74
      %p76 = scmp.eq.s32.totalorder %s29, 0
      %p77 = por %p75, %p76
      %s79 = sadd.s32 %s78, 1
      %p82 = scmp.eq.s32.totalorder %s23, 1
      %p83 = scmp.ne.s32.totalorder %s78, %s80
      %p84 = scmp.eq.s32.totalorder %s23, 0
      %p85 = por %p83, %p84
      %p86 = scmp.ne.s32.totalorder %s78, %s80
      %p87 = scmp.eq.s32.totalorder %s28, 1
      %p88 = por %p86, %p87
      %p89 = scmp.ne.s32.totalorder %s80, %s81
      %p90 = scmp.eq.s32.totalorder %s28, 0
      %p91 = por %p89, %p90
      %p92 = scmp.ne.s32.totalorder %s80, %s81
      %p93 = scmp.eq.s32.totalorder %s29, 1
      %p94 = por %p92, %p93
      %p96 = scmp.ne.s32.totalorder %s81, %s95
      %p97 = scmp.eq.s32.totalorder %s29, 0
      %p98 = por %p96, %p97
      %s100 = sadd.s32 %s99, 1
      %p103 = scmp.eq.s32.totalorder %s23, 1
      %p104 = scmp.ne.s32.totalorder %s99, %s101
      %p105 = scmp.eq.s32.totalorder %s23, 0
      %p106 = por %p104, %p105
      %p107 = scmp.ne.s32.totalorder %s99, %s101
      %p108 = scmp.eq.s32.totalorder %s28, 1
      %p109 = por %p107, %p108
      %p110 = scmp.ne.s32.totalorder %s101, %s102
      %p111 = scmp.eq.s32.totalorder %s28, 0
      %p112 = por %p110, %p111
      %p113 = scmp.ne.s32.totalorder %s101, %s102
      %p114 = scmp.eq.s32.totalorder %s29, 1
      %p115 = por %p113, %p114
      %p117 = scmp.ne.s32.totalorder %s102, %s116
      %p118 = scmp.eq.s32.totalorder %s29, 0
      %p119 = por %p117, %p118
      %s121 = sadd.s32 %s120, 1
      %p124 = scmp.eq.s32.totalorder %s23, 1
      %p125 = scmp.ne.s32.totalorder %s120, %s122
      %p126 = scmp.eq.s32.totalorder %s23, 0
      %p127 = por %p125, %p126
      %p128 = scmp.ne.s32.totalorder %s120, %s122
      %p129 = scmp.eq.s32.totalorder %s28, 1
      %p130 = por %p128, %p129
      %p131 = scmp.ne.s32.totalorder %s122, %s123
      %p132 = scmp.eq.s32.totalorder %s28, 0
      %p133 = por %p131, %p132
      %p134 = scmp.ne.s32.totalorder %s122, %s123
      %p135 = scmp.eq.s32.totalorder %s29, 1
      %p136 = por %p134, %p135
      %p138 = scmp.ne.s32.totalorder %s123, %s137
      %p139 = scmp.eq.s32.totalorder %s29, 0
      %p140 = por %p138, %p139
      %s142 = sadd.s32 %s141, 1
      %p145 = scmp.eq.s32.totalorder %s23, 1
      %p146 = scmp.ne.s32.totalorder %s141, %s143
      %p147 = scmp.eq.s32.totalorder %s23, 0
      %p148 = por %p146, %p147
      %p149 = scmp.ne.s32.totalorder %s141, %s143
      %p150 = scmp.eq.s32.totalorder %s28, 1
      %p151 = por %p149, %p150
      %p152 = scmp.ne.s32.totalorder %s143, %s144
      %p153 = scmp.eq.s32.totalorder %s28, 0
      %p154 = por %p152, %p153
      %p155 = scmp.ne.s32.totalorder %s143, %s144
      %p156 = scmp.eq.s32.totalorder %s29, 1
      %p157 = por %p155, %p156
      %p159 = scmp.ne.s32.totalorder %s144, %s158
      %p160 = scmp.eq.s32.totalorder %s29, 0
      %p161 = por %p159, %p160
      %s163 = sadd.s32 %s162, 1
      %p166 = scmp.eq.s32.totalorder %s23, 1
      %p167 = scmp.ne.s32.totalorder %s162, %s164
      %p168 = scmp.eq.s32.totalorder %s23, 0
      %p169 = por %p167, %p168
      %p170 = scmp.ne.s32.totalorder %s162, %s164
      %p171 = scmp.eq.s32.totalorder %s28, 1
      %p172 = por %p170, %p171
      %p173 = scmp.ne.s32.totalorder %s164, %s165
      %p174 = scmp.eq.s32.totalorder %s28, 0
      %p175 = por %p173, %p174
      %p176 = scmp.ne.s32.totalorder %s164, %s165
      %p177 = scmp.eq.s32.totalorder %s29, 1
      %p178 = por %p176, %p177
      %p180 = scmp.ne.s32.totalorder %s165, %s179
      %p181 = scmp.eq.s32.totalorder %s29, 0
      %p182 = por %p180, %p181
      %s184 = sadd.s32 %s183, 1
      %p187 = scmp.eq.s32.totalorder %s23, 1
      %p188 = scmp.ne.s32.totalorder %s183, %s185
      %p189 = scmp.eq.s32.totalorder %s23, 0
      %p190 = por %p188, %p189
      %p191 = scmp.ne.s32.totalorder %s183, %s185
      %p192 = scmp.eq.s32.totalorder %s28, 1
      %p193 = por %p191, %p192
      %p194 = scmp.ne.s32.totalorder %s185, %s186
      %p195 = scmp.eq.s32.totalorder %s28, 0
      %p196 = por %p194, %p195
      %p197 = scmp.ne.s32.totalorder %s185, %s186
      %p198 = scmp.eq.s32.totalorder %s29, 1
      %p199 = por %p197, %p198
      %p201 = scmp.ne.s32.totalorder %s186, %s200
      %p202 = scmp.eq.s32.totalorder %s29, 0
      %p203 = por %p201, %p202
      %s205 = sadd.s32 %s204, 1
      %p208 = scmp.eq.s32.totalorder %s23, 1
      %p209 = scmp.ne.s32.totalorder %s204, %s206
      %p210 = scmp.eq.s32.totalorder %s23, 0
      %p211 = por %p209, %p210
      %p212 = scmp.ne.s32.totalorder %s204, %s206
      %p213 = scmp.eq.s32.totalorder %s28, 1
      %p214 = por %p212, %p213
      %p215 = scmp.ne.s32.totalorder %s206, %s207
      %p216 = scmp.eq.s32.totalorder %s28, 0
      %p217 = por %p215, %p216
      %p218 = scmp.ne.s32.totalorder %s206, %s207
      %p219 = scmp.eq.s32.totalorder %s29, 1
      %p220 = por %p218, %p219
      %p222 = scmp.ne.s32.totalorder %s207, %s221
      %p223 = scmp.eq.s32.totalorder %s29, 0
      %p224 = por %p222, %p223
      %s226 = sadd.s32 %s225, 1
      %p229 = scmp.eq.s32.totalorder %s23, 1
      %p230 = scmp.ne.s32.totalorder %s225, %s227
      %p231 = scmp.eq.s32.totalorder %s23, 0
      %p232 = por %p230, %p231
      %p233 = scmp.ne.s32.totalorder %s225, %s227
      %p234 = scmp.eq.s32.totalorder %s28, 1
      %p235 = por %p233, %p234
      %p236 = scmp.ne.s32.totalorder %s227, %s228
      %p237 = scmp.eq.s32.totalorder %s28, 0
      %p238 = por %p236, %p237
      %p239 = scmp.ne.s32.totalorder %s227, %s228
      %p240 = scmp.eq.s32.totalorder %s29, 1
      %p241 = por %p239, %p240
      %p243 = scmp.ne.s32.totalorder %s228, %s242
      %p244 = scmp.eq.s32.totalorder %s29, 0
      %p245 = por %p243, %p244
      %s246 = ssub.s32 %s23, %s30
      %p247 = scmp.eq.s32.totalorder %s246, 0
      %s249 = sadd.s32 %s248, 1
      %s250 = scalar_select %p247, %s248, %s249
      %p253 = pneg %p247
      %p254 = scmp.eq.s32.totalorder %s23, 1
      %p255 = por %p253, %p254
      %p256 = scmp.ne.s32.totalorder %s248, %s251
      %p257 = scmp.eq.s32.totalorder %s23, 0
      %p258 = por %p256, %p257
      %p259 = scmp.ne.s32.totalorder %s248, %s251
      %p260 = scmp.eq.s32.totalorder %s28, 1
      %p261 = por %p259, %p260
      %p262 = scmp.ne.s32.totalorder %s251, %s252
      %p263 = scmp.eq.s32.totalorder %s28, 0
      %p264 = por %p262, %p263
      %p265 = scmp.ne.s32.totalorder %s251, %s252
      %p266 = scmp.eq.s32.totalorder %s29, 1
      %p267 = por %p265, %p266
      %p269 = scmp.ne.s32.totalorder %s252, %s268
      %p270 = scmp.eq.s32.totalorder %s29, 0
      %p271 = por %p269, %p270
      %p272 = scmp.le.s32.totalorder 1, %s23
      %p273 = scmp.lt.s32.totalorder %s23, 3
      %p274 = pnand %p272, %p273
      %p275 = pneg %p274
      // Predicated region
      $region9: #{tpu_custom_call.1} parent=5 // pred_check
        _
      $region10: #{tpu_custom_call.1} parent=5 // pred_check_branch
        %277 = sbr.rel (%p274) target = $region12
      $region11: #{tpu_custom_call.1} parent=5 // pred_region
        %s278 = ssub.s32 %s23, 1
        // Predicated region
        $region13: #{tpu_custom_call.1} parent=11 // pred_check
          %p279 = pneg %p70
        $region14: #{tpu_custom_call.1} parent=11 // pred_check_branch
          %281 = sbr.rel (%p279) target = $region16
        $region15: #{tpu_custom_call.1} parent=11 // pred_region
          %s283 = ssub.s32 28672, 28672
          %284 = vsyncadd [#allocation6], %s283
          %s285 = sshll.u32 [#allocation5], 4
          %s286 = int_to_ptr.vmem [resolvable:$true] %s285
          %291 = dma.hbm_to_vmem [thread:$0]  %s1, 28672, %s286, [#allocation6], 128, 128, 8
        $region16: #{tpu_custom_call.1} parent=11 // pred_fallthru
          _
        // Predicated region
        $region17: #{tpu_custom_call.1} parent=11 // pred_check
          %p292 = pneg %p91
        $region18: #{tpu_custom_call.1} parent=11 // pred_check_branch
          %294 = sbr.rel (%p292) target = $region20
        $region19: #{tpu_custom_call.1} parent=11 // pred_region
          _
        $region20: #{tpu_custom_call.1} parent=11 // pred_fallthru
          _
        // Predicated region
        $region21: #{tpu_custom_call.1} parent=11 // pred_check
          %p295 = pneg %p112
        $region22: #{tpu_custom_call.1} parent=11 // pred_check_branch
          %297 = sbr.rel (%p295) target = $region24
        $region23: #{tpu_custom_call.1} parent=11 // pred_region
          _
        $region24: #{tpu_custom_call.1} parent=11 // pred_fallthru
          _
        // Predicated region
        $region25: #{tpu_custom_call.1} parent=11 // pred_check
          %p298 = pneg %p133
        $region26: #{tpu_custom_call.1} parent=11 // pred_check_branch
          %300 = sbr.rel (%p298) target = $region28
        $region27: #{tpu_custom_call.1} parent=11 // pred_region
          _
        $region28: #{tpu_custom_call.1} parent=11 // pred_fallthru
          _
        // Predicated region
        $region29: #{tpu_custom_call.1} parent=11 // pred_check
          %p301 = pneg %p154
        $region30: #{tpu_custom_call.1} parent=11 // pred_check_branch
          %303 = sbr.rel (%p301) target = $region32
        $region31: #{tpu_custom_call.1} parent=11 // pred_region
          _
        $region32: #{tpu_custom_call.1} parent=11 // pred_fallthru
          _
        // Predicated region
        $region33: #{tpu_custom_call.1} parent=11 // pred_check
          %p304 = pneg %p175
        $region34: #{tpu_custom_call.1} parent=11 // pred_check_branch
          %306 = sbr.rel (%p304) target = $region36
        $region35: #{tpu_custom_call.1} parent=11 // pred_region
          _
        $region36: #{tpu_custom_call.1} parent=11 // pred_fallthru
          _
        // Predicated region
        $region37: #{tpu_custom_call.1} parent=11 // pred_check
          %p307 = pneg %p196
        $region38: #{tpu_custom_call.1} parent=11 // pred_check_branch
          %309 = sbr.rel (%p307) target = $region40
        $region39: #{tpu_custom_call.1} parent=11 // pred_region
          _
        $region40: #{tpu_custom_call.1} parent=11 // pred_fallthru
          _
        // Predicated region
        $region41: #{tpu_custom_call.1} parent=11 // pred_check
          %p310 = pneg %p217
        $region42: #{tpu_custom_call.1} parent=11 // pred_check_branch
          %312 = sbr.rel (%p310) target = $region44
        $region43: #{tpu_custom_call.1} parent=11 // pred_region
          _
        $region44: #{tpu_custom_call.1} parent=11 // pred_fallthru
          _
        // Predicated region
        $region45: #{tpu_custom_call.1} parent=11 // pred_check
          %p313 = pneg %p238
        $region46: #{tpu_custom_call.1} parent=11 // pred_check_branch
          %315 = sbr.rel (%p313) target = $region48
        $region47: #{tpu_custom_call.1} parent=11 // pred_region
          _
        $region48: #{tpu_custom_call.1} parent=11 // pred_fallthru
          _
      $region12: #{tpu_custom_call.1} parent=5 // pred_fallthru
        _
      %p316 = scmp.lt.s32.totalorder %s23, 2
      // Predicated region
      $region49: #{tpu_custom_call.1} parent=5 // pred_check
        %p317 = pneg %p316
      $region50: #{tpu_custom_call.1} parent=5 // pred_check_branch
        %319 = sbr.rel (%p317) target = $region52
      $region51: #{tpu_custom_call.1} parent=5 // pred_region
        // Predicated region
        $region53: #{tpu_custom_call.1} parent=51 // pred_check
          %p320 = pneg %p43
        $region54: #{tpu_custom_call.1} parent=51 // pred_check_branch
          %322 = sbr.rel (%p320) target = $region56
        $region55: #{tpu_custom_call.1} parent=51 // pred_region
          %s323 = sand.u32 %s33, 1
          %s324 = scalar_lea.sflag [#allocation3], %s323
          %s325 = sand.u32 %s33, 1
          %s326 = smul.addr %s325, 304
          %s327 = scalar_lea.vmem [#allocation2], %s326
          %s328 = smul.u32 19, %s23
          %s330 = ssub.s32 4864, 4864
          %331 = vsyncadd %s324, %s330
          %s332 = smul.addr %s328, 2
          %s333 = smul.addr %s332, 128
          %s334 = scalar_lea.hbm %s0, %s333
          %s335 = sshll.u32 %s327, 4
          %s336 = int_to_ptr.vmem [resolvable:$true] %s335
          %341 = dma.hbm_to_vmem [thread:$0]  %s334, 4864, %s336, %s324, 256, 256, 16
        $region56: #{tpu_custom_call.1} parent=51 // pred_fallthru
          _
      $region52: #{tpu_custom_call.1} parent=5 // pred_fallthru
        _
      %p342 = scmp.le.s32.totalorder 1, %s23
      %p343 = scmp.lt.s32.totalorder %s23, 3
      %p344 = pnand %p342, %p343
      %p345 = pneg %p344
      // Predicated region
      $region57: #{tpu_custom_call.1} parent=5 // pred_check
        _
      $region58: #{tpu_custom_call.1} parent=5 // pred_check_branch
        %347 = sbr.rel (%p344) target = $region60
      $region59: #{tpu_custom_call.1} parent=5 // pred_region
        %s348 = ssub.s32 %s23, 1
        %s349 = sand.u32 %s36, 1
        %s350 = scalar_lea.sflag [#allocation3], %s349
        %s351 = sand.u32 %s36, 1
        %s352 = smul.addr %s351, 304
        %s353 = scalar_lea.vmem [#allocation2], %s352
        // Predicated region
        $region61: #{tpu_custom_call.1} parent=59 // pred_check
          %p354 = pneg %p49
        $region62: #{tpu_custom_call.1} parent=59 // pred_check_branch
          %356 = sbr.rel (%p354) target = $region64
        $region63: #{tpu_custom_call.1} parent=59 // pred_region
          %357 = dma.done %s350, 4864
        $region64: #{tpu_custom_call.1} parent=59 // pred_fallthru
          _
        // Predicated region
        $region65: #{tpu_custom_call.1} parent=59 // pred_check
          %p358 = pneg %p70
        $region66: #{tpu_custom_call.1} parent=59 // pred_check_branch
          %360 = sbr.rel (%p358) target = $region68
        $region67: #{tpu_custom_call.1} parent=59 // pred_region
          %361 = dma.done [#allocation6], 28672
        $region68: #{tpu_custom_call.1} parent=59 // pred_fallthru
          _
        %s362 = sand.u32 %s36, 1
        %s363 = scalar_lea.sflag [#allocation3], %s362
        %s364 = sand.u32 %s36, 1
        %s365 = smul.addr %s364, 304
        %s366 = scalar_lea.vmem [#allocation2], %s365
        %p367 = pneg %p49
        %p368 = pneg %p46
        %p369 = pneg %p70
        %p370 = pneg %p67
        %p371 = pneg %p91
        %p372 = pneg %p88
        %p373 = pneg %p112
        %p374 = pneg %p109
        %p375 = pneg %p133
        %p376 = pneg %p130
        %p377 = pneg %p154
        %p378 = pneg %p151
        %p379 = pneg %p175
        %p380 = pneg %p172
        %p381 = pneg %p196
        %p382 = pneg %p193
        %p383 = pneg %p217
        %p384 = pneg %p214
        %p385 = pneg %p238
        %p386 = pneg %p235
        %p387 = pneg %p264
        %p388 = pneg %p261
        %s389 = sand.u32 %s251, 1
        %s390 = scalar_lea.sflag [#allocation4], %s389
        %s391 = sand.u32 %s251, 1
        %s392 = smul.addr %s391, 152
        %s393 = scalar_lea.vmem [#allocation7], %s392
        %s394 = smul.u32 19, %s28
        %s395 = smul.u32 19, %s28
        %v396 = vld [vmem:[%s353] sm:$0xff]
        %v397 = vld [vmem:[%s353 + $0x8] sm:$0xff]
        %v398 = vld [vmem:[%s353 + $0x10] sm:$0xff]
        %v399 = vld [vmem:[%s353 + $0x18] sm:$0xff]
        %v400 = vld [vmem:[%s353 + $0x20] sm:$0xff]
        %v401 = vld [vmem:[%s353 + $0x28] sm:$0xff]
        %v402 = vld [vmem:[%s353 + $0x30] sm:$0xff]
        %v403 = vld [vmem:[%s353 + $0x38] sm:$0xff]
        %v404 = vld [vmem:[%s353 + $0x40] sm:$0xff]
        %v405 = vld [vmem:[%s353 + $0x48] sm:$0xff]
        %v406 = vld [vmem:[%s353 + $0x50] sm:$0xff]
        %v407 = vld [vmem:[%s353 + $0x58] sm:$0xff]
        %v408 = vld [vmem:[%s353 + $0x60] sm:$0xff]
        %v409 = vld [vmem:[%s353 + $0x68] sm:$0xff]
        %v410 = vld [vmem:[%s353 + $0x70] sm:$0xff]
        %v411 = vld [vmem:[%s353 + $0x78] sm:$0xff]
        %v412 = vld [vmem:[%s353 + $0x80] sm:$0xff]
        %v413 = vld [vmem:[%s353 + $0x88] sm:$0xff]
        %v414 = vld [vmem:[%s353 + $0x90] sm:$0xff]
        %v415 = vld [vmem:[%s353 + $0x98] sm:$0xff]
        %v416 = vld [vmem:[%s353 + $0xa0] sm:$0xff]
        %v417 = vld [vmem:[%s353 + $0xa8] sm:$0xff]
        %v418 = vld [vmem:[%s353 + $0xb0] sm:$0xff]
        %v419 = vld [vmem:[%s353 + $0xb8] sm:$0xff]
        %v420 = vld [vmem:[%s353 + $0xc0] sm:$0xff]
        %v421 = vld [vmem:[%s353 + $0xc8] sm:$0xff]
        %v422 = vld [vmem:[%s353 + $0xd0] sm:$0xff]
        %v423 = vld [vmem:[%s353 + $0xd8] sm:$0xff]
        %v424 = vld [vmem:[%s353 + $0xe0] sm:$0xff]
        %v425 = vld [vmem:[%s353 + $0xe8] sm:$0xff]
        %v426 = vld [vmem:[%s353 + $0xf0] sm:$0xff]
        %v427 = vld [vmem:[%s353 + $0xf8] sm:$0xff]
        %v428 = vld [vmem:[%s353 + $0x100] sm:$0xff]
        %v429 = vld [vmem:[%s353 + $0x108] sm:$0xff]
        %v430 = vld [vmem:[%s353 + $0x110] sm:$0xff]
        %v431 = vld [vmem:[%s353 + $0x118] sm:$0xff]
        %v432 = vld [vmem:[%s353 + $0x120] sm:$0xff]
        %v433 = vld [vmem:[%s353 + $0x128] sm:$0xff]
        %v434 = vmul.f32 %v396, %v396
        %v435 = vmul.f32 %v397, %v397
        %v436 = vmul.f32 %v398, %v398
        %v437 = vmul.f32 %v399, %v399
        %v438 = vmul.f32 %v400, %v400
        %v439 = vmul.f32 %v401, %v401
        %v440 = vmul.f32 %v402, %v402
        %v441 = vmul.f32 %v403, %v403
        %v442 = vmul.f32 %v404, %v404
        %v443 = vmul.f32 %v405, %v405
        %v444 = vmul.f32 %v406, %v406
        %v445 = vmul.f32 %v407, %v407
        %v446 = vmul.f32 %v408, %v408
        %v447 = vmul.f32 %v409, %v409
        %v448 = vmul.f32 %v410, %v410
        %v449 = vmul.f32 %v411, %v411
        %v450 = vmul.f32 %v412, %v412
        %v451 = vmul.f32 %v413, %v413
        %v452 = vmul.f32 %v414, %v414
        %v453 = vmul.f32 %v415, %v415
        %v454 = vmul.f32 %v416, %v416
        %v455 = vmul.f32 %v417, %v417
        %v456 = vmul.f32 %v418, %v418
        %v457 = vmul.f32 %v419, %v419
        %v458 = vmul.f32 %v420, %v420
        %v459 = vmul.f32 %v421, %v421
        %v460 = vmul.f32 %v422, %v422
        %v461 = vmul.f32 %v423, %v423
        %v462 = vmul.f32 %v424, %v424
        %v463 = vmul.f32 %v425, %v425
        %v464 = vmul.f32 %v426, %v426
        %v465 = vmul.f32 %v427, %v427
        %v466 = vmul.f32 %v428, %v428
        %v467 = vmul.f32 %v429, %v429
        %v468 = vmul.f32 %v430, %v430
        %v469 = vmul.f32 %v431, %v431
        %v470 = vmul.f32 %v432, %v432
        %v471 = vmul.f32 %v433, %v433
        %v472 = vld [vmem:[#allocation5] sm:$0xff]
        %v473 = vld [vmem:[#allocation5 + $0x8] sm:$0xff]
        %v474 = vld [vmem:[#allocation5 + $0x10] sm:$0xff]
        %v475 = vld [vmem:[#allocation5 + $0x18] sm:$0xff]
        %v476 = vld [vmem:[#allocation5 + $0x20] sm:$0xff]
        %v477 = vld [vmem:[#allocation5 + $0x28] sm:$0xff]
        %v478 = vld [vmem:[#allocation5 + $0x30] sm:$0xff]
        %v479 = vld [vmem:[#allocation5 + $0x38] sm:$0xff]
        %v480 = vld [vmem:[#allocation5 + $0x40] sm:$0xff]
        %v481 = vld [vmem:[#allocation5 + $0x48] sm:$0xff]
        %v482 = vld [vmem:[#allocation5 + $0x50] sm:$0xff]
        %v483 = vld [vmem:[#allocation5 + $0x58] sm:$0xff]
        %v484 = vld [vmem:[#allocation5 + $0x60] sm:$0xff]
        %v485 = vld [vmem:[#allocation5 + $0x68] sm:$0xff]
        %v486 = vld [vmem:[#allocation5 + $0x70] sm:$0xff]
        %v487 = vld [vmem:[#allocation5 + $0x78] sm:$0xff]
        %v488 = vld [vmem:[#allocation5 + $0x80] sm:$0xff]
        %v489 = vld [vmem:[#allocation5 + $0x88] sm:$0xff]
        %v490 = vld [vmem:[#allocation5 + $0x90] sm:$0xff]
        %v491 = vld [vmem:[#allocation5 + $0x98] sm:$0xff]
        %v492 = vld [vmem:[#allocation5 + $0xa0] sm:$0xff]
        %v493 = vld [vmem:[#allocation5 + $0xa8] sm:$0xff]
        %v494 = vld [vmem:[#allocation5 + $0xb0] sm:$0xff]
        %v495 = vld [vmem:[#allocation5 + $0xb8] sm:$0xff]
        %v496 = vld [vmem:[#allocation5 + $0xc0] sm:$0xff]
        %v497 = vld [vmem:[#allocation5 + $0xc8] sm:$0xff]
        %v498 = vld [vmem:[#allocation5 + $0xd0] sm:$0xff]
        %v499 = vld [vmem:[#allocation5 + $0xd8] sm:$0xff]
        %538 = vrot.lane.b32.xlu0 %v396, 112
        %v539 = vpop.permute.xlu0 %538
        %540 = vrot.lane.b32.xlu0 %v397, 112
        %v541 = vpop.permute.xlu0 %540
        %542 = vrot.lane.b32.xlu0 %v398, 112
        %v543 = vpop.permute.xlu0 %542
        %544 = vrot.lane.b32.xlu0 %v399, 112
        %v545 = vpop.permute.xlu0 %544
        %546 = vrot.lane.b32.xlu0 %v400, 112
        %v547 = vpop.permute.xlu0 %546
        %548 = vrot.lane.b32.xlu0 %v401, 112
        %v549 = vpop.permute.xlu0 %548
        %550 = vrot.lane.b32.xlu0 %v402, 112
        %v551 = vpop.permute.xlu0 %550
        %552 = vrot.lane.b32.xlu0 %v403, 112
        %v553 = vpop.permute.xlu0 %552
        %554 = vrot.lane.b32.xlu0 %v404, 112
        %v555 = vpop.permute.xlu0 %554
        %556 = vrot.lane.b32.xlu0 %v405, 112
        %v557 = vpop.permute.xlu0 %556
        %558 = vrot.lane.b32.xlu0 %v406, 112
        %v559 = vpop.permute.xlu0 %558
        %560 = vrot.lane.b32.xlu0 %v407, 112
        %v561 = vpop.permute.xlu0 %560
        %562 = vrot.lane.b32.xlu0 %v408, 112
        %v563 = vpop.permute.xlu0 %562
        %564 = vrot.lane.b32.xlu0 %v409, 112
        %v565 = vpop.permute.xlu0 %564
        %566 = vrot.lane.b32.xlu0 %v410, 112
        %v567 = vpop.permute.xlu0 %566
        %568 = vrot.lane.b32.xlu0 %v411, 112
        %v569 = vpop.permute.xlu0 %568
        %570 = vrot.lane.b32.xlu0 %v412, 112
        %v571 = vpop.permute.xlu0 %570
        %572 = vrot.lane.b32.xlu0 %v413, 112
        %v573 = vpop.permute.xlu0 %572
        %574 = vrot.lane.b32.xlu0 %v414, 112
        %v575 = vpop.permute.xlu0 %574
        %576 = vrot.lane.b32.xlu0 %v415, 112
        %v577 = vpop.permute.xlu0 %576
        %578 = vrot.lane.b32.xlu0 %v416, 112
        %v579 = vpop.permute.xlu0 %578
        %580 = vrot.lane.b32.xlu0 %v417, 112
        %v581 = vpop.permute.xlu0 %580
        %582 = vrot.lane.b32.xlu0 %v418, 112
        %v583 = vpop.permute.xlu0 %582
        %584 = vrot.lane.b32.xlu0 %v419, 112
        %v585 = vpop.permute.xlu0 %584
        %586 = vrot.lane.b32.xlu0 %v420, 112
        %v587 = vpop.permute.xlu0 %586
        %588 = vrot.lane.b32.xlu0 %v421, 112
        %v589 = vpop.permute.xlu0 %588
        %590 = vrot.lane.b32.xlu0 %v422, 112
        %v591 = vpop.permute.xlu0 %590
        %592 = vrot.lane.b32.xlu0 %v423, 112
        %v593 = vpop.permute.xlu0 %592
        %594 = vrot.lane.b32.xlu0 %v424, 112
        %v595 = vpop.permute.xlu0 %594
        %596 = vrot.lane.b32.xlu0 %v425, 112
        %v597 = vpop.permute.xlu0 %596
        %598 = vrot.lane.b32.xlu0 %v426, 112
        %v599 = vpop.permute.xlu0 %598
        %600 = vrot.lane.b32.xlu0 %v427, 112
        %v601 = vpop.permute.xlu0 %600
        %602 = vrot.lane.b32.xlu0 %v428, 112
        %v603 = vpop.permute.xlu0 %602
        %604 = vrot.lane.b32.xlu0 %v429, 112
        %v605 = vpop.permute.xlu0 %604
        %606 = vrot.lane.b32.xlu0 %v430, 112
        %v607 = vpop.permute.xlu0 %606
        %608 = vrot.lane.b32.xlu0 %v431, 112
        %v609 = vpop.permute.xlu0 %608
        %610 = vrot.lane.b32.xlu0 %v432, 112
        %v611 = vpop.permute.xlu0 %610
        %612 = vrot.lane.b32.xlu0 %v433, 112
        %v613 = vpop.permute.xlu0 %612
        %vm614 = vcmask 916480
        %v615 = vsel %vm614, %v539, %v541
        %v616 = vsel %vm614, %v543, %v545
        %v617 = vsel %vm614, %v547, %v549
        %v618 = vsel %vm614, %v551, %v553
        %v619 = vsel %vm614, %v555, %v557
        %v620 = vsel %vm614, %v559, %v561
        %v621 = vsel %vm614, %v563, %v565
        %v622 = vsel %vm614, %v567, %v569
        %v623 = vsel %vm614, %v571, %v573
        %v624 = vsel %vm614, %v575, %v577
        %v625 = vsel %vm614, %v579, %v581
        %v626 = vsel %vm614, %v583, %v585
        %v627 = vsel %vm614, %v587, %v589
        %v628 = vsel %vm614, %v591, %v593
        %v629 = vsel %vm614, %v595, %v597
        %v630 = vsel %vm614, %v599, %v601
        %v631 = vsel %vm614, %v603, %v605
        %v632 = vsel %vm614, %v607, %v609
        %v633 = vsel %vm614, %v611, %v613
        %672 = vrot.lane.b32.xlu0 %v396, 80
        %v673 = vpop.permute.xlu0 %672
        %674 = vrot.lane.b32.xlu0 %v398, 80
        %v675 = vpop.permute.xlu0 %674
        %676 = vrot.lane.b32.xlu0 %v400, 80
        %v677 = vpop.permute.xlu0 %676
        %678 = vrot.lane.b32.xlu0 %v402, 80
        %v679 = vpop.permute.xlu0 %678
        %680 = vrot.lane.b32.xlu0 %v404, 80
        %v681 = vpop.permute.xlu0 %680
        %682 = vrot.lane.b32.xlu0 %v406, 80
        %v683 = vpop.permute.xlu0 %682
        %684 = vrot.lane.b32.xlu0 %v408, 80
        %v685 = vpop.permute.xlu0 %684
        %686 = vrot.lane.b32.xlu0 %v410, 80
        %v687 = vpop.permute.xlu0 %686
        %688 = vrot.lane.b32.xlu0 %v412, 80
        %v689 = vpop.permute.xlu0 %688
        %690 = vrot.lane.b32.xlu0 %v414, 80
        %v691 = vpop.permute.xlu0 %690
        %692 = vrot.lane.b32.xlu0 %v416, 80
        %v693 = vpop.permute.xlu0 %692
        %694 = vrot.lane.b32.xlu0 %v418, 80
        %v695 = vpop.permute.xlu0 %694
        %696 = vrot.lane.b32.xlu0 %v420, 80
        %v697 = vpop.permute.xlu0 %696
        %698 = vrot.lane.b32.xlu0 %v422, 80
        %v699 = vpop.permute.xlu0 %698
        %700 = vrot.lane.b32.xlu0 %v424, 80
        %v701 = vpop.permute.xlu0 %700
        %702 = vrot.lane.b32.xlu0 %v426, 80
        %v703 = vpop.permute.xlu0 %702
        %704 = vrot.lane.b32.xlu0 %v428, 80
        %v705 = vpop.permute.xlu0 %704
        %706 = vrot.lane.b32.xlu0 %v430, 80
        %v707 = vpop.permute.xlu0 %706
        %708 = vrot.lane.b32.xlu0 %v432, 80
        %v709 = vpop.permute.xlu0 %708
        %vm729 = vcmask 654336
        %v730 = vsel %vm729, %v541, %v673
        %v731 = vsel %vm729, %v545, %v675
        %v732 = vsel %vm729, %v549, %v677
        %v733 = vsel %vm729, %v553, %v679
        %v734 = vsel %vm729, %v557, %v681
        %v735 = vsel %vm729, %v561, %v683
        %v736 = vsel %vm729, %v565, %v685
        %v737 = vsel %vm729, %v569, %v687
        %v738 = vsel %vm729, %v573, %v689
        %v739 = vsel %vm729, %v577, %v691
        %v740 = vsel %vm729, %v581, %v693
        %v741 = vsel %vm729, %v585, %v695
        %v742 = vsel %vm729, %v589, %v697
        %v743 = vsel %vm729, %v593, %v699
        %v744 = vsel %vm729, %v597, %v701
        %v745 = vsel %vm729, %v601, %v703
        %v746 = vsel %vm729, %v605, %v705
        %v747 = vsel %vm729, %v609, %v707
        %v748 = vsel %vm729, %v613, %v709
        %v749 = vmul.f32 %v396, %v615
        %v750 = vmul.f32 %v397, %v730
        %v751 = vmul.f32 %v398, %v616
        %v752 = vmul.f32 %v399, %v731
        %v753 = vmul.f32 %v400, %v617
        %v754 = vmul.f32 %v401, %v732
        %v755 = vmul.f32 %v402, %v618
        %v756 = vmul.f32 %v403, %v733
        %v757 = vmul.f32 %v404, %v619
        %v758 = vmul.f32 %v405, %v734
        %v759 = vmul.f32 %v406, %v620
        %v760 = vmul.f32 %v407, %v735
        %v761 = vmul.f32 %v408, %v621
        %v762 = vmul.f32 %v409, %v736
        %v763 = vmul.f32 %v410, %v622
        %v764 = vmul.f32 %v411, %v737
        %v765 = vmul.f32 %v412, %v623
        %v766 = vmul.f32 %v413, %v738
        %v767 = vmul.f32 %v414, %v624
        %v768 = vmul.f32 %v415, %v739
        %v769 = vmul.f32 %v416, %v625
        %v770 = vmul.f32 %v417, %v740
        %v771 = vmul.f32 %v418, %v626
        %v772 = vmul.f32 %v419, %v741
        %v773 = vmul.f32 %v420, %v627
        %v774 = vmul.f32 %v421, %v742
        %v775 = vmul.f32 %v422, %v628
        %v776 = vmul.f32 %v423, %v743
        %v777 = vmul.f32 %v424, %v629
        %v778 = vmul.f32 %v425, %v744
        %v779 = vmul.f32 %v426, %v630
        %v780 = vmul.f32 %v427, %v745
        %v781 = vmul.f32 %v428, %v631
        %v782 = vmul.f32 %v429, %v746
        %v783 = vmul.f32 %v430, %v632
        %v784 = vmul.f32 %v431, %v747
        %v785 = vmul.f32 %v432, %v633
        %v786 = vmul.f32 %v433, %v748
        %s787 = scalar_lea.vmem [#allocation5], 224
        %v788 = vld [vmem:[%s787] sm:$0xff]
        %v789 = vld [vmem:[%s787 + $0x8] sm:$0xff]
        %v790 = vld [vmem:[%s787 + $0x10] sm:$0xff]
        %v791 = vld [vmem:[%s787 + $0x18] sm:$0xff]
        %v792 = vld [vmem:[%s787 + $0x20] sm:$0xff]
        %v793 = vld [vmem:[%s787 + $0x28] sm:$0xff]
        %v794 = vld [vmem:[%s787 + $0x30] sm:$0xff]
        %v795 = vld [vmem:[%s787 + $0x38] sm:$0xff]
        %v796 = vld [vmem:[%s787 + $0x40] sm:$0xff]
        %v797 = vld [vmem:[%s787 + $0x48] sm:$0xff]
        %v798 = vld [vmem:[%s787 + $0x50] sm:$0xff]
        %v799 = vld [vmem:[%s787 + $0x58] sm:$0xff]
        %v800 = vld [vmem:[%s787 + $0x60] sm:$0xff]
        %v801 = vld [vmem:[%s787 + $0x68] sm:$0xff]
        %v802 = vld [vmem:[%s787 + $0x70] sm:$0xff]
        %v803 = vld [vmem:[%s787 + $0x78] sm:$0xff]
        %v804 = vld [vmem:[%s787 + $0x80] sm:$0xff]
        %v805 = vld [vmem:[%s787 + $0x88] sm:$0xff]
        %v806 = vld [vmem:[%s787 + $0x90] sm:$0xff]
        %v807 = vld [vmem:[%s787 + $0x98] sm:$0xff]
        %v808 = vld [vmem:[%s787 + $0xa0] sm:$0xff]
        %v809 = vld [vmem:[%s787 + $0xa8] sm:$0xff]
        %v810 = vld [vmem:[%s787 + $0xb0] sm:$0xff]
        %v811 = vld [vmem:[%s787 + $0xb8] sm:$0xff]
        %v812 = vld [vmem:[%s787 + $0xc0] sm:$0xff]
        %v813 = vld [vmem:[%s787 + $0xc8] sm:$0xff]
        %v814 = vld [vmem:[%s787 + $0xd0] sm:$0xff]
        %v815 = vld [vmem:[%s787 + $0xd8] sm:$0xff]
        %vm816 = vcmask 785408
        %v818 = vsel %vm816, %v750, 0
        %v821 = vsel %vm816, %v752, 0
        %v824 = vsel %vm816, %v754, 0
        %v827 = vsel %vm816, %v756, 0
        %v830 = vsel %vm816, %v758, 0
        %v833 = vsel %vm816, %v760, 0
        %v836 = vsel %vm816, %v762, 0
        %v839 = vsel %vm816, %v764, 0
        %v842 = vsel %vm816, %v766, 0
        %v845 = vsel %vm816, %v768, 0
        %v848 = vsel %vm816, %v770, 0
        %v851 = vsel %vm816, %v772, 0
        %v854 = vsel %vm816, %v774, 0
        %v857 = vsel %vm816, %v776, 0
        %v860 = vsel %vm816, %v778, 0
        %v863 = vsel %vm816, %v780, 0
        %v866 = vsel %vm816, %v782, 0
        %v869 = vsel %vm816, %v784, 0
        %v872 = vsel %vm816, %v786, 0
        %874 = vmatprep.subr.mxu0 0.0
        %875 = vmatpush1.msra.mxu0 %v788
        %876 = vmatprep.subr.mxu0 0.0
        %877 = vmatpush1.msra.mxu0 %v789
        %878 = vmatprep.subr.mxu0 0.0
        %879 = vmatpush1.msra.mxu0 %v790
        %880 = vmatprep.subr.mxu0 0.0
        %881 = vmatpush1.msra.mxu0 %v791
        %882 = vmatprep.subr.mxu0 0.0
        %883 = vmatpush1.msra.mxu0 %v792
        %884 = vmatprep.subr.mxu0 0.0
        %885 = vmatpush1.msra.mxu0 %v793
        %886 = vmatprep.subr.mxu0 0.0
        %887 = vmatpush1.msra.mxu0 %v794
        %888 = vmatprep.subr.mxu0 0.0
        %889 = vmatpush1.msra.mxu0 %v795
        %890 = vmatprep.subr.mxu0 0.0
        %891 = vmatpush1.msra.mxu0 %v796
        %892 = vmatprep.subr.mxu0 0.0
        %893 = vmatpush1.msra.mxu0 %v797
        %894 = vmatprep.subr.mxu0 0.0
        %895 = vmatpush1.msra.mxu0 %v798
        %896 = vmatprep.subr.mxu0 0.0
        %897 = vmatpush1.msra.mxu0 %v799
        %898 = vmatprep.subr.mxu0 0.0
        %899 = vmatpush1.msra.mxu0 %v800
        %900 = vmatprep.subr.mxu0 0.0
        %901 = vmatpush1.msra.mxu0 %v801
        %902 = vmatprep.subr.mxu0 0.0
        %903 = vmatpush1.msra.mxu0 %v802
        %904 = vmatprep.subr.mxu0 0.0
        %905 = vmatpush1.msra.mxu0 %v803
        %906 = vmatprep.subr.mxu0 0.0
        %907 = vmatpush1.msra.mxu0 %v804
        %908 = vmatprep.subr.mxu0 0.0
        %909 = vmatpush1.msra.mxu0 %v805
        %910 = vmatprep.subr.mxu0 0.0
        %911 = vmatpush1.msra.mxu0 %v806
        %912 = vmatprep.subr.mxu0 0.0
        %913 = vmatpush1.msra.mxu0 %v807
        %914 = vmatprep.subr.mxu0 0.0
        %915 = vmatpush1.msra.mxu0 %v808
        %916 = vmatprep.subr.mxu0 0.0
        %917 = vmatpush1.msra.mxu0 %v809
        %918 = vmatprep.subr.mxu0 0.0
        %919 = vmatpush1.msra.mxu0 %v810
        %920 = vmatprep.subr.mxu0 0.0
        %921 = vmatpush1.msra.mxu0 %v811
        %922 = vmatprep.subr.mxu0 0.0
        %923 = vmatpush1.msra.mxu0 %v812
        %924 = vmatprep.subr.mxu0 0.0
        %925 = vmatpush1.msra.mxu0 %v813
        %926 = vmatprep.subr.mxu0 0.0
        %927 = vmatpush1.msra.mxu0 %v814
        %928 = vmatprep.subr.mxu0 0.0
        %929 = vmatpush1.msra.mxu0 %v815
        %930 = vmatprep.subr.mxu0 0.0
        %931 = vmatpush1.msra.mxu0 0.0
        %932 = vmatprep.subr.mxu0 0.0
        %933 = vmatpush1.msra.mxu0 0.0
        %934 = vmatprep.subr.mxu0 0.0
        %935 = vmatpush1.msra.mxu0 0.0
        %936 = vmatprep.subr.mxu0 0.0
        %937 = vmatpush1.msra.mxu0 0.0
        %938 = vmatprep.mubr.f32.mxu0 %v818
        %939 = vmatmul.mubr.f32.gmra.mrb[0].mxu0 %v749
        %v940 = vpop.f32.mrb[0].mxu0
        %v941 = vadd.f32 0.0, %v940
        %v942 = vpop.f32.mrb[0].mxu0
        %943 = vmatprep.mubr.f32.mxu0 %v821
        %944 = vmatmul.mubr.f32.gmra.mrb[0].mxu0 %v751
        %v945 = vpop.f32.mrb[0].mxu0
        %v946 = vadd.f32 0.0, %v945
        %v947 = vpop.f32.mrb[0].mxu0
        %948 = vmatprep.mubr.f32.mxu0 %v824
        %949 = vmatmul.mubr.f32.gmra.mrb[0].mxu0 %v753
        %v950 = vpop.f32.mrb[0].mxu0
        %v951 = vadd.f32 0.0, %v950
        %v952 = vpop.f32.mrb[0].mxu0
        %953 = vmatprep.mubr.f32.mxu0 %v827
        %954 = vmatmul.mubr.f32.gmra.mrb[0].mxu0 %v755
        %v955 = vpop.f32.mrb[0].mxu0
        %v956 = vadd.f32 0.0, %v955
        %v957 = vpop.f32.mrb[0].mxu0
        %958 = vmatprep.mubr.f32.mxu0 %v830
        %959 = vmatmul.mubr.f32.gmra.mrb[0].mxu0 %v757
        %v960 = vpop.f32.mrb[0].mxu0
        %v961 = vadd.f32 0.0, %v960
        %v962 = vpop.f32.mrb[0].mxu0
        %963 = vmatprep.mubr.f32.mxu0 %v833
        %964 = vmatmul.mubr.f32.gmra.mrb[0].mxu0 %v759
        %v965 = vpop.f32.mrb[0].mxu0
        %v966 = vadd.f32 0.0, %v965
        %v967 = vpop.f32.mrb[0].mxu0
        %968 = vmatprep.mubr.f32.mxu0 %v836
        %969 = vmatmul.mubr.f32.gmra.mrb[0].mxu0 %v761
        %v970 = vpop.f32.mrb[0].mxu0
        %v971 = vadd.f32 0.0, %v970
        %v972 = vpop.f32.mrb[0].mxu0
        %973 = vmatprep.mubr.f32.mxu0 %v839
        %974 = vmatmul.mubr.f32.gmra.mrb[0].mxu0 %v763
        %v975 = vpop.f32.mrb[0].mxu0
        %v976 = vadd.f32 0.0, %v975
        %v977 = vpop.f32.mrb[0].mxu0
        %978 = vmatprep.mubr.f32.mxu0 %v842
        %979 = vmatmul.mubr.f32.gmra.mrb[0].mxu0 %v765
        %v980 = vpop.f32.mrb[0].mxu0
        %v981 = vadd.f32 0.0, %v980
        %v982 = vpop.f32.mrb[0].mxu0
        %983 = vmatprep.mubr.f32.mxu0 %v845
        %984 = vmatmul.mubr.f32.gmra.mrb[0].mxu0 %v767
        %v985 = vpop.f32.mrb[0].mxu0
        %v986 = vadd.f32 0.0, %v985
        %v987 = vpop.f32.mrb[0].mxu0
        %988 = vmatprep.mubr.f32.mxu0 %v848
        %989 = vmatmul.mubr.f32.gmra.mrb[0].mxu0 %v769
        %v990 = vpop.f32.mrb[0].mxu0
        %v991 = vadd.f32 0.0, %v990
        %v992 = vpop.f32.mrb[0].mxu0
        %993 = vmatprep.mubr.f32.mxu0 %v851
        %994 = vmatmul.mubr.f32.gmra.mrb[0].mxu0 %v771
        %v995 = vpop.f32.mrb[0].mxu0
        %v996 = vadd.f32 0.0, %v995
        %v997 = vpop.f32.mrb[0].mxu0
        %998 = vmatprep.mubr.f32.mxu0 %v854
        %999 = vmatmul.mubr.f32.gmra.mrb[0].mxu0 %v773
        %v1000 = vpop.f32.mrb[0].mxu0
        %v1001 = vadd.f32 0.0, %v1000
        %v1002 = vpop.f32.mrb[0].mxu0
        %1003 = vmatprep.mubr.f32.mxu0 %v857
        %1004 = vmatmul.mubr.f32.gmra.mrb[0].mxu0 %v775
        %v1005 = vpop.f32.mrb[0].mxu0
        %v1006 = vadd.f32 0.0, %v1005
        %v1007 = vpop.f32.mrb[0].mxu0
        %1008 = vmatprep.mubr.f32.mxu0 %v860
        %1009 = vmatmul.mubr.f32.gmra.mrb[0].mxu0 %v777
        %v1010 = vpop.f32.mrb[0].mxu0
        %v1011 = vadd.f32 0.0, %v1010
        %v1012 = vpop.f32.mrb[0].mxu0
        %1013 = vmatprep.mubr.f32.mxu0 %v863
        %1014 = vmatmul.mubr.f32.gmra.mrb[0].mxu0 %v779
        %v1015 = vpop.f32.mrb[0].mxu0
        %v1016 = vadd.f32 0.0, %v1015
        %v1017 = vpop.f32.mrb[0].mxu0
        %1018 = vmatprep.mubr.f32.mxu0 %v866
        %1019 = vmatmul.mubr.f32.gmra.mrb[0].mxu0 %v781
        %v1020 = vpop.f32.mrb[0].mxu0
        %v1021 = vadd.f32 0.0, %v1020
        %v1022 = vpop.f32.mrb[0].mxu0
        %1023 = vmatprep.mubr.f32.mxu0 %v869
        %1024 = vmatmul.mubr.f32.gmra.mrb[0].mxu0 %v783
        %v1025 = vpop.f32.mrb[0].mxu0
        %v1026 = vadd.f32 0.0, %v1025
        %v1027 = vpop.f32.mrb[0].mxu0
        %1028 = vmatprep.mubr.f32.mxu0 %v872
        %1029 = vmatmul.mubr.f32.gmra.mrb[0].mxu0 %v785
        %v1030 = vpop.f32.mrb[0].mxu0
        %v1031 = vadd.f32 0.0, %v1030
        %v1032 = vpop.f32.mrb[0].mxu0
        %1033 = vdwg.mxu0
        %v1035 = vsel %vm816, %v435, 0
        %v1038 = vsel %vm816, %v437, 0
        %v1041 = vsel %vm816, %v439, 0
        %v1044 = vsel %vm816, %v441, 0
        %v1047 = vsel %vm816, %v443, 0
        %v1050 = vsel %vm816, %v445, 0
        %v1053 = vsel %vm816, %v447, 0
        %v1056 = vsel %vm816, %v449, 0
        %v1059 = vsel %vm816, %v451, 0
        %v1062 = vsel %vm816, %v453, 0
        %v1065 = vsel %vm816, %v455, 0
        %v1068 = vsel %vm816, %v457, 0
        %v1071 = vsel %vm816, %v459, 0
        %v1074 = vsel %vm816, %v461, 0
        %v1077 = vsel %vm816, %v463, 0
        %v1080 = vsel %vm816, %v465, 0
        %v1083 = vsel %vm816, %v467, 0
        %v1086 = vsel %vm816, %v469, 0
        %v1089 = vsel %vm816, %v471, 0
        %1091 = vmatprep.subr.mxu0 0.0
        %1092 = vmatpush1.msra.mxu0 %v472
        %1093 = vmatprep.subr.mxu0 0.0
        %1094 = vmatpush1.msra.mxu0 %v473
        %1095 = vmatprep.subr.mxu0 0.0
        %1096 = vmatpush1.msra.mxu0 %v474
        %1097 = vmatprep.subr.mxu0 0.0
        %1098 = vmatpush1.msra.mxu0 %v475
        %1099 = vmatprep.subr.mxu0 0.0
        %1100 = vmatpush1.msra.mxu0 %v476
        %1101 = vmatprep.subr.mxu0 0.0
        %1102 = vmatpush1.msra.mxu0 %v477
        %1103 = vmatprep.subr.mxu0 0.0
        %1104 = vmatpush1.msra.mxu0 %v478
        %1105 = vmatprep.subr.mxu0 0.0
        %1106 = vmatpush1.msra.mxu0 %v479
        %1107 = vmatprep.subr.mxu0 0.0
        %1108 = vmatpush1.msra.mxu0 %v480
        %1109 = vmatprep.subr.mxu0 0.0
        %1110 = vmatpush1.msra.mxu0 %v481
        %1111 = vmatprep.subr.mxu0 0.0
        %1112 = vmatpush1.msra.mxu0 %v482
        %1113 = vmatprep.subr.mxu0 0.0
        %1114 = vmatpush1.msra.mxu0 %v483
        %1115 = vmatprep.subr.mxu0 0.0
        %1116 = vmatpush1.msra.mxu0 %v484
        %1117 = vmatprep.subr.mxu0 0.0
        %1118 = vmatpush1.msra.mxu0 %v485
        %1119 = vmatprep.subr.mxu0 0.0
        %1120 = vmatpush1.msra.mxu0 %v486
        %1121 = vmatprep.subr.mxu0 0.0
        %1122 = vmatpush1.msra.mxu0 %v487
        %1123 = vmatprep.subr.mxu0 0.0
        %1124 = vmatpush1.msra.mxu0 %v488
        %1125 = vmatprep.subr.mxu0 0.0
        %1126 = vmatpush1.msra.mxu0 %v489
        %1127 = vmatprep.subr.mxu0 0.0
        %1128 = vmatpush1.msra.mxu0 %v490
        %1129 = vmatprep.subr.mxu0 0.0
        %1130 = vmatpush1.msra.mxu0 %v491
        %1131 = vmatprep.subr.mxu0 0.0
        %1132 = vmatpush1.msra.mxu0 %v492
        %1133 = vmatprep.subr.mxu0 0.0
        %1134 = vmatpush1.msra.mxu0 %v493
        %1135 = vmatprep.subr.mxu0 0.0
        %1136 = vmatpush1.msra.mxu0 %v494
        %1137 = vmatprep.subr.mxu0 0.0
        %1138 = vmatpush1.msra.mxu0 %v495
        %1139 = vmatprep.subr.mxu0 0.0
        %1140 = vmatpush1.msra.mxu0 %v496
        %1141 = vmatprep.subr.mxu0 0.0
        %1142 = vmatpush1.msra.mxu0 %v497
        %1143 = vmatprep.subr.mxu0 0.0
        %1144 = vmatpush1.msra.mxu0 %v498
        %1145 = vmatprep.subr.mxu0 0.0
        %1146 = vmatpush1.msra.mxu0 %v499
        %1147 = vmatprep.subr.mxu0 0.0
        %1148 = vmatpush1.msra.mxu0 0.0
        %1149 = vmatprep.subr.mxu0 0.0
        %1150 = vmatpush1.msra.mxu0 0.0
        %1151 = vmatprep.subr.mxu0 0.0
        %1152 = vmatpush1.msra.mxu0 0.0
        %1153 = vmatprep.subr.mxu0 0.0
        %1154 = vmatpush1.msra.mxu0 0.0
        %1155 = vmatprep.mubr.f32.mxu0 %v1035
        %1156 = vmatmul.mubr.f32.gmra.mrb[0].mxu0 %v434
        %v1157 = vpop.f32.mrb[0].mxu0
        %v1158 = vadd.f32 %v941, %v1157
        %v1159 = vpop.f32.mrb[0].mxu0
        %1160 = vmatprep.mubr.f32.mxu0 %v1038
        %1161 = vmatmul.mubr.f32.gmra.mrb[0].mxu0 %v436
        %v1162 = vpop.f32.mrb[0].mxu0
        %v1163 = vadd.f32 %v946, %v1162
        %v1164 = vpop.f32.mrb[0].mxu0
        %1165 = vmatprep.mubr.f32.mxu0 %v1041
        %1166 = vmatmul.mubr.f32.gmra.mrb[0].mxu0 %v438
        %v1167 = vpop.f32.mrb[0].mxu0
        %v1168 = vadd.f32 %v951, %v1167
        %v1169 = vpop.f32.mrb[0].mxu0
        %1170 = vmatprep.mubr.f32.mxu0 %v1044
        %1171 = vmatmul.mubr.f32.gmra.mrb[0].mxu0 %v440
        %v1172 = vpop.f32.mrb[0].mxu0
        %v1173 = vadd.f32 %v956, %v1172
        %v1174 = vpop.f32.mrb[0].mxu0
        %1175 = vmatprep.mubr.f32.mxu0 %v1047
        %1176 = vmatmul.mubr.f32.gmra.mrb[0].mxu0 %v442
        %v1177 = vpop.f32.mrb[0].mxu0
        %v1178 = vadd.f32 %v961, %v1177
        %v1179 = vpop.f32.mrb[0].mxu0
        %1180 = vmatprep.mubr.f32.mxu0 %v1050
        %1181 = vmatmul.mubr.f32.gmra.mrb[0].mxu0 %v444
        %v1182 = vpop.f32.mrb[0].mxu0
        %v1183 = vadd.f32 %v966, %v1182
        %v1184 = vpop.f32.mrb[0].mxu0
        %1185 = vmatprep.mubr.f32.mxu0 %v1053
        %1186 = vmatmul.mubr.f32.gmra.mrb[0].mxu0 %v446
        %v1187 = vpop.f32.mrb[0].mxu0
        %v1188 = vadd.f32 %v971, %v1187
        %v1189 = vpop.f32.mrb[0].mxu0
        %1190 = vmatprep.mubr.f32.mxu0 %v1056
        %1191 = vmatmul.mubr.f32.gmra.mrb[0].mxu0 %v448
        %v1192 = vpop.f32.mrb[0].mxu0
        %v1193 = vadd.f32 %v976, %v1192
        %v1194 = vpop.f32.mrb[0].mxu0
        %1195 = vmatprep.mubr.f32.mxu0 %v1059
        %1196 = vmatmul.mubr.f32.gmra.mrb[0].mxu0 %v450
        %v1197 = vpop.f32.mrb[0].mxu0
        %v1198 = vadd.f32 %v981, %v1197
        %v1199 = vpop.f32.mrb[0].mxu0
        %1200 = vmatprep.mubr.f32.mxu0 %v1062
        %1201 = vmatmul.mubr.f32.gmra.mrb[0].mxu0 %v452
        %v1202 = vpop.f32.mrb[0].mxu0
        %v1203 = vadd.f32 %v986, %v1202
        %v1204 = vpop.f32.mrb[0].mxu0
        %1205 = vmatprep.mubr.f32.mxu0 %v1065
        %1206 = vmatmul.mubr.f32.gmra.mrb[0].mxu0 %v454
        %v1207 = vpop.f32.mrb[0].mxu0
        %v1208 = vadd.f32 %v991, %v1207
        %v1209 = vpop.f32.mrb[0].mxu0
        %1210 = vmatprep.mubr.f32.mxu0 %v1068
        %1211 = vmatmul.mubr.f32.gmra.mrb[0].mxu0 %v456
        %v1212 = vpop.f32.mrb[0].mxu0
        %v1213 = vadd.f32 %v996, %v1212
        %v1214 = vpop.f32.mrb[0].mxu0
        %1215 = vmatprep.mubr.f32.mxu0 %v1071
        %1216 = vmatmul.mubr.f32.gmra.mrb[0].mxu0 %v458
        %v1217 = vpop.f32.mrb[0].mxu0
        %v1218 = vadd.f32 %v1001, %v1217
        %v1219 = vpop.f32.mrb[0].mxu0
        %1220 = vmatprep.mubr.f32.mxu0 %v1074
        %1221 = vmatmul.mubr.f32.gmra.mrb[0].mxu0 %v460
        %v1222 = vpop.f32.mrb[0].mxu0
        %v1223 = vadd.f32 %v1006, %v1222
        %v1224 = vpop.f32.mrb[0].mxu0
        %1225 = vmatprep.mubr.f32.mxu0 %v1077
        %1226 = vmatmul.mubr.f32.gmra.mrb[0].mxu0 %v462
        %v1227 = vpop.f32.mrb[0].mxu0
        %v1228 = vadd.f32 %v1011, %v1227
        %v1229 = vpop.f32.mrb[0].mxu0
        %1230 = vmatprep.mubr.f32.mxu0 %v1080
        %1231 = vmatmul.mubr.f32.gmra.mrb[0].mxu0 %v464
        %v1232 = vpop.f32.mrb[0].mxu0
        %v1233 = vadd.f32 %v1016, %v1232
        %v1234 = vpop.f32.mrb[0].mxu0
        %1235 = vmatprep.mubr.f32.mxu0 %v1083
        %1236 = vmatmul.mubr.f32.gmra.mrb[0].mxu0 %v466
        %v1237 = vpop.f32.mrb[0].mxu0
        %v1238 = vadd.f32 %v1021, %v1237
        %v1239 = vpop.f32.mrb[0].mxu0
        %1240 = vmatprep.mubr.f32.mxu0 %v1086
        %1241 = vmatmul.mubr.f32.gmra.mrb[0].mxu0 %v468
        %v1242 = vpop.f32.mrb[0].mxu0
        %v1243 = vadd.f32 %v1026, %v1242
        %v1244 = vpop.f32.mrb[0].mxu0
        %1245 = vmatprep.mubr.f32.mxu0 %v1089
        %1246 = vmatmul.mubr.f32.gmra.mrb[0].mxu0 %v470
        %v1247 = vpop.f32.mrb[0].mxu0
        %v1248 = vadd.f32 %v1031, %v1247
        %v1249 = vpop.f32.mrb[0].mxu0
        %1250 = vdwg.mxu0
        %1251 = vrot.lane.b32.xlu0 %v396, 96
        %v1252 = vpop.permute.xlu0 %1251
        %1253 = vrot.lane.b32.xlu0 %v397, 96
        %v1254 = vpop.permute.xlu0 %1253
        %1255 = vrot.lane.b32.xlu0 %v398, 96
        %v1256 = vpop.permute.xlu0 %1255
        %1257 = vrot.lane.b32.xlu0 %v399, 96
        %v1258 = vpop.permute.xlu0 %1257
        %1259 = vrot.lane.b32.xlu0 %v400, 96
        %v1260 = vpop.permute.xlu0 %1259
        %1261 = vrot.lane.b32.xlu0 %v401, 96
        %v1262 = vpop.permute.xlu0 %1261
        %1263 = vrot.lane.b32.xlu0 %v402, 96
        %v1264 = vpop.permute.xlu0 %1263
        %1265 = vrot.lane.b32.xlu0 %v403, 96
        %v1266 = vpop.permute.xlu0 %1265
        %1267 = vrot.lane.b32.xlu0 %v404, 96
        %v1268 = vpop.permute.xlu0 %1267
        %1269 = vrot.lane.b32.xlu0 %v405, 96
        %v1270 = vpop.permute.xlu0 %1269
        %1271 = vrot.lane.b32.xlu0 %v406, 96
        %v1272 = vpop.permute.xlu0 %1271
        %1273 = vrot.lane.b32.xlu0 %v407, 96
        %v1274 = vpop.permute.xlu0 %1273
        %1275 = vrot.lane.b32.xlu0 %v408, 96
        %v1276 = vpop.permute.xlu0 %1275
        %1277 = vrot.lane.b32.xlu0 %v409, 96
        %v1278 = vpop.permute.xlu0 %1277
        %1279 = vrot.lane.b32.xlu0 %v410, 96
        %v1280 = vpop.permute.xlu0 %1279
        %1281 = vrot.lane.b32.xlu0 %v411, 96
        %v1282 = vpop.permute.xlu0 %1281
        %1283 = vrot.lane.b32.xlu0 %v412, 96
        %v1284 = vpop.permute.xlu0 %1283
        %1285 = vrot.lane.b32.xlu0 %v413, 96
        %v1286 = vpop.permute.xlu0 %1285
        %1287 = vrot.lane.b32.xlu0 %v414, 96
        %v1288 = vpop.permute.xlu0 %1287
        %1289 = vrot.lane.b32.xlu0 %v415, 96
        %v1290 = vpop.permute.xlu0 %1289
        %1291 = vrot.lane.b32.xlu0 %v416, 96
        %v1292 = vpop.permute.xlu0 %1291
        %1293 = vrot.lane.b32.xlu0 %v417, 96
        %v1294 = vpop.permute.xlu0 %1293
        %1295 = vrot.lane.b32.xlu0 %v418, 96
        %v1296 = vpop.permute.xlu0 %1295
        %1297 = vrot.lane.b32.xlu0 %v419, 96
        %v1298 = vpop.permute.xlu0 %1297
        %1299 = vrot.lane.b32.xlu0 %v420, 96
        %v1300 = vpop.permute.xlu0 %1299
        %1301 = vrot.lane.b32.xlu0 %v421, 96
        %v1302 = vpop.permute.xlu0 %1301
        %1303 = vrot.lane.b32.xlu0 %v422, 96
        %v1304 = vpop.permute.xlu0 %1303
        %1305 = vrot.lane.b32.xlu0 %v423, 96
        %v1306 = vpop.permute.xlu0 %1305
        %1307 = vrot.lane.b32.xlu0 %v424, 96
        %v1308 = vpop.permute.xlu0 %1307
        %1309 = vrot.lane.b32.xlu0 %v425, 96
        %v1310 = vpop.permute.xlu0 %1309
        %1311 = vrot.lane.b32.xlu0 %v426, 96
        %v1312 = vpop.permute.xlu0 %1311
        %1313 = vrot.lane.b32.xlu0 %v427, 96
        %v1314 = vpop.permute.xlu0 %1313
        %1315 = vrot.lane.b32.xlu0 %v428, 96
        %v1316 = vpop.permute.xlu0 %1315
        %1317 = vrot.lane.b32.xlu0 %v429, 96
        %v1318 = vpop.permute.xlu0 %1317
        %1319 = vrot.lane.b32.xlu0 %v430, 96
        %v1320 = vpop.permute.xlu0 %1319
        %1321 = vrot.lane.b32.xlu0 %v431, 96
        %v1322 = vpop.permute.xlu0 %1321
        %1323 = vrot.lane.b32.xlu0 %v432, 96
        %v1324 = vpop.permute.xlu0 %1323
        %1325 = vrot.lane.b32.xlu0 %v433, 96
        %v1326 = vpop.permute.xlu0 %1325
        %v1327 = vsel %vm816, %v1252, %v1254
        %v1328 = vsel %vm816, %v1256, %v1258
        %v1329 = vsel %vm816, %v1260, %v1262
        %v1330 = vsel %vm816, %v1264, %v1266
        %v1331 = vsel %vm816, %v1268, %v1270
        %v1332 = vsel %vm816, %v1272, %v1274
        %v1333 = vsel %vm816, %v1276, %v1278
        %v1334 = vsel %vm816, %v1280, %v1282
        %v1335 = vsel %vm816, %v1284, %v1286
        %v1336 = vsel %vm816, %v1288, %v1290
        %v1337 = vsel %vm816, %v1292, %v1294
        %v1338 = vsel %vm816, %v1296, %v1298
        %v1339 = vsel %vm816, %v1300, %v1302
        %v1340 = vsel %vm816, %v1304, %v1306
        %v1341 = vsel %vm816, %v1308, %v1310
        %v1342 = vsel %vm816, %v1312, %v1314
        %v1343 = vsel %vm816, %v1316, %v1318
        %v1344 = vsel %vm816, %v1320, %v1322
        %v1345 = vsel %vm816, %v1324, %v1326
        %1384 = vrot.lane.b32.xlu0 %v396, 64
        %v1385 = vpop.permute.xlu0 %1384
        %1386 = vrot.lane.b32.xlu0 %v398, 64
        %v1387 = vpop.permute.xlu0 %1386
        %1388 = vrot.lane.b32.xlu0 %v400, 64
        %v1389 = vpop.permute.xlu0 %1388
        %1390 = vrot.lane.b32.xlu0 %v402, 64
        %v1391 = vpop.permute.xlu0 %1390
        %1392 = vrot.lane.b32.xlu0 %v404, 64
        %v1393 = vpop.permute.xlu0 %1392
        %1394 = vrot.lane.b32.xlu0 %v406, 64
        %v1395 = vpop.permute.xlu0 %1394
        %1396 = vrot.lane.b32.xlu0 %v408, 64
        %v1397 = vpop.permute.xlu0 %1396
        %1398 = vrot.lane.b32.xlu0 %v410, 64
        %v1399 = vpop.permute.xlu0 %1398
        %1400 = vrot.lane.b32.xlu0 %v412, 64
        %v1401 = vpop.permute.xlu0 %1400
        %1402 = vrot.lane.b32.xlu0 %v414, 64
        %v1403 = vpop.permute.xlu0 %1402
        %1404 = vrot.lane.b32.xlu0 %v416, 64
        %v1405 = vpop.permute.xlu0 %1404
        %1406 = vrot.lane.b32.xlu0 %v418, 64
        %v1407 = vpop.permute.xlu0 %1406
        %1408 = vrot.lane.b32.xlu0 %v420, 64
        %v1409 = vpop.permute.xlu0 %1408
        %1410 = vrot.lane.b32.xlu0 %v422, 64
        %v1411 = vpop.permute.xlu0 %1410
        %1412 = vrot.lane.b32.xlu0 %v424, 64
        %v1413 = vpop.permute.xlu0 %1412
        %1414 = vrot.lane.b32.xlu0 %v426, 64
        %v1415 = vpop.permute.xlu0 %1414
        %1416 = vrot.lane.b32.xlu0 %v428, 64
        %v1417 = vpop.permute.xlu0 %1416
        %1418 = vrot.lane.b32.xlu0 %v430, 64
        %v1419 = vpop.permute.xlu0 %1418
        %1420 = vrot.lane.b32.xlu0 %v432, 64
        %v1421 = vpop.permute.xlu0 %1420
        %vm1441 = vcmask 523264
        %v1442 = vsel %vm1441, %v1254, %v1385
        %v1443 = vsel %vm1441, %v1258, %v1387
        %v1444 = vsel %vm1441, %v1262, %v1389
        %v1445 = vsel %vm1441, %v1266, %v1391
        %v1446 = vsel %vm1441, %v1270, %v1393
        %v1447 = vsel %vm1441, %v1274, %v1395
        %v1448 = vsel %vm1441, %v1278, %v1397
        %v1449 = vsel %vm1441, %v1282, %v1399
        %v1450 = vsel %vm1441, %v1286, %v1401
        %v1451 = vsel %vm1441, %v1290, %v1403
        %v1452 = vsel %vm1441, %v1294, %v1405
        %v1453 = vsel %vm1441, %v1298, %v1407
        %v1454 = vsel %vm1441, %v1302, %v1409
        %v1455 = vsel %vm1441, %v1306, %v1411
        %v1456 = vsel %vm1441, %v1310, %v1413
        %v1457 = vsel %vm1441, %v1314, %v1415
        %v1458 = vsel %vm1441, %v1318, %v1417
        %v1459 = vsel %vm1441, %v1322, %v1419
        %v1460 = vsel %vm1441, %v1326, %v1421
        %v1461 = vmul.f32 %v396, %v1327
        %v1462 = vmul.f32 %v397, %v1442
        %v1463 = vmul.f32 %v398, %v1328
        %v1464 = vmul.f32 %v399, %v1443
        %v1465 = vmul.f32 %v400, %v1329
        %v1466 = vmul.f32 %v401, %v1444
        %v1467 = vmul.f32 %v402, %v1330
        %v1468 = vmul.f32 %v403, %v1445
        %v1469 = vmul.f32 %v404, %v1331
        %v1470 = vmul.f32 %v405, %v1446
        %v1471 = vmul.f32 %v406, %v1332
        %v1472 = vmul.f32 %v407, %v1447
        %v1473 = vmul.f32 %v408, %v1333
        %v1474 = vmul.f32 %v409, %v1448
        %v1475 = vmul.f32 %v410, %v1334
        %v1476 = vmul.f32 %v411, %v1449
        %v1477 = vmul.f32 %v412, %v1335
        %v1478 = vmul.f32 %v413, %v1450
        %v1479 = vmul.f32 %v414, %v1336
        %v1480 = vmul.f32 %v415, %v1451
        %v1481 = vmul.f32 %v416, %v1337
        %v1482 = vmul.f32 %v417, %v1452
        %v1483 = vmul.f32 %v418, %v1338
        %v1484 = vmul.f32 %v419, %v1453
        %v1485 = vmul.f32 %v420, %v1339
        %v1486 = vmul.f32 %v421, %v1454
        %v1487 = vmul.f32 %v422, %v1340
        %v1488 = vmul.f32 %v423, %v1455
        %v1489 = vmul.f32 %v424, %v1341
        %v1490 = vmul.f32 %v425, %v1456
        %v1491 = vmul.f32 %v426, %v1342
        %v1492 = vmul.f32 %v427, %v1457
        %v1493 = vmul.f32 %v428, %v1343
        %v1494 = vmul.f32 %v429, %v1458
        %v1495 = vmul.f32 %v430, %v1344
        %v1496 = vmul.f32 %v431, %v1459
        %v1497 = vmul.f32 %v432, %v1345
        %v1498 = vmul.f32 %v433, %v1460
        %s1499 = scalar_lea.vmem [#allocation5], 448
        %v1500 = vld [vmem:[%s1499] sm:$0xff]
        %v1501 = vld [vmem:[%s1499 + $0x8] sm:$0xff]
        %v1502 = vld [vmem:[%s1499 + $0x10] sm:$0xff]
        %v1503 = vld [vmem:[%s1499 + $0x18] sm:$0xff]
        %v1504 = vld [vmem:[%s1499 + $0x20] sm:$0xff]
        %v1505 = vld [vmem:[%s1499 + $0x28] sm:$0xff]
        %v1506 = vld [vmem:[%s1499 + $0x30] sm:$0xff]
        %v1507 = vld [vmem:[%s1499 + $0x38] sm:$0xff]
        %v1508 = vld [vmem:[%s1499 + $0x40] sm:$0xff]
        %v1509 = vld [vmem:[%s1499 + $0x48] sm:$0xff]
        %v1510 = vld [vmem:[%s1499 + $0x50] sm:$0xff]
        %v1511 = vld [vmem:[%s1499 + $0x58] sm:$0xff]
        %v1512 = vld [vmem:[%s1499 + $0x60] sm:$0xff]
        %v1513 = vld [vmem:[%s1499 + $0x68] sm:$0xff]
        %v1514 = vld [vmem:[%s1499 + $0x70] sm:$0xff]
        %v1515 = vld [vmem:[%s1499 + $0x78] sm:$0xff]
        %v1516 = vld [vmem:[%s1499 + $0x80] sm:$0xff]
        %v1517 = vld [vmem:[%s1499 + $0x88] sm:$0xff]
        %v1518 = vld [vmem:[%s1499 + $0x90] sm:$0xff]
        %v1519 = vld [vmem:[%s1499 + $0x98] sm:$0xff]
        %v1520 = vld [vmem:[%s1499 + $0xa0] sm:$0xff]
        %v1521 = vld [vmem:[%s1499 + $0xa8] sm:$0xff]
        %v1522 = vld [vmem:[%s1499 + $0xb0] sm:$0xff]
        %v1523 = vld [vmem:[%s1499 + $0xb8] sm:$0xff]
        %v1524 = vld [vmem:[%s1499 + $0xc0] sm:$0xff]
        %v1525 = vld [vmem:[%s1499 + $0xc8] sm:$0xff]
        %v1526 = vld [vmem:[%s1499 + $0xd0] sm:$0xff]
        %v1527 = vld [vmem:[%s1499 + $0xd8] sm:$0xff]
        %v1529 = vsel %vm816, %v1462, 0
        %v1532 = vsel %vm816, %v1464, 0
        %v1535 = vsel %vm816, %v1466, 0
        %v1538 = vsel %vm816, %v1468, 0
        %v1541 = vsel %vm816, %v1470, 0
        %v1544 = vsel %vm816, %v1472, 0
        %v1547 = vsel %vm816, %v1474, 0
        %v1550 = vsel %vm816, %v1476, 0
        %v1553 = vsel %vm816, %v1478, 0
        %v1556 = vsel %vm816, %v1480, 0
        %v1559 = vsel %vm816, %v1482, 0
        %v1562 = vsel %vm816, %v1484, 0
        %v1565 = vsel %vm816, %v1486, 0
        %v1568 = vsel %vm816, %v1488, 0
        %v1571 = vsel %vm816, %v1490, 0
        %v1574 = vsel %vm816, %v1492, 0
        %v1577 = vsel %vm816, %v1494, 0
        %v1580 = vsel %vm816, %v1496, 0
        %v1583 = vsel %vm816, %v1498, 0
        %1585 = vmatprep.subr.mxu0 0.0
        %1586 = vmatpush1.msra.mxu0 %v1500
        %1587 = vmatprep.subr.mxu0 0.0
        %1588 = vmatpush1.msra.mxu0 %v1501
        %1589 = vmatprep.subr.mxu0 0.0
        %1590 = vmatpush1.msra.mxu0 %v1502
        %1591 = vmatprep.subr.mxu0 0.0
        %1592 = vmatpush1.msra.mxu0 %v1503
        %1593 = vmatprep.subr.mxu0 0.0
        %1594 = vmatpush1.msra.mxu0 %v1504
        %1595 = vmatprep.subr.mxu0 0.0
        %1596 = vmatpush1.msra.mxu0 %v1505
        %1597 = vmatprep.subr.mxu0 0.0
        %1598 = vmatpush1.msra.mxu0 %v1506
        %1599 = vmatprep.subr.mxu0 0.0
        %1600 = vmatpush1.msra.mxu0 %v1507
        %1601 = vmatprep.subr.mxu0 0.0
        %1602 = vmatpush1.msra.mxu0 %v1508
        %1603 = vmatprep.subr.mxu0 0.0
        %1604 = vmatpush1.msra.mxu0 %v1509
        %1605 = vmatprep.subr.mxu0 0.0
        %1606 = vmatpush1.msra.mxu0 %v1510
        %1607 = vmatprep.subr.mxu0 0.0
        %1608 = vmatpush1.msra.mxu0 %v1511
        %1609 = vmatprep.subr.mxu0 0.0
        %1610 = vmatpush1.msra.mxu0 %v1512
        %1611 = vmatprep.subr.mxu0 0.0
        %1612 = vmatpush1.msra.mxu0 %v1513
        %1613 = vmatprep.subr.mxu0 0.0
        %1614 = vmatpush1.msra.mxu0 %v1514
        %1615 = vmatprep.subr.mxu0 0.0
        %1616 = vmatpush1.msra.mxu0 %v1515
        %1617 = vmatprep.subr.mxu0 0.0
        %1618 = vmatpush1.msra.mxu0 %v1516
        %1619 = vmatprep.subr.mxu0 0.0
        %1620 = vmatpush1.msra.mxu0 %v1517
        %1621 = vmatprep.subr.mxu0 0.0
        %1622 = vmatpush1.msra.mxu0 %v1518
        %1623 = vmatprep.subr.mxu0 0.0
        %1624 = vmatpush1.msra.mxu0 %v1519
        %1625 = vmatprep.subr.mxu0 0.0
        %1626 = vmatpush1.msra.mxu0 %v1520
        %1627 = vmatprep.subr.mxu0 0.0
        %1628 = vmatpush1.msra.mxu0 %v1521
        %1629 = vmatprep.subr.mxu0 0.0
        %1630 = vmatpush1.msra.mxu0 %v1522
        %1631 = vmatprep.subr.mxu0 0.0
        %1632 = vmatpush1.msra.mxu0 %v1523
        %1633 = vmatprep.subr.mxu0 0.0
        %1634 = vmatpush1.msra.mxu0 %v1524
        %1635 = vmatprep.subr.mxu0 0.0
        %1636 = vmatpush1.msra.mxu0 %v1525
        %1637 = vmatprep.subr.mxu0 0.0
        %1638 = vmatpush1.msra.mxu0 %v1526
        %1639 = vmatprep.subr.mxu0 0.0
        %1640 = vmatpush1.msra.mxu0 %v1527
        %1641 = vmatprep.subr.mxu0 0.0
        %1642 = vmatpush1.msra.mxu0 0.0
        %1643 = vmatprep.subr.mxu0 0.0
        %1644 = vmatpush1.msra.mxu0 0.0
        %1645 = vmatprep.subr.mxu0 0.0
        %1646 = vmatpush1.msra.mxu0 0.0
        %1647 = vmatprep.subr.mxu0 0.0
        %1648 = vmatpush1.msra.mxu0 0.0
        %1649 = vmatprep.mubr.f32.mxu0 %v1529
        %1650 = vmatmul.mubr.f32.gmra.mrb[0].mxu0 %v1461
        %v1651 = vpop.f32.mrb[0].mxu0
        %v1652 = vadd.f32 0.0, %v1651
        %v1653 = vpop.f32.mrb[0].mxu0
        %1654 = vmatprep.mubr.f32.mxu0 %v1532
        %1655 = vmatmul.mubr.f32.gmra.mrb[0].mxu0 %v1463
        %v1656 = vpop.f32.mrb[0].mxu0
        %v1657 = vadd.f32 0.0, %v1656
        %v1658 = vpop.f32.mrb[0].mxu0
        %1659 = vmatprep.mubr.f32.mxu0 %v1535
        %1660 = vmatmul.mubr.f32.gmra.mrb[0].mxu0 %v1465
        %v1661 = vpop.f32.mrb[0].mxu0
        %v1662 = vadd.f32 0.0, %v1661
        %v1663 = vpop.f32.mrb[0].mxu0
        %1664 = vmatprep.mubr.f32.mxu0 %v1538
        %1665 = vmatmul.mubr.f32.gmra.mrb[0].mxu0 %v1467
        %v1666 = vpop.f32.mrb[0].mxu0
        %v1667 = vadd.f32 0.0, %v1666
        %v1668 = vpop.f32.mrb[0].mxu0
        %1669 = vmatprep.mubr.f32.mxu0 %v1541
        %1670 = vmatmul.mubr.f32.gmra.mrb[0].mxu0 %v1469
        %v1671 = vpop.f32.mrb[0].mxu0
        %v1672 = vadd.f32 0.0, %v1671
        %v1673 = vpop.f32.mrb[0].mxu0
        %1674 = vmatprep.mubr.f32.mxu0 %v1544
        %1675 = vmatmul.mubr.f32.gmra.mrb[0].mxu0 %v1471
        %v1676 = vpop.f32.mrb[0].mxu0
        %v1677 = vadd.f32 0.0, %v1676
        %v1678 = vpop.f32.mrb[0].mxu0
        %1679 = vmatprep.mubr.f32.mxu0 %v1547
        %1680 = vmatmul.mubr.f32.gmra.mrb[0].mxu0 %v1473
        %v1681 = vpop.f32.mrb[0].mxu0
        %v1682 = vadd.f32 0.0, %v1681
        %v1683 = vpop.f32.mrb[0].mxu0
        %1684 = vmatprep.mubr.f32.mxu0 %v1550
        %1685 = vmatmul.mubr.f32.gmra.mrb[0].mxu0 %v1475
        %v1686 = vpop.f32.mrb[0].mxu0
        %v1687 = vadd.f32 0.0, %v1686
        %v1688 = vpop.f32.mrb[0].mxu0
        %1689 = vmatprep.mubr.f32.mxu0 %v1553
        %1690 = vmatmul.mubr.f32.gmra.mrb[0].mxu0 %v1477
        %v1691 = vpop.f32.mrb[0].mxu0
        %v1692 = vadd.f32 0.0, %v1691
        %v1693 = vpop.f32.mrb[0].mxu0
        %1694 = vmatprep.mubr.f32.mxu0 %v1556
        %1695 = vmatmul.mubr.f32.gmra.mrb[0].mxu0 %v1479
        %v1696 = vpop.f32.mrb[0].mxu0
        %v1697 = vadd.f32 0.0, %v1696
        %v1698 = vpop.f32.mrb[0].mxu0
        %1699 = vmatprep.mubr.f32.mxu0 %v1559
        %1700 = vmatmul.mubr.f32.gmra.mrb[0].mxu0 %v1481
        %v1701 = vpop.f32.mrb[0].mxu0
        %v1702 = vadd.f32 0.0, %v1701
        %v1703 = vpop.f32.mrb[0].mxu0
        %1704 = vmatprep.mubr.f32.mxu0 %v1562
        %1705 = vmatmul.mubr.f32.gmra.mrb[0].mxu0 %v1483
        %v1706 = vpop.f32.mrb[0].mxu0
        %v1707 = vadd.f32 0.0, %v1706
        %v1708 = vpop.f32.mrb[0].mxu0
        %1709 = vmatprep.mubr.f32.mxu0 %v1565
        %1710 = vmatmul.mubr.f32.gmra.mrb[0].mxu0 %v1485
        %v1711 = vpop.f32.mrb[0].mxu0
        %v1712 = vadd.f32 0.0, %v1711
        %v1713 = vpop.f32.mrb[0].mxu0
        %1714 = vmatprep.mubr.f32.mxu0 %v1568
        %1715 = vmatmul.mubr.f32.gmra.mrb[0].mxu0 %v1487
        %v1716 = vpop.f32.mrb[0].mxu0
        %v1717 = vadd.f32 0.0, %v1716
        %v1718 = vpop.f32.mrb[0].mxu0
        %1719 = vmatprep.mubr.f32.mxu0 %v1571
        %1720 = vmatmul.mubr.f32.gmra.mrb[0].mxu0 %v1489
        %v1721 = vpop.f32.mrb[0].mxu0
        %v1722 = vadd.f32 0.0, %v1721
        %v1723 = vpop.f32.mrb[0].mxu0
        %1724 = vmatprep.mubr.f32.mxu0 %v1574
        %1725 = vmatmul.mubr.f32.gmra.mrb[0].mxu0 %v1491
        %v1726 = vpop.f32.mrb[0].mxu0
        %v1727 = vadd.f32 0.0, %v1726
        %v1728 = vpop.f32.mrb[0].mxu0
        %1729 = vmatprep.mubr.f32.mxu0 %v1577
        %1730 = vmatmul.mubr.f32.gmra.mrb[0].mxu0 %v1493
        %v1731 = vpop.f32.mrb[0].mxu0
        %v1732 = vadd.f32 0.0, %v1731
        %v1733 = vpop.f32.mrb[0].mxu0
        %1734 = vmatprep.mubr.f32.mxu0 %v1580
        %1735 = vmatmul.mubr.f32.gmra.mrb[0].mxu0 %v1495
        %v1736 = vpop.f32.mrb[0].mxu0
        %v1737 = vadd.f32 0.0, %v1736
        %v1738 = vpop.f32.mrb[0].mxu0
        %1739 = vmatprep.mubr.f32.mxu0 %v1583
        %1740 = vmatmul.mubr.f32.gmra.mrb[0].mxu0 %v1497
        %v1741 = vpop.f32.mrb[0].mxu0
        %v1742 = vadd.f32 0.0, %v1741
        %v1743 = vpop.f32.mrb[0].mxu0
        %1744 = vdwg.mxu0
        %v1745 = vadd.f32 %v1158, %v1652
        %v1746 = vadd.f32 %v1163, %v1657
        %v1747 = vadd.f32 %v1168, %v1662
        %v1748 = vadd.f32 %v1173, %v1667
        %v1749 = vadd.f32 %v1178, %v1672
        %v1750 = vadd.f32 %v1183, %v1677
        %v1751 = vadd.f32 %v1188, %v1682
        %v1752 = vadd.f32 %v1193, %v1687
        %v1753 = vadd.f32 %v1198, %v1692
        %v1754 = vadd.f32 %v1203, %v1697
        %v1755 = vadd.f32 %v1208, %v1702
        %v1756 = vadd.f32 %v1213, %v1707
        %v1757 = vadd.f32 %v1218, %v1712
        %v1758 = vadd.f32 %v1223, %v1717
        %v1759 = vadd.f32 %v1228, %v1722
        %v1760 = vadd.f32 %v1233, %v1727
        %v1761 = vadd.f32 %v1238, %v1732
        %v1762 = vadd.f32 %v1243, %v1737
        %v1763 = vadd.f32 %v1248, %v1742
        %1764 = vrot.lane.b32.xlu0 %v397, 80
        %v1765 = vpop.permute.xlu0 %1764
        %1766 = vrot.lane.b32.xlu0 %v399, 80
        %v1767 = vpop.permute.xlu0 %1766
        %1768 = vrot.lane.b32.xlu0 %v401, 80
        %v1769 = vpop.permute.xlu0 %1768
        %1770 = vrot.lane.b32.xlu0 %v403, 80
        %v1771 = vpop.permute.xlu0 %1770
        %1772 = vrot.lane.b32.xlu0 %v405, 80
        %v1773 = vpop.permute.xlu0 %1772
        %1774 = vrot.lane.b32.xlu0 %v407, 80
        %v1775 = vpop.permute.xlu0 %1774
        %1776 = vrot.lane.b32.xlu0 %v409, 80
        %v1777 = vpop.permute.xlu0 %1776
        %1778 = vrot.lane.b32.xlu0 %v411, 80
        %v1779 = vpop.permute.xlu0 %1778
        %1780 = vrot.lane.b32.xlu0 %v413, 80
        %v1781 = vpop.permute.xlu0 %1780
        %1782 = vrot.lane.b32.xlu0 %v415, 80
        %v1783 = vpop.permute.xlu0 %1782
        %1784 = vrot.lane.b32.xlu0 %v417, 80
        %v1785 = vpop.permute.xlu0 %1784
        %1786 = vrot.lane.b32.xlu0 %v419, 80
        %v1787 = vpop.permute.xlu0 %1786
        %1788 = vrot.lane.b32.xlu0 %v421, 80
        %v1789 = vpop.permute.xlu0 %1788
        %1790 = vrot.lane.b32.xlu0 %v423, 80
        %v1791 = vpop.permute.xlu0 %1790
        %1792 = vrot.lane.b32.xlu0 %v425, 80
        %v1793 = vpop.permute.xlu0 %1792
        %1794 = vrot.lane.b32.xlu0 %v427, 80
        %v1795 = vpop.permute.xlu0 %1794
        %1796 = vrot.lane.b32.xlu0 %v429, 80
        %v1797 = vpop.permute.xlu0 %1796
        %1798 = vrot.lane.b32.xlu0 %v431, 80
        %v1799 = vpop.permute.xlu0 %1798
        %1800 = vrot.lane.b32.xlu0 %v433, 80
        %v1801 = vpop.permute.xlu0 %1800
        %v1802 = vsel %vm729, %v673, %v1765
        %v1803 = vsel %vm729, %v675, %v1767
        %v1804 = vsel %vm729, %v677, %v1769
        %v1805 = vsel %vm729, %v679, %v1771
        %v1806 = vsel %vm729, %v681, %v1773
        %v1807 = vsel %vm729, %v683, %v1775
        %v1808 = vsel %vm729, %v685, %v1777
        %v1809 = vsel %vm729, %v687, %v1779
        %v1810 = vsel %vm729, %v689, %v1781
        %v1811 = vsel %vm729, %v691, %v1783
        %v1812 = vsel %vm729, %v693, %v1785
        %v1813 = vsel %vm729, %v695, %v1787
        %v1814 = vsel %vm729, %v697, %v1789
        %v1815 = vsel %vm729, %v699, %v1791
        %v1816 = vsel %vm729, %v701, %v1793
        %v1817 = vsel %vm729, %v703, %v1795
        %v1818 = vsel %vm729, %v705, %v1797
        %v1819 = vsel %vm729, %v707, %v1799
        %v1820 = vsel %vm729, %v709, %v1801
        %1859 = vrot.lane.b32.xlu0 %v396, 48
        %v1860 = vpop.permute.xlu0 %1859
        %1861 = vrot.lane.b32.xlu0 %v398, 48
        %v1862 = vpop.permute.xlu0 %1861
        %1863 = vrot.lane.b32.xlu0 %v400, 48
        %v1864 = vpop.permute.xlu0 %1863
        %1865 = vrot.lane.b32.xlu0 %v402, 48
        %v1866 = vpop.permute.xlu0 %1865
        %1867 = vrot.lane.b32.xlu0 %v404, 48
        %v1868 = vpop.permute.xlu0 %1867
        %1869 = vrot.lane.b32.xlu0 %v406, 48
        %v1870 = vpop.permute.xlu0 %1869
        %1871 = vrot.lane.b32.xlu0 %v408, 48
        %v1872 = vpop.permute.xlu0 %1871
        %1873 = vrot.lane.b32.xlu0 %v410, 48
        %v1874 = vpop.permute.xlu0 %1873
        %1875 = vrot.lane.b32.xlu0 %v412, 48
        %v1876 = vpop.permute.xlu0 %1875
        %1877 = vrot.lane.b32.xlu0 %v414, 48
        %v1878 = vpop.permute.xlu0 %1877
        %1879 = vrot.lane.b32.xlu0 %v416, 48
        %v1880 = vpop.permute.xlu0 %1879
        %1881 = vrot.lane.b32.xlu0 %v418, 48
        %v1882 = vpop.permute.xlu0 %1881
        %1883 = vrot.lane.b32.xlu0 %v420, 48
        %v1884 = vpop.permute.xlu0 %1883
        %1885 = vrot.lane.b32.xlu0 %v422, 48
        %v1886 = vpop.permute.xlu0 %1885
        %1887 = vrot.lane.b32.xlu0 %v424, 48
        %v1888 = vpop.permute.xlu0 %1887
        %1889 = vrot.lane.b32.xlu0 %v426, 48
        %v1890 = vpop.permute.xlu0 %1889
        %1891 = vrot.lane.b32.xlu0 %v428, 48
        %v1892 = vpop.permute.xlu0 %1891
        %1893 = vrot.lane.b32.xlu0 %v430, 48
        %v1894 = vpop.permute.xlu0 %1893
        %1895 = vrot.lane.b32.xlu0 %v432, 48
        %v1896 = vpop.permute.xlu0 %1895
        %vm1916 = vcmask 392192
        %v1917 = vsel %vm1916, %v1765, %v1860
        %v1918 = vsel %vm1916, %v1767, %v1862
        %v1919 = vsel %vm1916, %v1769, %v1864
        %v1920 = vsel %vm1916, %v1771, %v1866
        %v1921 = vsel %vm1916, %v1773, %v1868
        %v1922 = vsel %vm1916, %v1775, %v1870
        %v1923 = vsel %vm1916, %v1777, %v1872
        %v1924 = vsel %vm1916, %v1779, %v1874
        %v1925 = vsel %vm1916, %v1781, %v1876
        %v1926 = vsel %vm1916, %v1783, %v1878
        %v1927 = vsel %vm1916, %v1785, %v1880
        %v1928 = vsel %vm1916, %v1787, %v1882
        %v1929 = vsel %vm1916, %v1789, %v1884
        %v1930 = vsel %vm1916, %v1791, %v1886
        %v1931 = vsel %vm1916, %v1793, %v1888
        %v1932 = vsel %vm1916, %v1795, %v1890
        %v1933 = vsel %vm1916, %v1797, %v1892
        %v1934 = vsel %vm1916, %v1799, %v1894
        %v1935 = vsel %vm1916, %v1801, %v1896
        %v1936 = vmul.f32 %v396, %v1802
        %v1937 = vmul.f32 %v397, %v1917
        %v1938 = vmul.f32 %v398, %v1803
        %v1939 = vmul.f32 %v399, %v1918
        %v1940 = vmul.f32 %v400, %v1804
        %v1941 = vmul.f32 %v401, %v1919
        %v1942 = vmul.f32 %v402, %v1805
        %v1943 = vmul.f32 %v403, %v1920
        %v1944 = vmul.f32 %v404, %v1806
        %v1945 = vmul.f32 %v405, %v1921
        %v1946 = vmul.f32 %v406, %v1807
        %v1947 = vmul.f32 %v407, %v1922
        %v1948 = vmul.f32 %v408, %v1808
        %v1949 = vmul.f32 %v409, %v1923
        %v1950 = vmul.f32 %v410, %v1809
        %v1951 = vmul.f32 %v411, %v1924
        %v1952 = vmul.f32 %v412, %v1810
        %v1953 = vmul.f32 %v413, %v1925
        %v1954 = vmul.f32 %v414, %v1811
        %v1955 = vmul.f32 %v415, %v1926
        %v1956 = vmul.f32 %v416, %v1812
        %v1957 = vmul.f32 %v417, %v1927
        %v1958 = vmul.f32 %v418, %v1813
        %v1959 = vmul.f32 %v419, %v1928
        %v1960 = vmul.f32 %v420, %v1814
        %v1961 = vmul.f32 %v421, %v1929
        %v1962 = vmul.f32 %v422, %v1815
        %v1963 = vmul.f32 %v423, %v1930
        %v1964 = vmul.f32 %v424, %v1816
        %v1965 = vmul.f32 %v425, %v1931
        %v1966 = vmul.f32 %v426, %v1817
        %v1967 = vmul.f32 %v427, %v1932
        %v1968 = vmul.f32 %v428, %v1818
        %v1969 = vmul.f32 %v429, %v1933
        %v1970 = vmul.f32 %v430, %v1819
        %v1971 = vmul.f32 %v431, %v1934
        %v1972 = vmul.f32 %v432, %v1820
        %v1973 = vmul.f32 %v433, %v1935
        %s1974 = scalar_lea.vmem [#allocation5], 672
        %v1975 = vld [vmem:[%s1974] sm:$0xff]
        %v1976 = vld [vmem:[%s1974 + $0x8] sm:$0xff]
        %v1977 = vld [vmem:[%s1974 + $0x10] sm:$0xff]
        %v1978 = vld [vmem:[%s1974 + $0x18] sm:$0xff]
        %v1979 = vld [vmem:[%s1974 + $0x20] sm:$0xff]
        %v1980 = vld [vmem:[%s1974 + $0x28] sm:$0xff]
        %v1981 = vld [vmem:[%s1974 + $0x30] sm:$0xff]
        %v1982 = vld [vmem:[%s1974 + $0x38] sm:$0xff]
        %v1983 = vld [vmem:[%s1974 + $0x40] sm:$0xff]
        %v1984 = vld [vmem:[%s1974 + $0x48] sm:$0xff]
        %v1985 = vld [vmem:[%s1974 + $0x50] sm:$0xff]
        %v1986 = vld [vmem:[%s1974 + $0x58] sm:$0xff]
        %v1987 = vld [vmem:[%s1974 + $0x60] sm:$0xff]
        %v1988 = vld [vmem:[%s1974 + $0x68] sm:$0xff]
        %v1989 = vld [vmem:[%s1974 + $0x70] sm:$0xff]
        %v1990 = vld [vmem:[%s1974 + $0x78] sm:$0xff]
        %v1991 = vld [vmem:[%s1974 + $0x80] sm:$0xff]
        %v1992 = vld [vmem:[%s1974 + $0x88] sm:$0xff]
        %v1993 = vld [vmem:[%s1974 + $0x90] sm:$0xff]
        %v1994 = vld [vmem:[%s1974 + $0x98] sm:$0xff]
        %v1995 = vld [vmem:[%s1974 + $0xa0] sm:$0xff]
        %v1996 = vld [vmem:[%s1974 + $0xa8] sm:$0xff]
        %v1997 = vld [vmem:[%s1974 + $0xb0] sm:$0xff]
        %v1998 = vld [vmem:[%s1974 + $0xb8] sm:$0xff]
        %v1999 = vld [vmem:[%s1974 + $0xc0] sm:$0xff]
        %v2000 = vld [vmem:[%s1974 + $0xc8] sm:$0xff]
        %v2001 = vld [vmem:[%s1974 + $0xd0] sm:$0xff]
        %v2002 = vld [vmem:[%s1974 + $0xd8] sm:$0xff]
        %v2004 = vsel %vm816, %v1937, 0
        %v2007 = vsel %vm816, %v1939, 0
        %v2010 = vsel %vm816, %v1941, 0
        %v2013 = vsel %vm816, %v1943, 0
        %v2016 = vsel %vm816, %v1945, 0
        %v2019 = vsel %vm816, %v1947, 0
        %v2022 = vsel %vm816, %v1949, 0
        %v2025 = vsel %vm816, %v1951, 0
        %v2028 = vsel %vm816, %v1953, 0
        %v2031 = vsel %vm816, %v1955, 0
        %v2034 = vsel %vm816, %v1957, 0
        %v2037 = vsel %vm816, %v1959, 0
        %v2040 = vsel %vm816, %v1961, 0
        %v2043 = vsel %vm816, %v1963, 0
        %v2046 = vsel %vm816, %v1965, 0
        %v2049 = vsel %vm816, %v1967, 0
        %v2052 = vsel %vm816, %v1969, 0
        %v2055 = vsel %vm816, %v1971, 0
        %v2058 = vsel %vm816, %v1973, 0
        %2060 = vmatprep.subr.mxu0 0.0
        %2061 = vmatpush1.msra.mxu0 %v1975
        %2062 = vmatprep.subr.mxu0 0.0
        %2063 = vmatpush1.msra.mxu0 %v1976
        %2064 = vmatprep.subr.mxu0 0.0
        %2065 = vmatpush1.msra.mxu0 %v1977
        %2066 = vmatprep.subr.mxu0 0.0
        %2067 = vmatpush1.msra.mxu0 %v1978
        %2068 = vmatprep.subr.mxu0 0.0
        %2069 = vmatpush1.msra.mxu0 %v1979
        %2070 = vmatprep.subr.mxu0 0.0
        %2071 = vmatpush1.msra.mxu0 %v1980
        %2072 = vmatprep.subr.mxu0 0.0
        %2073 = vmatpush1.msra.mxu0 %v1981
        %2074 = vmatprep.subr.mxu0 0.0
        %2075 = vmatpush1.msra.mxu0 %v1982
        %2076 = vmatprep.subr.mxu0 0.0
        %2077 = vmatpush1.msra.mxu0 %v1983
        %2078 = vmatprep.subr.mxu0 0.0
        %2079 = vmatpush1.msra.mxu0 %v1984
        %2080 = vmatprep.subr.mxu0 0.0
        %2081 = vmatpush1.msra.mxu0 %v1985
        %2082 = vmatprep.subr.mxu0 0.0
        %2083 = vmatpush1.msra.mxu0 %v1986
        %2084 = vmatprep.subr.mxu0 0.0
        %2085 = vmatpush1.msra.mxu0 %v1987
        %2086 = vmatprep.subr.mxu0 0.0
        %2087 = vmatpush1.msra.mxu0 %v1988
        %2088 = vmatprep.subr.mxu0 0.0
        %2089 = vmatpush1.msra.mxu0 %v1989
        %2090 = vmatprep.subr.mxu0 0.0
        %2091 = vmatpush1.msra.mxu0 %v1990
        %2092 = vmatprep.subr.mxu0 0.0
        %2093 = vmatpush1.msra.mxu0 %v1991
        %2094 = vmatprep.subr.mxu0 0.0
        %2095 = vmatpush1.msra.mxu0 %v1992
        %2096 = vmatprep.subr.mxu0 0.0
        %2097 = vmatpush1.msra.mxu0 %v1993
        %2098 = vmatprep.subr.mxu0 0.0
        %2099 = vmatpush1.msra.mxu0 %v1994
        %2100 = vmatprep.subr.mxu0 0.0
        %2101 = vmatpush1.msra.mxu0 %v1995
        %2102 = vmatprep.subr.mxu0 0.0
        %2103 = vmatpush1.msra.mxu0 %v1996
        %2104 = vmatprep.subr.mxu0 0.0
        %2105 = vmatpush1.msra.mxu0 %v1997
        %2106 = vmatprep.subr.mxu0 0.0
        %2107 = vmatpush1.msra.mxu0 %v1998
        %2108 = vmatprep.subr.mxu0 0.0
        %2109 = vmatpush1.msra.mxu0 %v1999
        %2110 = vmatprep.subr.mxu0 0.0
        %2111 = vmatpush1.msra.mxu0 %v2000
        %2112 = vmatprep.subr.mxu0 0.0
        %2113 = vmatpush1.msra.mxu0 %v2001
        %2114 = vmatprep.subr.mxu0 0.0
        %2115 = vmatpush1.msra.mxu0 %v2002
        %2116 = vmatprep.subr.mxu0 0.0
        %2117 = vmatpush1.msra.mxu0 0.0
        %2118 = vmatprep.subr.mxu0 0.0
        %2119 = vmatpush1.msra.mxu0 0.0
        %2120 = vmatprep.subr.mxu0 0.0
        %2121 = vmatpush1.msra.mxu0 0.0
        %2122 = vmatprep.subr.mxu0 0.0
        %2123 = vmatpush1.msra.mxu0 0.0
        %2124 = vmatprep.mubr.f32.mxu0 %v2004
        %2125 = vmatmul.mubr.f32.gmra.mrb[0].mxu0 %v1936
        %v2126 = vpop.f32.mrb[0].mxu0
        %v2127 = vadd.f32 0.0, %v2126
        %v2128 = vpop.f32.mrb[0].mxu0
        %2129 = vmatprep.mubr.f32.mxu0 %v2007
        %2130 = vmatmul.mubr.f32.gmra.mrb[0].mxu0 %v1938
        %v2131 = vpop.f32.mrb[0].mxu0
        %v2132 = vadd.f32 0.0, %v2131
        %v2133 = vpop.f32.mrb[0].mxu0
        %2134 = vmatprep.mubr.f32.mxu0 %v2010
        %2135 = vmatmul.mubr.f32.gmra.mrb[0].mxu0 %v1940
        %v2136 = vpop.f32.mrb[0].mxu0
        %v2137 = vadd.f32 0.0, %v2136
        %v2138 = vpop.f32.mrb[0].mxu0
        %2139 = vmatprep.mubr.f32.mxu0 %v2013
        %2140 = vmatmul.mubr.f32.gmra.mrb[0].mxu0 %v1942
        %v2141 = vpop.f32.mrb[0].mxu0
        %v2142 = vadd.f32 0.0, %v2141
        %v2143 = vpop.f32.mrb[0].mxu0
        %2144 = vmatprep.mubr.f32.mxu0 %v2016
        %2145 = vmatmul.mubr.f32.gmra.mrb[0].mxu0 %v1944
        %v2146 = vpop.f32.mrb[0].mxu0
        %v2147 = vadd.f32 0.0, %v2146
        %v2148 = vpop.f32.mrb[0].mxu0
        %2149 = vmatprep.mubr.f32.mxu0 %v2019
        %2150 = vmatmul.mubr.f32.gmra.mrb[0].mxu0 %v1946
        %v2151 = vpop.f32.mrb[0].mxu0
        %v2152 = vadd.f32 0.0, %v2151
        %v2153 = vpop.f32.mrb[0].mxu0
        %2154 = vmatprep.mubr.f32.mxu0 %v2022
        %2155 = vmatmul.mubr.f32.gmra.mrb[0].mxu0 %v1948
        %v2156 = vpop.f32.mrb[0].mxu0
        %v2157 = vadd.f32 0.0, %v2156
        %v2158 = vpop.f32.mrb[0].mxu0
        %2159 = vmatprep.mubr.f32.mxu0 %v2025
        %2160 = vmatmul.mubr.f32.gmra.mrb[0].mxu0 %v1950
        %v2161 = vpop.f32.mrb[0].mxu0
        %v2162 = vadd.f32 0.0, %v2161
        %v2163 = vpop.f32.mrb[0].mxu0
        %2164 = vmatprep.mubr.f32.mxu0 %v2028
        %2165 = vmatmul.mubr.f32.gmra.mrb[0].mxu0 %v1952
        %v2166 = vpop.f32.mrb[0].mxu0
        %v2167 = vadd.f32 0.0, %v2166
        %v2168 = vpop.f32.mrb[0].mxu0
        %2169 = vmatprep.mubr.f32.mxu0 %v2031
        %2170 = vmatmul.mubr.f32.gmra.mrb[0].mxu0 %v1954
        %v2171 = vpop.f32.mrb[0].mxu0
        %v2172 = vadd.f32 0.0, %v2171
        %v2173 = vpop.f32.mrb[0].mxu0
        %2174 = vmatprep.mubr.f32.mxu0 %v2034
        %2175 = vmatmul.mubr.f32.gmra.mrb[0].mxu0 %v1956
        %v2176 = vpop.f32.mrb[0].mxu0
        %v2177 = vadd.f32 0.0, %v2176
        %v2178 = vpop.f32.mrb[0].mxu0
        %2179 = vmatprep.mubr.f32.mxu0 %v2037
        %2180 = vmatmul.mubr.f32.gmra.mrb[0].mxu0 %v1958
        %v2181 = vpop.f32.mrb[0].mxu0
        %v2182 = vadd.f32 0.0, %v2181
        %v2183 = vpop.f32.mrb[0].mxu0
        %2184 = vmatprep.mubr.f32.mxu0 %v2040
        %2185 = vmatmul.mubr.f32.gmra.mrb[0].mxu0 %v1960
        %v2186 = vpop.f32.mrb[0].mxu0
        %v2187 = vadd.f32 0.0, %v2186
        %v2188 = vpop.f32.mrb[0].mxu0
        %2189 = vmatprep.mubr.f32.mxu0 %v2043
        %2190 = vmatmul.mubr.f32.gmra.mrb[0].mxu0 %v1962
        %v2191 = vpop.f32.mrb[0].mxu0
        %v2192 = vadd.f32 0.0, %v2191
        %v2193 = vpop.f32.mrb[0].mxu0
        %2194 = vmatprep.mubr.f32.mxu0 %v2046
        %2195 = vmatmul.mubr.f32.gmra.mrb[0].mxu0 %v1964
        %v2196 = vpop.f32.mrb[0].mxu0
        %v2197 = vadd.f32 0.0, %v2196
        %v2198 = vpop.f32.mrb[0].mxu0
        %2199 = vmatprep.mubr.f32.mxu0 %v2049
        %2200 = vmatmul.mubr.f32.gmra.mrb[0].mxu0 %v1966
        %v2201 = vpop.f32.mrb[0].mxu0
        %v2202 = vadd.f32 0.0, %v2201
        %v2203 = vpop.f32.mrb[0].mxu0
        %2204 = vmatprep.mubr.f32.mxu0 %v2052
        %2205 = vmatmul.mubr.f32.gmra.mrb[0].mxu0 %v1968
        %v2206 = vpop.f32.mrb[0].mxu0
        %v2207 = vadd.f32 0.0, %v2206
        %v2208 = vpop.f32.mrb[0].mxu0
        %2209 = vmatprep.mubr.f32.mxu0 %v2055
        %2210 = vmatmul.mubr.f32.gmra.mrb[0].mxu0 %v1970
        %v2211 = vpop.f32.mrb[0].mxu0
        %v2212 = vadd.f32 0.0, %v2211
        %v2213 = vpop.f32.mrb[0].mxu0
        %2214 = vmatprep.mubr.f32.mxu0 %v2058
        %2215 = vmatmul.mubr.f32.gmra.mrb[0].mxu0 %v1972
        %v2216 = vpop.f32.mrb[0].mxu0
        %v2217 = vadd.f32 0.0, %v2216
        %v2218 = vpop.f32.mrb[0].mxu0
        %2219 = vdwg.mxu0
        %v2220 = vadd.f32 %v1745, %v2127
        %v2221 = vadd.f32 %v1746, %v2132
        %v2222 = vadd.f32 %v1747, %v2137
        %v2223 = vadd.f32 %v1748, %v2142
        %v2224 = vadd.f32 %v1749, %v2147
        %v2225 = vadd.f32 %v1750, %v2152
        %v2226 = vadd.f32 %v1751, %v2157
        %v2227 = vadd.f32 %v1752, %v2162
        %v2228 = vadd.f32 %v1753, %v2167
        %v2229 = vadd.f32 %v1754, %v2172
        %v2230 = vadd.f32 %v1755, %v2177
        %v2231 = vadd.f32 %v1756, %v2182
        %v2232 = vadd.f32 %v1757, %v2187
        %v2233 = vadd.f32 %v1758, %v2192
        %v2234 = vadd.f32 %v1759, %v2197
        %v2235 = vadd.f32 %v1760, %v2202
        %v2236 = vadd.f32 %v1761, %v2207
        %v2237 = vadd.f32 %v1762, %v2212
        %v2238 = vadd.f32 %v1763, %v2217
        %2239 = vrot.lane.b32.xlu0 %v397, 64
        %v2240 = vpop.permute.xlu0 %2239
        %2241 = vrot.lane.b32.xlu0 %v399, 64
        %v2242 = vpop.permute.xlu0 %2241
        %2243 = vrot.lane.b32.xlu0 %v401, 64
        %v2244 = vpop.permute.xlu0 %2243
        %2245 = vrot.lane.b32.xlu0 %v403, 64
        %v2246 = vpop.permute.xlu0 %2245
        %2247 = vrot.lane.b32.xlu0 %v405, 64
        %v2248 = vpop.permute.xlu0 %2247
        %2249 = vrot.lane.b32.xlu0 %v407, 64
        %v2250 = vpop.permute.xlu0 %2249
        %2251 = vrot.lane.b32.xlu0 %v409, 64
        %v2252 = vpop.permute.xlu0 %2251
        %2253 = vrot.lane.b32.xlu0 %v411, 64
        %v2254 = vpop.permute.xlu0 %2253
        %2255 = vrot.lane.b32.xlu0 %v413, 64
        %v2256 = vpop.permute.xlu0 %2255
        %2257 = vrot.lane.b32.xlu0 %v415, 64
        %v2258 = vpop.permute.xlu0 %2257
        %2259 = vrot.lane.b32.xlu0 %v417, 64
        %v2260 = vpop.permute.xlu0 %2259
        %2261 = vrot.lane.b32.xlu0 %v419, 64
        %v2262 = vpop.permute.xlu0 %2261
        %2263 = vrot.lane.b32.xlu0 %v421, 64
        %v2264 = vpop.permute.xlu0 %2263
        %2265 = vrot.lane.b32.xlu0 %v423, 64
        %v2266 = vpop.permute.xlu0 %2265
        %2267 = vrot.lane.b32.xlu0 %v425, 64
        %v2268 = vpop.permute.xlu0 %2267
        %2269 = vrot.lane.b32.xlu0 %v427, 64
        %v2270 = vpop.permute.xlu0 %2269
        %2271 = vrot.lane.b32.xlu0 %v429, 64
        %v2272 = vpop.permute.xlu0 %2271
        %2273 = vrot.lane.b32.xlu0 %v431, 64
        %v2274 = vpop.permute.xlu0 %2273
        %2275 = vrot.lane.b32.xlu0 %v433, 64
        %v2276 = vpop.permute.xlu0 %2275
        %v2277 = vsel %vm1441, %v1385, %v2240
        %v2278 = vsel %vm1441, %v1387, %v2242
        %v2279 = vsel %vm1441, %v1389, %v2244
        %v2280 = vsel %vm1441, %v1391, %v2246
        %v2281 = vsel %vm1441, %v1393, %v2248
        %v2282 = vsel %vm1441, %v1395, %v2250
        %v2283 = vsel %vm1441, %v1397, %v2252
        %v2284 = vsel %vm1441, %v1399, %v2254
        %v2285 = vsel %vm1441, %v1401, %v2256
        %v2286 = vsel %vm1441, %v1403, %v2258
        %v2287 = vsel %vm1441, %v1405, %v2260
        %v2288 = vsel %vm1441, %v1407, %v2262
        %v2289 = vsel %vm1441, %v1409, %v2264
        %v2290 = vsel %vm1441, %v1411, %v2266
        %v2291 = vsel %vm1441, %v1413, %v2268
        %v2292 = vsel %vm1441, %v1415, %v2270
        %v2293 = vsel %vm1441, %v1417, %v2272
        %v2294 = vsel %vm1441, %v1419, %v2274
        %v2295 = vsel %vm1441, %v1421, %v2276
        %2334 = vrot.lane.b32.xlu0 %v396, 32
        %v2335 = vpop.permute.xlu0 %2334
        %2336 = vrot.lane.b32.xlu0 %v398, 32
        %v2337 = vpop.permute.xlu0 %2336
        %2338 = vrot.lane.b32.xlu0 %v400, 32
        %v2339 = vpop.permute.xlu0 %2338
        %2340 = vrot.lane.b32.xlu0 %v402, 32
        %v2341 = vpop.permute.xlu0 %2340
        %2342 = vrot.lane.b32.xlu0 %v404, 32
        %v2343 = vpop.permute.xlu0 %2342
        %2344 = vrot.lane.b32.xlu0 %v406, 32
        %v2345 = vpop.permute.xlu0 %2344
        %2346 = vrot.lane.b32.xlu0 %v408, 32
        %v2347 = vpop.permute.xlu0 %2346
        %2348 = vrot.lane.b32.xlu0 %v410, 32
        %v2349 = vpop.permute.xlu0 %2348
        %2350 = vrot.lane.b32.xlu0 %v412, 32
        %v2351 = vpop.permute.xlu0 %2350
        %2352 = vrot.lane.b32.xlu0 %v414, 32
        %v2353 = vpop.permute.xlu0 %2352
        %2354 = vrot.lane.b32.xlu0 %v416, 32
        %v2355 = vpop.permute.xlu0 %2354
        %2356 = vrot.lane.b32.xlu0 %v418, 32
        %v2357 = vpop.permute.xlu0 %2356
        %2358 = vrot.lane.b32.xlu0 %v420, 32
        %v2359 = vpop.permute.xlu0 %2358
        %2360 = vrot.lane.b32.xlu0 %v422, 32
        %v2361 = vpop.permute.xlu0 %2360
        %2362 = vrot.lane.b32.xlu0 %v424, 32
        %v2363 = vpop.permute.xlu0 %2362
        %2364 = vrot.lane.b32.xlu0 %v426, 32
        %v2365 = vpop.permute.xlu0 %2364
        %2366 = vrot.lane.b32.xlu0 %v428, 32
        %v2367 = vpop.permute.xlu0 %2366
        %2368 = vrot.lane.b32.xlu0 %v430, 32
        %v2369 = vpop.permute.xlu0 %2368
        %2370 = vrot.lane.b32.xlu0 %v432, 32
        %v2371 = vpop.permute.xlu0 %2370
        %vm2391 = vcmask 261120
        %v2392 = vsel %vm2391, %v2240, %v2335
        %v2393 = vsel %vm2391, %v2242, %v2337
        %v2394 = vsel %vm2391, %v2244, %v2339
        %v2395 = vsel %vm2391, %v2246, %v2341
        %v2396 = vsel %vm2391, %v2248, %v2343
        %v2397 = vsel %vm2391, %v2250, %v2345
        %v2398 = vsel %vm2391, %v2252, %v2347
        %v2399 = vsel %vm2391, %v2254, %v2349
        %v2400 = vsel %vm2391, %v2256, %v2351
        %v2401 = vsel %vm2391, %v2258, %v2353
        %v2402 = vsel %vm2391, %v2260, %v2355
        %v2403 = vsel %vm2391, %v2262, %v2357
        %v2404 = vsel %vm2391, %v2264, %v2359
        %v2405 = vsel %vm2391, %v2266, %v2361
        %v2406 = vsel %vm2391, %v2268, %v2363
        %v2407 = vsel %vm2391, %v2270, %v2365
        %v2408 = vsel %vm2391, %v2272, %v2367
        %v2409 = vsel %vm2391, %v2274, %v2369
        %v2410 = vsel %vm2391, %v2276, %v2371
        %v2411 = vmul.f32 %v396, %v2277
        %v2412 = vmul.f32 %v397, %v2392
        %v2413 = vmul.f32 %v398, %v2278
        %v2414 = vmul.f32 %v399, %v2393
        %v2415 = vmul.f32 %v400, %v2279
        %v2416 = vmul.f32 %v401, %v2394
        %v2417 = vmul.f32 %v402, %v2280
        %v2418 = vmul.f32 %v403, %v2395
        %v2419 = vmul.f32 %v404, %v2281
        %v2420 = vmul.f32 %v405, %v2396
        %v2421 = vmul.f32 %v406, %v2282
        %v2422 = vmul.f32 %v407, %v2397
        %v2423 = vmul.f32 %v408, %v2283
        %v2424 = vmul.f32 %v409, %v2398
        %v2425 = vmul.f32 %v410, %v2284
        %v2426 = vmul.f32 %v411, %v2399
        %v2427 = vmul.f32 %v412, %v2285
        %v2428 = vmul.f32 %v413, %v2400
        %v2429 = vmul.f32 %v414, %v2286
        %v2430 = vmul.f32 %v415, %v2401
        %v2431 = vmul.f32 %v416, %v2287
        %v2432 = vmul.f32 %v417, %v2402
        %v2433 = vmul.f32 %v418, %v2288
        %v2434 = vmul.f32 %v419, %v2403
        %v2435 = vmul.f32 %v420, %v2289
        %v2436 = vmul.f32 %v421, %v2404
        %v2437 = vmul.f32 %v422, %v2290
        %v2438 = vmul.f32 %v423, %v2405
        %v2439 = vmul.f32 %v424, %v2291
        %v2440 = vmul.f32 %v425, %v2406
        %v2441 = vmul.f32 %v426, %v2292
        %v2442 = vmul.f32 %v427, %v2407
        %v2443 = vmul.f32 %v428, %v2293
        %v2444 = vmul.f32 %v429, %v2408
        %v2445 = vmul.f32 %v430, %v2294
        %v2446 = vmul.f32 %v431, %v2409
        %v2447 = vmul.f32 %v432, %v2295
        %v2448 = vmul.f32 %v433, %v2410
        %s2449 = scalar_lea.vmem [#allocation5], 896
        %v2450 = vld [vmem:[%s2449] sm:$0xff]
        %v2451 = vld [vmem:[%s2449 + $0x8] sm:$0xff]
        %v2452 = vld [vmem:[%s2449 + $0x10] sm:$0xff]
        %v2453 = vld [vmem:[%s2449 + $0x18] sm:$0xff]
        %v2454 = vld [vmem:[%s2449 + $0x20] sm:$0xff]
        %v2455 = vld [vmem:[%s2449 + $0x28] sm:$0xff]
        %v2456 = vld [vmem:[%s2449 + $0x30] sm:$0xff]
        %v2457 = vld [vmem:[%s2449 + $0x38] sm:$0xff]
        %v2458 = vld [vmem:[%s2449 + $0x40] sm:$0xff]
        %v2459 = vld [vmem:[%s2449 + $0x48] sm:$0xff]
        %v2460 = vld [vmem:[%s2449 + $0x50] sm:$0xff]
        %v2461 = vld [vmem:[%s2449 + $0x58] sm:$0xff]
        %v2462 = vld [vmem:[%s2449 + $0x60] sm:$0xff]
        %v2463 = vld [vmem:[%s2449 + $0x68] sm:$0xff]
        %v2464 = vld [vmem:[%s2449 + $0x70] sm:$0xff]
        %v2465 = vld [vmem:[%s2449 + $0x78] sm:$0xff]
        %v2466 = vld [vmem:[%s2449 + $0x80] sm:$0xff]
        %v2467 = vld [vmem:[%s2449 + $0x88] sm:$0xff]
        %v2468 = vld [vmem:[%s2449 + $0x90] sm:$0xff]
        %v2469 = vld [vmem:[%s2449 + $0x98] sm:$0xff]
        %v2470 = vld [vmem:[%s2449 + $0xa0] sm:$0xff]
        %v2471 = vld [vmem:[%s2449 + $0xa8] sm:$0xff]
        %v2472 = vld [vmem:[%s2449 + $0xb0] sm:$0xff]
        %v2473 = vld [vmem:[%s2449 + $0xb8] sm:$0xff]
        %v2474 = vld [vmem:[%s2449 + $0xc0] sm:$0xff]
        %v2475 = vld [vmem:[%s2449 + $0xc8] sm:$0xff]
        %v2476 = vld [vmem:[%s2449 + $0xd0] sm:$0xff]
        %v2477 = vld [vmem:[%s2449 + $0xd8] sm:$0xff]
        %v2479 = vsel %vm816, %v2412, 0
        %v2482 = vsel %vm816, %v2414, 0
        %v2485 = vsel %vm816, %v2416, 0
        %v2488 = vsel %vm816, %v2418, 0
        %v2491 = vsel %vm816, %v2420, 0
        %v2494 = vsel %vm816, %v2422, 0
        %v2497 = vsel %vm816, %v2424, 0
        %v2500 = vsel %vm816, %v2426, 0
        %v2503 = vsel %vm816, %v2428, 0
        %v2506 = vsel %vm816, %v2430, 0
        %v2509 = vsel %vm816, %v2432, 0
        %v2512 = vsel %vm816, %v2434, 0
        %v2515 = vsel %vm816, %v2436, 0
        %v2518 = vsel %vm816, %v2438, 0
        %v2521 = vsel %vm816, %v2440, 0
        %v2524 = vsel %vm816, %v2442, 0
        %v2527 = vsel %vm816, %v2444, 0
        %v2530 = vsel %vm816, %v2446, 0
        %v2533 = vsel %vm816, %v2448, 0
        %2535 = vmatprep.subr.mxu0 0.0
        %2536 = vmatpush1.msra.mxu0 %v2450
        %2537 = vmatprep.subr.mxu0 0.0
        %2538 = vmatpush1.msra.mxu0 %v2451
        %2539 = vmatprep.subr.mxu0 0.0
        %2540 = vmatpush1.msra.mxu0 %v2452
        %2541 = vmatprep.subr.mxu0 0.0
        %2542 = vmatpush1.msra.mxu0 %v2453
        %2543 = vmatprep.subr.mxu0 0.0
        %2544 = vmatpush1.msra.mxu0 %v2454
        %2545 = vmatprep.subr.mxu0 0.0
        %2546 = vmatpush1.msra.mxu0 %v2455
        %2547 = vmatprep.subr.mxu0 0.0
        %2548 = vmatpush1.msra.mxu0 %v2456
        %2549 = vmatprep.subr.mxu0 0.0
        %2550 = vmatpush1.msra.mxu0 %v2457
        %2551 = vmatprep.subr.mxu0 0.0
        %2552 = vmatpush1.msra.mxu0 %v2458
        %2553 = vmatprep.subr.mxu0 0.0
        %2554 = vmatpush1.msra.mxu0 %v2459
        %2555 = vmatprep.subr.mxu0 0.0
        %2556 = vmatpush1.msra.mxu0 %v2460
        %2557 = vmatprep.subr.mxu0 0.0
        %2558 = vmatpush1.msra.mxu0 %v2461
        %2559 = vmatprep.subr.mxu0 0.0
        %2560 = vmatpush1.msra.mxu0 %v2462
        %2561 = vmatprep.subr.mxu0 0.0
        %2562 = vmatpush1.msra.mxu0 %v2463
        %2563 = vmatprep.subr.mxu0 0.0
        %2564 = vmatpush1.msra.mxu0 %v2464
        %2565 = vmatprep.subr.mxu0 0.0
        %2566 = vmatpush1.msra.mxu0 %v2465
        %2567 = vmatprep.subr.mxu0 0.0
        %2568 = vmatpush1.msra.mxu0 %v2466
        %2569 = vmatprep.subr.mxu0 0.0
        %2570 = vmatpush1.msra.mxu0 %v2467
        %2571 = vmatprep.subr.mxu0 0.0
        %2572 = vmatpush1.msra.mxu0 %v2468
        %2573 = vmatprep.subr.mxu0 0.0
        %2574 = vmatpush1.msra.mxu0 %v2469
        %2575 = vmatprep.subr.mxu0 0.0
        %2576 = vmatpush1.msra.mxu0 %v2470
        %2577 = vmatprep.subr.mxu0 0.0
        %2578 = vmatpush1.msra.mxu0 %v2471
        %2579 = vmatprep.subr.mxu0 0.0
        %2580 = vmatpush1.msra.mxu0 %v2472
        %2581 = vmatprep.subr.mxu0 0.0
        %2582 = vmatpush1.msra.mxu0 %v2473
        %2583 = vmatprep.subr.mxu0 0.0
        %2584 = vmatpush1.msra.mxu0 %v2474
        %2585 = vmatprep.subr.mxu0 0.0
        %2586 = vmatpush1.msra.mxu0 %v2475
        %2587 = vmatprep.subr.mxu0 0.0
        %2588 = vmatpush1.msra.mxu0 %v2476
        %2589 = vmatprep.subr.mxu0 0.0
        %2590 = vmatpush1.msra.mxu0 %v2477
        %2591 = vmatprep.subr.mxu0 0.0
        %2592 = vmatpush1.msra.mxu0 0.0
        %2593 = vmatprep.subr.mxu0 0.0
        %2594 = vmatpush1.msra.mxu0 0.0
        %2595 = vmatprep.subr.mxu0 0.0
        %2596 = vmatpush1.msra.mxu0 0.0
        %2597 = vmatprep.subr.mxu0 0.0
        %2598 = vmatpush1.msra.mxu0 0.0
        %2599 = vmatprep.mubr.f32.mxu0 %v2479
        %2600 = vmatmul.mubr.f32.gmra.mrb[0].mxu0 %v2411
        %v2601 = vpop.f32.mrb[0].mxu0
        %v2602 = vadd.f32 0.0, %v2601
        %v2603 = vpop.f32.mrb[0].mxu0
        %2604 = vmatprep.mubr.f32.mxu0 %v2482
        %2605 = vmatmul.mubr.f32.gmra.mrb[0].mxu0 %v2413
        %v2606 = vpop.f32.mrb[0].mxu0
        %v2607 = vadd.f32 0.0, %v2606
        %v2608 = vpop.f32.mrb[0].mxu0
        %2609 = vmatprep.mubr.f32.mxu0 %v2485
        %2610 = vmatmul.mubr.f32.gmra.mrb[0].mxu0 %v2415
        %v2611 = vpop.f32.mrb[0].mxu0
        %v2612 = vadd.f32 0.0, %v2611
        %v2613 = vpop.f32.mrb[0].mxu0
        %2614 = vmatprep.mubr.f32.mxu0 %v2488
        %2615 = vmatmul.mubr.f32.gmra.mrb[0].mxu0 %v2417
        %v2616 = vpop.f32.mrb[0].mxu0
        %v2617 = vadd.f32 0.0, %v2616
        %v2618 = vpop.f32.mrb[0].mxu0
        %2619 = vmatprep.mubr.f32.mxu0 %v2491
        %2620 = vmatmul.mubr.f32.gmra.mrb[0].mxu0 %v2419
        %v2621 = vpop.f32.mrb[0].mxu0
        %v2622 = vadd.f32 0.0, %v2621
        %v2623 = vpop.f32.mrb[0].mxu0
        %2624 = vmatprep.mubr.f32.mxu0 %v2494
        %2625 = vmatmul.mubr.f32.gmra.mrb[0].mxu0 %v2421
        %v2626 = vpop.f32.mrb[0].mxu0
        %v2627 = vadd.f32 0.0, %v2626
        %v2628 = vpop.f32.mrb[0].mxu0
        %2629 = vmatprep.mubr.f32.mxu0 %v2497
        %2630 = vmatmul.mubr.f32.gmra.mrb[0].mxu0 %v2423
        %v2631 = vpop.f32.mrb[0].mxu0
        %v2632 = vadd.f32 0.0, %v2631
        %v2633 = vpop.f32.mrb[0].mxu0
        %2634 = vmatprep.mubr.f32.mxu0 %v2500
        %2635 = vmatmul.mubr.f32.gmra.mrb[0].mxu0 %v2425
        %v2636 = vpop.f32.mrb[0].mxu0
        %v2637 = vadd.f32 0.0, %v2636
        %v2638 = vpop.f32.mrb[0].mxu0
        %2639 = vmatprep.mubr.f32.mxu0 %v2503
        %2640 = vmatmul.mubr.f32.gmra.mrb[0].mxu0 %v2427
        %v2641 = vpop.f32.mrb[0].mxu0
        %v2642 = vadd.f32 0.0, %v2641
        %v2643 = vpop.f32.mrb[0].mxu0
        %2644 = vmatprep.mubr.f32.mxu0 %v2506
        %2645 = vmatmul.mubr.f32.gmra.mrb[0].mxu0 %v2429
        %v2646 = vpop.f32.mrb[0].mxu0
        %v2647 = vadd.f32 0.0, %v2646
        %v2648 = vpop.f32.mrb[0].mxu0
        %2649 = vmatprep.mubr.f32.mxu0 %v2509
        %2650 = vmatmul.mubr.f32.gmra.mrb[0].mxu0 %v2431
        %v2651 = vpop.f32.mrb[0].mxu0
        %v2652 = vadd.f32 0.0, %v2651
        %v2653 = vpop.f32.mrb[0].mxu0
        %2654 = vmatprep.mubr.f32.mxu0 %v2512
        %2655 = vmatmul.mubr.f32.gmra.mrb[0].mxu0 %v2433
        %v2656 = vpop.f32.mrb[0].mxu0
        %v2657 = vadd.f32 0.0, %v2656
        %v2658 = vpop.f32.mrb[0].mxu0
        %2659 = vmatprep.mubr.f32.mxu0 %v2515
        %2660 = vmatmul.mubr.f32.gmra.mrb[0].mxu0 %v2435
        %v2661 = vpop.f32.mrb[0].mxu0
        %v2662 = vadd.f32 0.0, %v2661
        %v2663 = vpop.f32.mrb[0].mxu0
        %2664 = vmatprep.mubr.f32.mxu0 %v2518
        %2665 = vmatmul.mubr.f32.gmra.mrb[0].mxu0 %v2437
        %v2666 = vpop.f32.mrb[0].mxu0
        %v2667 = vadd.f32 0.0, %v2666
        %v2668 = vpop.f32.mrb[0].mxu0
        %2669 = vmatprep.mubr.f32.mxu0 %v2521
        %2670 = vmatmul.mubr.f32.gmra.mrb[0].mxu0 %v2439
        %v2671 = vpop.f32.mrb[0].mxu0
        %v2672 = vadd.f32 0.0, %v2671
        %v2673 = vpop.f32.mrb[0].mxu0
        %2674 = vmatprep.mubr.f32.mxu0 %v2524
        %2675 = vmatmul.mubr.f32.gmra.mrb[0].mxu0 %v2441
        %v2676 = vpop.f32.mrb[0].mxu0
        %v2677 = vadd.f32 0.0, %v2676
        %v2678 = vpop.f32.mrb[0].mxu0
        %2679 = vmatprep.mubr.f32.mxu0 %v2527
        %2680 = vmatmul.mubr.f32.gmra.mrb[0].mxu0 %v2443
        %v2681 = vpop.f32.mrb[0].mxu0
        %v2682 = vadd.f32 0.0, %v2681
        %v2683 = vpop.f32.mrb[0].mxu0
        %2684 = vmatprep.mubr.f32.mxu0 %v2530
        %2685 = vmatmul.mubr.f32.gmra.mrb[0].mxu0 %v2445
        %v2686 = vpop.f32.mrb[0].mxu0
        %v2687 = vadd.f32 0.0, %v2686
        %v2688 = vpop.f32.mrb[0].mxu0
        %2689 = vmatprep.mubr.f32.mxu0 %v2533
        %2690 = vmatmul.mubr.f32.gmra.mrb[0].mxu0 %v2447
        %v2691 = vpop.f32.mrb[0].mxu0
        %v2692 = vadd.f32 0.0, %v2691
        %v2693 = vpop.f32.mrb[0].mxu0
        %2694 = vdwg.mxu0
        %v2695 = vadd.f32 %v2220, %v2602
        %v2696 = vadd.f32 %v2221, %v2607
        %v2697 = vadd.f32 %v2222, %v2612
        %v2698 = vadd.f32 %v2223, %v2617
        %v2699 = vadd.f32 %v2224, %v2622
        %v2700 = vadd.f32 %v2225, %v2627
        %v2701 = vadd.f32 %v2226, %v2632
        %v2702 = vadd.f32 %v2227, %v2637
        %v2703 = vadd.f32 %v2228, %v2642
        %v2704 = vadd.f32 %v2229, %v2647
        %v2705 = vadd.f32 %v2230, %v2652
        %v2706 = vadd.f32 %v2231, %v2657
        %v2707 = vadd.f32 %v2232, %v2662
        %v2708 = vadd.f32 %v2233, %v2667
        %v2709 = vadd.f32 %v2234, %v2672
        %v2710 = vadd.f32 %v2235, %v2677
        %v2711 = vadd.f32 %v2236, %v2682
        %v2712 = vadd.f32 %v2237, %v2687
        %v2713 = vadd.f32 %v2238, %v2692
        %2714 = vrot.lane.b32.xlu0 %v397, 48
        %v2715 = vpop.permute.xlu0 %2714
        %2716 = vrot.lane.b32.xlu0 %v399, 48
        %v2717 = vpop.permute.xlu0 %2716
        %2718 = vrot.lane.b32.xlu0 %v401, 48
        %v2719 = vpop.permute.xlu0 %2718
        %2720 = vrot.lane.b32.xlu0 %v403, 48
        %v2721 = vpop.permute.xlu0 %2720
        %2722 = vrot.lane.b32.xlu0 %v405, 48
        %v2723 = vpop.permute.xlu0 %2722
        %2724 = vrot.lane.b32.xlu0 %v407, 48
        %v2725 = vpop.permute.xlu0 %2724
        %2726 = vrot.lane.b32.xlu0 %v409, 48
        %v2727 = vpop.permute.xlu0 %2726
        %2728 = vrot.lane.b32.xlu0 %v411, 48
        %v2729 = vpop.permute.xlu0 %2728
        %2730 = vrot.lane.b32.xlu0 %v413, 48
        %v2731 = vpop.permute.xlu0 %2730
        %2732 = vrot.lane.b32.xlu0 %v415, 48
        %v2733 = vpop.permute.xlu0 %2732
        %2734 = vrot.lane.b32.xlu0 %v417, 48
        %v2735 = vpop.permute.xlu0 %2734
        %2736 = vrot.lane.b32.xlu0 %v419, 48
        %v2737 = vpop.permute.xlu0 %2736
        %2738 = vrot.lane.b32.xlu0 %v421, 48
        %v2739 = vpop.permute.xlu0 %2738
        %2740 = vrot.lane.b32.xlu0 %v423, 48
        %v2741 = vpop.permute.xlu0 %2740
        %2742 = vrot.lane.b32.xlu0 %v425, 48
        %v2743 = vpop.permute.xlu0 %2742
        %2744 = vrot.lane.b32.xlu0 %v427, 48
        %v2745 = vpop.permute.xlu0 %2744
        %2746 = vrot.lane.b32.xlu0 %v429, 48
        %v2747 = vpop.permute.xlu0 %2746
        %2748 = vrot.lane.b32.xlu0 %v431, 48
        %v2749 = vpop.permute.xlu0 %2748
        %2750 = vrot.lane.b32.xlu0 %v433, 48
        %v2751 = vpop.permute.xlu0 %2750
        %v2752 = vsel %vm1916, %v1860, %v2715
        %v2753 = vsel %vm1916, %v1862, %v2717
        %v2754 = vsel %vm1916, %v1864, %v2719
        %v2755 = vsel %vm1916, %v1866, %v2721
        %v2756 = vsel %vm1916, %v1868, %v2723
        %v2757 = vsel %vm1916, %v1870, %v2725
        %v2758 = vsel %vm1916, %v1872, %v2727
        %v2759 = vsel %vm1916, %v1874, %v2729
        %v2760 = vsel %vm1916, %v1876, %v2731
        %v2761 = vsel %vm1916, %v1878, %v2733
        %v2762 = vsel %vm1916, %v1880, %v2735
        %v2763 = vsel %vm1916, %v1882, %v2737
        %v2764 = vsel %vm1916, %v1884, %v2739
        %v2765 = vsel %vm1916, %v1886, %v2741
        %v2766 = vsel %vm1916, %v1888, %v2743
        %v2767 = vsel %vm1916, %v1890, %v2745
        %v2768 = vsel %vm1916, %v1892, %v2747
        %v2769 = vsel %vm1916, %v1894, %v2749
        %v2770 = vsel %vm1916, %v1896, %v2751
        %2809 = vrot.lane.b32.xlu0 %v396, 16
        %v2810 = vpop.permute.xlu0 %2809
        %2811 = vrot.lane.b32.xlu0 %v398, 16
        %v2812 = vpop.permute.xlu0 %2811
        %2813 = vrot.lane.b32.xlu0 %v400, 16
        %v2814 = vpop.permute.xlu0 %2813
        %2815 = vrot.lane.b32.xlu0 %v402, 16
        %v2816 = vpop.permute.xlu0 %2815
        %2817 = vrot.lane.b32.xlu0 %v404, 16
        %v2818 = vpop.permute.xlu0 %2817
        %2819 = vrot.lane.b32.xlu0 %v406, 16
        %v2820 = vpop.permute.xlu0 %2819
        %2821 = vrot.lane.b32.xlu0 %v408, 16
        %v2822 = vpop.permute.xlu0 %2821
        %2823 = vrot.lane.b32.xlu0 %v410, 16
        %v2824 = vpop.permute.xlu0 %2823
        %2825 = vrot.lane.b32.xlu0 %v412, 16
        %v2826 = vpop.permute.xlu0 %2825
        %2827 = vrot.lane.b32.xlu0 %v414, 16
        %v2828 = vpop.permute.xlu0 %2827
        %2829 = vrot.lane.b32.xlu0 %v416, 16
        %v2830 = vpop.permute.xlu0 %2829
        %2831 = vrot.lane.b32.xlu0 %v418, 16
        %v2832 = vpop.permute.xlu0 %2831
        %2833 = vrot.lane.b32.xlu0 %v420, 16
        %v2834 = vpop.permute.xlu0 %2833
        %2835 = vrot.lane.b32.xlu0 %v422, 16
        %v2836 = vpop.permute.xlu0 %2835
        %2837 = vrot.lane.b32.xlu0 %v424, 16
        %v2838 = vpop.permute.xlu0 %2837
        %2839 = vrot.lane.b32.xlu0 %v426, 16
        %v2840 = vpop.permute.xlu0 %2839
        %2841 = vrot.lane.b32.xlu0 %v428, 16
        %v2842 = vpop.permute.xlu0 %2841
        %2843 = vrot.lane.b32.xlu0 %v430, 16
        %v2844 = vpop.permute.xlu0 %2843
        %2845 = vrot.lane.b32.xlu0 %v432, 16
        %v2846 = vpop.permute.xlu0 %2845
        %vm2866 = vcmask 130048
        %v2867 = vsel %vm2866, %v2715, %v2810
        %v2868 = vsel %vm2866, %v2717, %v2812
        %v2869 = vsel %vm2866, %v2719, %v2814
        %v2870 = vsel %vm2866, %v2721, %v2816
        %v2871 = vsel %vm2866, %v2723, %v2818
        %v2872 = vsel %vm2866, %v2725, %v2820
        %v2873 = vsel %vm2866, %v2727, %v2822
        %v2874 = vsel %vm2866, %v2729, %v2824
        %v2875 = vsel %vm2866, %v2731, %v2826
        %v2876 = vsel %vm2866, %v2733, %v2828
        %v2877 = vsel %vm2866, %v2735, %v2830
        %v2878 = vsel %vm2866, %v2737, %v2832
        %v2879 = vsel %vm2866, %v2739, %v2834
        %v2880 = vsel %vm2866, %v2741, %v2836
        %v2881 = vsel %vm2866, %v2743, %v2838
        %v2882 = vsel %vm2866, %v2745, %v2840
        %v2883 = vsel %vm2866, %v2747, %v2842
        %v2884 = vsel %vm2866, %v2749, %v2844
        %v2885 = vsel %vm2866, %v2751, %v2846
        %v2886 = vmul.f32 %v396, %v2752
        %v2887 = vmul.f32 %v397, %v2867
        %v2888 = vmul.f32 %v398, %v2753
        %v2889 = vmul.f32 %v399, %v2868
        %v2890 = vmul.f32 %v400, %v2754
        %v2891 = vmul.f32 %v401, %v2869
        %v2892 = vmul.f32 %v402, %v2755
        %v2893 = vmul.f32 %v403, %v2870
        %v2894 = vmul.f32 %v404, %v2756
        %v2895 = vmul.f32 %v405, %v2871
        %v2896 = vmul.f32 %v406, %v2757
        %v2897 = vmul.f32 %v407, %v2872
        %v2898 = vmul.f32 %v408, %v2758
        %v2899 = vmul.f32 %v409, %v2873
        %v2900 = vmul.f32 %v410, %v2759
        %v2901 = vmul.f32 %v411, %v2874
        %v2902 = vmul.f32 %v412, %v2760
        %v2903 = vmul.f32 %v413, %v2875
        %v2904 = vmul.f32 %v414, %v2761
        %v2905 = vmul.f32 %v415, %v2876
        %v2906 = vmul.f32 %v416, %v2762
        %v2907 = vmul.f32 %v417, %v2877
        %v2908 = vmul.f32 %v418, %v2763
        %v2909 = vmul.f32 %v419, %v2878
        %v2910 = vmul.f32 %v420, %v2764
        %v2911 = vmul.f32 %v421, %v2879
        %v2912 = vmul.f32 %v422, %v2765
        %v2913 = vmul.f32 %v423, %v2880
        %v2914 = vmul.f32 %v424, %v2766
        %v2915 = vmul.f32 %v425, %v2881
        %v2916 = vmul.f32 %v426, %v2767
        %v2917 = vmul.f32 %v427, %v2882
        %v2918 = vmul.f32 %v428, %v2768
        %v2919 = vmul.f32 %v429, %v2883
        %v2920 = vmul.f32 %v430, %v2769
        %v2921 = vmul.f32 %v431, %v2884
        %v2922 = vmul.f32 %v432, %v2770
        %v2923 = vmul.f32 %v433, %v2885
        %s2924 = scalar_lea.vmem [#allocation5], 1120
        %v2925 = vld [vmem:[%s2924] sm:$0xff]
        %v2926 = vld [vmem:[%s2924 + $0x8] sm:$0xff]
        %v2927 = vld [vmem:[%s2924 + $0x10] sm:$0xff]
        %v2928 = vld [vmem:[%s2924 + $0x18] sm:$0xff]
        %v2929 = vld [vmem:[%s2924 + $0x20] sm:$0xff]
        %v2930 = vld [vmem:[%s2924 + $0x28] sm:$0xff]
        %v2931 = vld [vmem:[%s2924 + $0x30] sm:$0xff]
        %v2932 = vld [vmem:[%s2924 + $0x38] sm:$0xff]
        %v2933 = vld [vmem:[%s2924 + $0x40] sm:$0xff]
        %v2934 = vld [vmem:[%s2924 + $0x48] sm:$0xff]
        %v2935 = vld [vmem:[%s2924 + $0x50] sm:$0xff]
        %v2936 = vld [vmem:[%s2924 + $0x58] sm:$0xff]
        %v2937 = vld [vmem:[%s2924 + $0x60] sm:$0xff]
        %v2938 = vld [vmem:[%s2924 + $0x68] sm:$0xff]
        %v2939 = vld [vmem:[%s2924 + $0x70] sm:$0xff]
        %v2940 = vld [vmem:[%s2924 + $0x78] sm:$0xff]
        %v2941 = vld [vmem:[%s2924 + $0x80] sm:$0xff]
        %v2942 = vld [vmem:[%s2924 + $0x88] sm:$0xff]
        %v2943 = vld [vmem:[%s2924 + $0x90] sm:$0xff]
        %v2944 = vld [vmem:[%s2924 + $0x98] sm:$0xff]
        %v2945 = vld [vmem:[%s2924 + $0xa0] sm:$0xff]
        %v2946 = vld [vmem:[%s2924 + $0xa8] sm:$0xff]
        %v2947 = vld [vmem:[%s2924 + $0xb0] sm:$0xff]
        %v2948 = vld [vmem:[%s2924 + $0xb8] sm:$0xff]
        %v2949 = vld [vmem:[%s2924 + $0xc0] sm:$0xff]
        %v2950 = vld [vmem:[%s2924 + $0xc8] sm:$0xff]
        %v2951 = vld [vmem:[%s2924 + $0xd0] sm:$0xff]
        %v2952 = vld [vmem:[%s2924 + $0xd8] sm:$0xff]
        %v2954 = vsel %vm816, %v2887, 0
        %v2957 = vsel %vm816, %v2889, 0
        %v2960 = vsel %vm816, %v2891, 0
        %v2963 = vsel %vm816, %v2893, 0
        %v2966 = vsel %vm816, %v2895, 0
        %v2969 = vsel %vm816, %v2897, 0
        %v2972 = vsel %vm816, %v2899, 0
        %v2975 = vsel %vm816, %v2901, 0
        %v2978 = vsel %vm816, %v2903, 0
        %v2981 = vsel %vm816, %v2905, 0
        %v2984 = vsel %vm816, %v2907, 0
        %v2987 = vsel %vm816, %v2909, 0
        %v2990 = vsel %vm816, %v2911, 0
        %v2993 = vsel %vm816, %v2913, 0
        %v2996 = vsel %vm816, %v2915, 0
        %v2999 = vsel %vm816, %v2917, 0
        %v3002 = vsel %vm816, %v2919, 0
        %v3005 = vsel %vm816, %v2921, 0
        %v3008 = vsel %vm816, %v2923, 0
        %3010 = vmatprep.subr.mxu0 0.0
        %3011 = vmatpush1.msra.mxu0 %v2925
        %3012 = vmatprep.subr.mxu0 0.0
        %3013 = vmatpush1.msra.mxu0 %v2926
        %3014 = vmatprep.subr.mxu0 0.0
        %3015 = vmatpush1.msra.mxu0 %v2927
        %3016 = vmatprep.subr.mxu0 0.0
        %3017 = vmatpush1.msra.mxu0 %v2928
        %3018 = vmatprep.subr.mxu0 0.0
        %3019 = vmatpush1.msra.mxu0 %v2929
        %3020 = vmatprep.subr.mxu0 0.0
        %3021 = vmatpush1.msra.mxu0 %v2930
        %3022 = vmatprep.subr.mxu0 0.0
        %3023 = vmatpush1.msra.mxu0 %v2931
        %3024 = vmatprep.subr.mxu0 0.0
        %3025 = vmatpush1.msra.mxu0 %v2932
        %3026 = vmatprep.subr.mxu0 0.0
        %3027 = vmatpush1.msra.mxu0 %v2933
        %3028 = vmatprep.subr.mxu0 0.0
        %3029 = vmatpush1.msra.mxu0 %v2934
        %3030 = vmatprep.subr.mxu0 0.0
        %3031 = vmatpush1.msra.mxu0 %v2935
        %3032 = vmatprep.subr.mxu0 0.0
        %3033 = vmatpush1.msra.mxu0 %v2936
        %3034 = vmatprep.subr.mxu0 0.0
        %3035 = vmatpush1.msra.mxu0 %v2937
        %3036 = vmatprep.subr.mxu0 0.0
        %3037 = vmatpush1.msra.mxu0 %v2938
        %3038 = vmatprep.subr.mxu0 0.0
        %3039 = vmatpush1.msra.mxu0 %v2939
        %3040 = vmatprep.subr.mxu0 0.0
        %3041 = vmatpush1.msra.mxu0 %v2940
        %3042 = vmatprep.subr.mxu0 0.0
        %3043 = vmatpush1.msra.mxu0 %v2941
        %3044 = vmatprep.subr.mxu0 0.0
        %3045 = vmatpush1.msra.mxu0 %v2942
        %3046 = vmatprep.subr.mxu0 0.0
        %3047 = vmatpush1.msra.mxu0 %v2943
        %3048 = vmatprep.subr.mxu0 0.0
        %3049 = vmatpush1.msra.mxu0 %v2944
        %3050 = vmatprep.subr.mxu0 0.0
        %3051 = vmatpush1.msra.mxu0 %v2945
        %3052 = vmatprep.subr.mxu0 0.0
        %3053 = vmatpush1.msra.mxu0 %v2946
        %3054 = vmatprep.subr.mxu0 0.0
        %3055 = vmatpush1.msra.mxu0 %v2947
        %3056 = vmatprep.subr.mxu0 0.0
        %3057 = vmatpush1.msra.mxu0 %v2948
        %3058 = vmatprep.subr.mxu0 0.0
        %3059 = vmatpush1.msra.mxu0 %v2949
        %3060 = vmatprep.subr.mxu0 0.0
        %3061 = vmatpush1.msra.mxu0 %v2950
        %3062 = vmatprep.subr.mxu0 0.0
        %3063 = vmatpush1.msra.mxu0 %v2951
        %3064 = vmatprep.subr.mxu0 0.0
        %3065 = vmatpush1.msra.mxu0 %v2952
        %3066 = vmatprep.subr.mxu0 0.0
        %3067 = vmatpush1.msra.mxu0 0.0
        %3068 = vmatprep.subr.mxu0 0.0
        %3069 = vmatpush1.msra.mxu0 0.0
        %3070 = vmatprep.subr.mxu0 0.0
        %3071 = vmatpush1.msra.mxu0 0.0
        %3072 = vmatprep.subr.mxu0 0.0
        %3073 = vmatpush1.msra.mxu0 0.0
        %3074 = vmatprep.mubr.f32.mxu0 %v2954
        %3075 = vmatmul.mubr.f32.gmra.mrb[0].mxu0 %v2886
        %v3076 = vpop.f32.mrb[0].mxu0
        %v3077 = vadd.f32 0.0, %v3076
        %v3078 = vpop.f32.mrb[0].mxu0
        %3079 = vmatprep.mubr.f32.mxu0 %v2957
        %3080 = vmatmul.mubr.f32.gmra.mrb[0].mxu0 %v2888
        %v3081 = vpop.f32.mrb[0].mxu0
        %v3082 = vadd.f32 0.0, %v3081
        %v3083 = vpop.f32.mrb[0].mxu0
        %3084 = vmatprep.mubr.f32.mxu0 %v2960
        %3085 = vmatmul.mubr.f32.gmra.mrb[0].mxu0 %v2890
        %v3086 = vpop.f32.mrb[0].mxu0
        %v3087 = vadd.f32 0.0, %v3086
        %v3088 = vpop.f32.mrb[0].mxu0
        %3089 = vmatprep.mubr.f32.mxu0 %v2963
        %3090 = vmatmul.mubr.f32.gmra.mrb[0].mxu0 %v2892
        %v3091 = vpop.f32.mrb[0].mxu0
        %v3092 = vadd.f32 0.0, %v3091
        %v3093 = vpop.f32.mrb[0].mxu0
        %3094 = vmatprep.mubr.f32.mxu0 %v2966
        %3095 = vmatmul.mubr.f32.gmra.mrb[0].mxu0 %v2894
        %v3096 = vpop.f32.mrb[0].mxu0
        %v3097 = vadd.f32 0.0, %v3096
        %v3098 = vpop.f32.mrb[0].mxu0
        %3099 = vmatprep.mubr.f32.mxu0 %v2969
        %3100 = vmatmul.mubr.f32.gmra.mrb[0].mxu0 %v2896
        %v3101 = vpop.f32.mrb[0].mxu0
        %v3102 = vadd.f32 0.0, %v3101
        %v3103 = vpop.f32.mrb[0].mxu0
        %3104 = vmatprep.mubr.f32.mxu0 %v2972
        %3105 = vmatmul.mubr.f32.gmra.mrb[0].mxu0 %v2898
        %v3106 = vpop.f32.mrb[0].mxu0
        %v3107 = vadd.f32 0.0, %v3106
        %v3108 = vpop.f32.mrb[0].mxu0
        %3109 = vmatprep.mubr.f32.mxu0 %v2975
        %3110 = vmatmul.mubr.f32.gmra.mrb[0].mxu0 %v2900
        %v3111 = vpop.f32.mrb[0].mxu0
        %v3112 = vadd.f32 0.0, %v3111
        %v3113 = vpop.f32.mrb[0].mxu0
        %3114 = vmatprep.mubr.f32.mxu0 %v2978
        %3115 = vmatmul.mubr.f32.gmra.mrb[0].mxu0 %v2902
        %v3116 = vpop.f32.mrb[0].mxu0
        %v3117 = vadd.f32 0.0, %v3116
        %v3118 = vpop.f32.mrb[0].mxu0
        %3119 = vmatprep.mubr.f32.mxu0 %v2981
        %3120 = vmatmul.mubr.f32.gmra.mrb[0].mxu0 %v2904
        %v3121 = vpop.f32.mrb[0].mxu0
        %v3122 = vadd.f32 0.0, %v3121
        %v3123 = vpop.f32.mrb[0].mxu0
        %3124 = vmatprep.mubr.f32.mxu0 %v2984
        %3125 = vmatmul.mubr.f32.gmra.mrb[0].mxu0 %v2906
        %v3126 = vpop.f32.mrb[0].mxu0
        %v3127 = vadd.f32 0.0, %v3126
        %v3128 = vpop.f32.mrb[0].mxu0
        %3129 = vmatprep.mubr.f32.mxu0 %v2987
        %3130 = vmatmul.mubr.f32.gmra.mrb[0].mxu0 %v2908
        %v3131 = vpop.f32.mrb[0].mxu0
        %v3132 = vadd.f32 0.0, %v3131
        %v3133 = vpop.f32.mrb[0].mxu0
        %3134 = vmatprep.mubr.f32.mxu0 %v2990
        %3135 = vmatmul.mubr.f32.gmra.mrb[0].mxu0 %v2910
        %v3136 = vpop.f32.mrb[0].mxu0
        %v3137 = vadd.f32 0.0, %v3136
        %v3138 = vpop.f32.mrb[0].mxu0
        %3139 = vmatprep.mubr.f32.mxu0 %v2993
        %3140 = vmatmul.mubr.f32.gmra.mrb[0].mxu0 %v2912
        %v3141 = vpop.f32.mrb[0].mxu0
        %v3142 = vadd.f32 0.0, %v3141
        %v3143 = vpop.f32.mrb[0].mxu0
        %3144 = vmatprep.mubr.f32.mxu0 %v2996
        %3145 = vmatmul.mubr.f32.gmra.mrb[0].mxu0 %v2914
        %v3146 = vpop.f32.mrb[0].mxu0
        %v3147 = vadd.f32 0.0, %v3146
        %v3148 = vpop.f32.mrb[0].mxu0
        %3149 = vmatprep.mubr.f32.mxu0 %v2999
        %3150 = vmatmul.mubr.f32.gmra.mrb[0].mxu0 %v2916
        %v3151 = vpop.f32.mrb[0].mxu0
        %v3152 = vadd.f32 0.0, %v3151
        %v3153 = vpop.f32.mrb[0].mxu0
        %3154 = vmatprep.mubr.f32.mxu0 %v3002
        %3155 = vmatmul.mubr.f32.gmra.mrb[0].mxu0 %v2918
        %v3156 = vpop.f32.mrb[0].mxu0
        %v3157 = vadd.f32 0.0, %v3156
        %v3158 = vpop.f32.mrb[0].mxu0
        %3159 = vmatprep.mubr.f32.mxu0 %v3005
        %3160 = vmatmul.mubr.f32.gmra.mrb[0].mxu0 %v2920
        %v3161 = vpop.f32.mrb[0].mxu0
        %v3162 = vadd.f32 0.0, %v3161
        %v3163 = vpop.f32.mrb[0].mxu0
        %3164 = vmatprep.mubr.f32.mxu0 %v3008
        %3165 = vmatmul.mubr.f32.gmra.mrb[0].mxu0 %v2922
        %v3166 = vpop.f32.mrb[0].mxu0
        %v3167 = vadd.f32 0.0, %v3166
        %v3168 = vpop.f32.mrb[0].mxu0
        %3169 = vdwg.mxu0
        %v3170 = vadd.f32 %v2695, %v3077
        %v3171 = vadd.f32 %v2696, %v3082
        %v3172 = vadd.f32 %v2697, %v3087
        %v3173 = vadd.f32 %v2698, %v3092
        %v3174 = vadd.f32 %v2699, %v3097
        %v3175 = vadd.f32 %v2700, %v3102
        %v3176 = vadd.f32 %v2701, %v3107
        %v3177 = vadd.f32 %v2702, %v3112
        %v3178 = vadd.f32 %v2703, %v3117
        %v3179 = vadd.f32 %v2704, %v3122
        %v3180 = vadd.f32 %v2705, %v3127
        %v3181 = vadd.f32 %v2706, %v3132
        %v3182 = vadd.f32 %v2707, %v3137
        %v3183 = vadd.f32 %v2708, %v3142
        %v3184 = vadd.f32 %v2709, %v3147
        %v3185 = vadd.f32 %v2710, %v3152
        %v3186 = vadd.f32 %v2711, %v3157
        %v3187 = vadd.f32 %v2712, %v3162
        %v3188 = vadd.f32 %v2713, %v3167
        %3189 = vrot.lane.b32.xlu0 %v397, 32
        %v3190 = vpop.permute.xlu0 %3189
        %3191 = vrot.lane.b32.xlu0 %v399, 32
        %v3192 = vpop.permute.xlu0 %3191
        %3193 = vrot.lane.b32.xlu0 %v401, 32
        %v3194 = vpop.permute.xlu0 %3193
        %3195 = vrot.lane.b32.xlu0 %v403, 32
        %v3196 = vpop.permute.xlu0 %3195
        %3197 = vrot.lane.b32.xlu0 %v405, 32
        %v3198 = vpop.permute.xlu0 %3197
        %3199 = vrot.lane.b32.xlu0 %v407, 32
        %v3200 = vpop.permute.xlu0 %3199
        %3201 = vrot.lane.b32.xlu0 %v409, 32
        %v3202 = vpop.permute.xlu0 %3201
        %3203 = vrot.lane.b32.xlu0 %v411, 32
        %v3204 = vpop.permute.xlu0 %3203
        %3205 = vrot.lane.b32.xlu0 %v413, 32
        %v3206 = vpop.permute.xlu0 %3205
        %3207 = vrot.lane.b32.xlu0 %v415, 32
        %v3208 = vpop.permute.xlu0 %3207
        %3209 = vrot.lane.b32.xlu0 %v417, 32
        %v3210 = vpop.permute.xlu0 %3209
        %3211 = vrot.lane.b32.xlu0 %v419, 32
        %v3212 = vpop.permute.xlu0 %3211
        %3213 = vrot.lane.b32.xlu0 %v421, 32
        %v3214 = vpop.permute.xlu0 %3213
        %3215 = vrot.lane.b32.xlu0 %v423, 32
        %v3216 = vpop.permute.xlu0 %3215
        %3217 = vrot.lane.b32.xlu0 %v425, 32
        %v3218 = vpop.permute.xlu0 %3217
        %3219 = vrot.lane.b32.xlu0 %v427, 32
        %v3220 = vpop.permute.xlu0 %3219
        %3221 = vrot.lane.b32.xlu0 %v429, 32
        %v3222 = vpop.permute.xlu0 %3221
        %3223 = vrot.lane.b32.xlu0 %v431, 32
        %v3224 = vpop.permute.xlu0 %3223
        %3225 = vrot.lane.b32.xlu0 %v433, 32
        %v3226 = vpop.permute.xlu0 %3225
        %v3227 = vsel %vm2391, %v2335, %v3190
        %v3228 = vsel %vm2391, %v2337, %v3192
        %v3229 = vsel %vm2391, %v2339, %v3194
        %v3230 = vsel %vm2391, %v2341, %v3196
        %v3231 = vsel %vm2391, %v2343, %v3198
        %v3232 = vsel %vm2391, %v2345, %v3200
        %v3233 = vsel %vm2391, %v2347, %v3202
        %v3234 = vsel %vm2391, %v2349, %v3204
        %v3235 = vsel %vm2391, %v2351, %v3206
        %v3236 = vsel %vm2391, %v2353, %v3208
        %v3237 = vsel %vm2391, %v2355, %v3210
        %v3238 = vsel %vm2391, %v2357, %v3212
        %v3239 = vsel %vm2391, %v2359, %v3214
        %v3240 = vsel %vm2391, %v2361, %v3216
        %v3241 = vsel %vm2391, %v2363, %v3218
        %v3242 = vsel %vm2391, %v2365, %v3220
        %v3243 = vsel %vm2391, %v2367, %v3222
        %v3244 = vsel %vm2391, %v2369, %v3224
        %v3245 = vsel %vm2391, %v2371, %v3226
        %v3265 = vmul.f32 %v396, %v3227
        %v3266 = vmul.f32 %v397, %v396
        %v3267 = vmul.f32 %v398, %v3228
        %v3268 = vmul.f32 %v399, %v398
        %v3269 = vmul.f32 %v400, %v3229
        %v3270 = vmul.f32 %v401, %v400
        %v3271 = vmul.f32 %v402, %v3230
        %v3272 = vmul.f32 %v403, %v402
        %v3273 = vmul.f32 %v404, %v3231
        %v3274 = vmul.f32 %v405, %v404
        %v3275 = vmul.f32 %v406, %v3232
        %v3276 = vmul.f32 %v407, %v406
        %v3277 = vmul.f32 %v408, %v3233
        %v3278 = vmul.f32 %v409, %v408
        %v3279 = vmul.f32 %v410, %v3234
        %v3280 = vmul.f32 %v411, %v410
        %v3281 = vmul.f32 %v412, %v3235
        %v3282 = vmul.f32 %v413, %v412
        %v3283 = vmul.f32 %v414, %v3236
        %v3284 = vmul.f32 %v415, %v414
        %v3285 = vmul.f32 %v416, %v3237
        %v3286 = vmul.f32 %v417, %v416
        %v3287 = vmul.f32 %v418, %v3238
        %v3288 = vmul.f32 %v419, %v418
        %v3289 = vmul.f32 %v420, %v3239
        %v3290 = vmul.f32 %v421, %v420
        %v3291 = vmul.f32 %v422, %v3240
        %v3292 = vmul.f32 %v423, %v422
        %v3293 = vmul.f32 %v424, %v3241
        %v3294 = vmul.f32 %v425, %v424
        %v3295 = vmul.f32 %v426, %v3242
        %v3296 = vmul.f32 %v427, %v426
        %v3297 = vmul.f32 %v428, %v3243
        %v3298 = vmul.f32 %v429, %v428
        %v3299 = vmul.f32 %v430, %v3244
        %v3300 = vmul.f32 %v431, %v430
        %v3301 = vmul.f32 %v432, %v3245
        %v3302 = vmul.f32 %v433, %v432
        %s3303 = scalar_lea.vmem [#allocation5], 1344
        %v3304 = vld [vmem:[%s3303] sm:$0xff]
        %v3305 = vld [vmem:[%s3303 + $0x8] sm:$0xff]
        %v3306 = vld [vmem:[%s3303 + $0x10] sm:$0xff]
        %v3307 = vld [vmem:[%s3303 + $0x18] sm:$0xff]
        %v3308 = vld [vmem:[%s3303 + $0x20] sm:$0xff]
        %v3309 = vld [vmem:[%s3303 + $0x28] sm:$0xff]
        %v3310 = vld [vmem:[%s3303 + $0x30] sm:$0xff]
        %v3311 = vld [vmem:[%s3303 + $0x38] sm:$0xff]
        %v3312 = vld [vmem:[%s3303 + $0x40] sm:$0xff]
        %v3313 = vld [vmem:[%s3303 + $0x48] sm:$0xff]
        %v3314 = vld [vmem:[%s3303 + $0x50] sm:$0xff]
        %v3315 = vld [vmem:[%s3303 + $0x58] sm:$0xff]
        %v3316 = vld [vmem:[%s3303 + $0x60] sm:$0xff]
        %v3317 = vld [vmem:[%s3303 + $0x68] sm:$0xff]
        %v3318 = vld [vmem:[%s3303 + $0x70] sm:$0xff]
        %v3319 = vld [vmem:[%s3303 + $0x78] sm:$0xff]
        %v3320 = vld [vmem:[%s3303 + $0x80] sm:$0xff]
        %v3321 = vld [vmem:[%s3303 + $0x88] sm:$0xff]
        %v3322 = vld [vmem:[%s3303 + $0x90] sm:$0xff]
        %v3323 = vld [vmem:[%s3303 + $0x98] sm:$0xff]
        %v3324 = vld [vmem:[%s3303 + $0xa0] sm:$0xff]
        %v3325 = vld [vmem:[%s3303 + $0xa8] sm:$0xff]
        %v3326 = vld [vmem:[%s3303 + $0xb0] sm:$0xff]
        %v3327 = vld [vmem:[%s3303 + $0xb8] sm:$0xff]
        %v3328 = vld [vmem:[%s3303 + $0xc0] sm:$0xff]
        %v3329 = vld [vmem:[%s3303 + $0xc8] sm:$0xff]
        %v3330 = vld [vmem:[%s3303 + $0xd0] sm:$0xff]
        %v3331 = vld [vmem:[%s3303 + $0xd8] sm:$0xff]
        %v3333 = vsel %vm816, %v3266, 0
        %v3336 = vsel %vm816, %v3268, 0
        %v3339 = vsel %vm816, %v3270, 0
        %v3342 = vsel %vm816, %v3272, 0
        %v3345 = vsel %vm816, %v3274, 0
        %v3348 = vsel %vm816, %v3276, 0
        %v3351 = vsel %vm816, %v3278, 0
        %v3354 = vsel %vm816, %v3280, 0
        %v3357 = vsel %vm816, %v3282, 0
        %v3360 = vsel %vm816, %v3284, 0
        %v3363 = vsel %vm816, %v3286, 0
        %v3366 = vsel %vm816, %v3288, 0
        %v3369 = vsel %vm816, %v3290, 0
        %v3372 = vsel %vm816, %v3292, 0
        %v3375 = vsel %vm816, %v3294, 0
        %v3378 = vsel %vm816, %v3296, 0
        %v3381 = vsel %vm816, %v3298, 0
        %v3384 = vsel %vm816, %v3300, 0
        %v3387 = vsel %vm816, %v3302, 0
        %3389 = vmatprep.subr.mxu0 0.0
        %3390 = vmatpush1.msra.mxu0 %v3304
        %3391 = vmatprep.subr.mxu0 0.0
        %3392 = vmatpush1.msra.mxu0 %v3305
        %3393 = vmatprep.subr.mxu0 0.0
        %3394 = vmatpush1.msra.mxu0 %v3306
        %3395 = vmatprep.subr.mxu0 0.0
        %3396 = vmatpush1.msra.mxu0 %v3307
        %3397 = vmatprep.subr.mxu0 0.0
        %3398 = vmatpush1.msra.mxu0 %v3308
        %3399 = vmatprep.subr.mxu0 0.0
        %3400 = vmatpush1.msra.mxu0 %v3309
        %3401 = vmatprep.subr.mxu0 0.0
        %3402 = vmatpush1.msra.mxu0 %v3310
        %3403 = vmatprep.subr.mxu0 0.0
        %3404 = vmatpush1.msra.mxu0 %v3311
        %3405 = vmatprep.subr.mxu0 0.0
        %3406 = vmatpush1.msra.mxu0 %v3312
        %3407 = vmatprep.subr.mxu0 0.0
        %3408 = vmatpush1.msra.mxu0 %v3313
        %3409 = vmatprep.subr.mxu0 0.0
        %3410 = vmatpush1.msra.mxu0 %v3314
        %3411 = vmatprep.subr.mxu0 0.0
        %3412 = vmatpush1.msra.mxu0 %v3315
        %3413 = vmatprep.subr.mxu0 0.0
        %3414 = vmatpush1.msra.mxu0 %v3316
        %3415 = vmatprep.subr.mxu0 0.0
        %3416 = vmatpush1.msra.mxu0 %v3317
        %3417 = vmatprep.subr.mxu0 0.0
        %3418 = vmatpush1.msra.mxu0 %v3318
        %3419 = vmatprep.subr.mxu0 0.0
        %3420 = vmatpush1.msra.mxu0 %v3319
        %3421 = vmatprep.subr.mxu0 0.0
        %3422 = vmatpush1.msra.mxu0 %v3320
        %3423 = vmatprep.subr.mxu0 0.0
        %3424 = vmatpush1.msra.mxu0 %v3321
        %3425 = vmatprep.subr.mxu0 0.0
        %3426 = vmatpush1.msra.mxu0 %v3322
        %3427 = vmatprep.subr.mxu0 0.0
        %3428 = vmatpush1.msra.mxu0 %v3323
        %3429 = vmatprep.subr.mxu0 0.0
        %3430 = vmatpush1.msra.mxu0 %v3324
        %3431 = vmatprep.subr.mxu0 0.0
        %3432 = vmatpush1.msra.mxu0 %v3325
        %3433 = vmatprep.subr.mxu0 0.0
        %3434 = vmatpush1.msra.mxu0 %v3326
        %3435 = vmatprep.subr.mxu0 0.0
        %3436 = vmatpush1.msra.mxu0 %v3327
        %3437 = vmatprep.subr.mxu0 0.0
        %3438 = vmatpush1.msra.mxu0 %v3328
        %3439 = vmatprep.subr.mxu0 0.0
        %3440 = vmatpush1.msra.mxu0 %v3329
        %3441 = vmatprep.subr.mxu0 0.0
        %3442 = vmatpush1.msra.mxu0 %v3330
        %3443 = vmatprep.subr.mxu0 0.0
        %3444 = vmatpush1.msra.mxu0 %v3331
        %3445 = vmatprep.subr.mxu0 0.0
        %3446 = vmatpush1.msra.mxu0 0.0
        %3447 = vmatprep.subr.mxu0 0.0
        %3448 = vmatpush1.msra.mxu0 0.0
        %3449 = vmatprep.subr.mxu0 0.0
        %3450 = vmatpush1.msra.mxu0 0.0
        %3451 = vmatprep.subr.mxu0 0.0
        %3452 = vmatpush1.msra.mxu0 0.0
        %3453 = vmatprep.mubr.f32.mxu0 %v3333
        %3454 = vmatmul.mubr.f32.gmra.mrb[0].mxu0 %v3265
        %v3455 = vpop.f32.mrb[0].mxu0
        %v3456 = vadd.f32 0.0, %v3455
        %v3457 = vpop.f32.mrb[0].mxu0
        %3458 = vmatprep.mubr.f32.mxu0 %v3336
        %3459 = vmatmul.mubr.f32.gmra.mrb[0].mxu0 %v3267
        %v3460 = vpop.f32.mrb[0].mxu0
        %v3461 = vadd.f32 0.0, %v3460
        %v3462 = vpop.f32.mrb[0].mxu0
        %3463 = vmatprep.mubr.f32.mxu0 %v3339
        %3464 = vmatmul.mubr.f32.gmra.mrb[0].mxu0 %v3269
        %v3465 = vpop.f32.mrb[0].mxu0
        %v3466 = vadd.f32 0.0, %v3465
        %v3467 = vpop.f32.mrb[0].mxu0
        %3468 = vmatprep.mubr.f32.mxu0 %v3342
        %3469 = vmatmul.mubr.f32.gmra.mrb[0].mxu0 %v3271
        %v3470 = vpop.f32.mrb[0].mxu0
        %v3471 = vadd.f32 0.0, %v3470
        %v3472 = vpop.f32.mrb[0].mxu0
        %3473 = vmatprep.mubr.f32.mxu0 %v3345
        %3474 = vmatmul.mubr.f32.gmra.mrb[0].mxu0 %v3273
        %v3475 = vpop.f32.mrb[0].mxu0
        %v3476 = vadd.f32 0.0, %v3475
        %v3477 = vpop.f32.mrb[0].mxu0
        %3478 = vmatprep.mubr.f32.mxu0 %v3348
        %3479 = vmatmul.mubr.f32.gmra.mrb[0].mxu0 %v3275
        %v3480 = vpop.f32.mrb[0].mxu0
        %v3481 = vadd.f32 0.0, %v3480
        %v3482 = vpop.f32.mrb[0].mxu0
        %3483 = vmatprep.mubr.f32.mxu0 %v3351
        %3484 = vmatmul.mubr.f32.gmra.mrb[0].mxu0 %v3277
        %v3485 = vpop.f32.mrb[0].mxu0
        %v3486 = vadd.f32 0.0, %v3485
        %v3487 = vpop.f32.mrb[0].mxu0
        %3488 = vmatprep.mubr.f32.mxu0 %v3354
        %3489 = vmatmul.mubr.f32.gmra.mrb[0].mxu0 %v3279
        %v3490 = vpop.f32.mrb[0].mxu0
        %v3491 = vadd.f32 0.0, %v3490
        %v3492 = vpop.f32.mrb[0].mxu0
        %3493 = vmatprep.mubr.f32.mxu0 %v3357
        %3494 = vmatmul.mubr.f32.gmra.mrb[0].mxu0 %v3281
        %v3495 = vpop.f32.mrb[0].mxu0
        %v3496 = vadd.f32 0.0, %v3495
        %v3497 = vpop.f32.mrb[0].mxu0
        %3498 = vmatprep.mubr.f32.mxu0 %v3360
        %3499 = vmatmul.mubr.f32.gmra.mrb[0].mxu0 %v3283
        %v3500 = vpop.f32.mrb[0].mxu0
        %v3501 = vadd.f32 0.0, %v3500
        %v3502 = vpop.f32.mrb[0].mxu0
        %3503 = vmatprep.mubr.f32.mxu0 %v3363
        %3504 = vmatmul.mubr.f32.gmra.mrb[0].mxu0 %v3285
        %v3505 = vpop.f32.mrb[0].mxu0
        %v3506 = vadd.f32 0.0, %v3505
        %v3507 = vpop.f32.mrb[0].mxu0
        %3508 = vmatprep.mubr.f32.mxu0 %v3366
        %3509 = vmatmul.mubr.f32.gmra.mrb[0].mxu0 %v3287
        %v3510 = vpop.f32.mrb[0].mxu0
        %v3511 = vadd.f32 0.0, %v3510
        %v3512 = vpop.f32.mrb[0].mxu0
        %3513 = vmatprep.mubr.f32.mxu0 %v3369
        %3514 = vmatmul.mubr.f32.gmra.mrb[0].mxu0 %v3289
        %v3515 = vpop.f32.mrb[0].mxu0
        %v3516 = vadd.f32 0.0, %v3515
        %v3517 = vpop.f32.mrb[0].mxu0
        %3518 = vmatprep.mubr.f32.mxu0 %v3372
        %3519 = vmatmul.mubr.f32.gmra.mrb[0].mxu0 %v3291
        %v3520 = vpop.f32.mrb[0].mxu0
        %v3521 = vadd.f32 0.0, %v3520
        %v3522 = vpop.f32.mrb[0].mxu0
        %3523 = vmatprep.mubr.f32.mxu0 %v3375
        %3524 = vmatmul.mubr.f32.gmra.mrb[0].mxu0 %v3293
        %v3525 = vpop.f32.mrb[0].mxu0
        %v3526 = vadd.f32 0.0, %v3525
        %v3527 = vpop.f32.mrb[0].mxu0
        %3528 = vmatprep.mubr.f32.mxu0 %v3378
        %3529 = vmatmul.mubr.f32.gmra.mrb[0].mxu0 %v3295
        %v3530 = vpop.f32.mrb[0].mxu0
        %v3531 = vadd.f32 0.0, %v3530
        %v3532 = vpop.f32.mrb[0].mxu0
        %3533 = vmatprep.mubr.f32.mxu0 %v3381
        %3534 = vmatmul.mubr.f32.gmra.mrb[0].mxu0 %v3297
        %v3535 = vpop.f32.mrb[0].mxu0
        %v3536 = vadd.f32 0.0, %v3535
        %v3537 = vpop.f32.mrb[0].mxu0
        %3538 = vmatprep.mubr.f32.mxu0 %v3384
        %3539 = vmatmul.mubr.f32.gmra.mrb[0].mxu0 %v3299
        %v3540 = vpop.f32.mrb[0].mxu0
        %v3541 = vadd.f32 0.0, %v3540
        %v3542 = vpop.f32.mrb[0].mxu0
        %3543 = vmatprep.mubr.f32.mxu0 %v3387
        %3544 = vmatmul.mubr.f32.gmra.mrb[0].mxu0 %v3301
        %v3545 = vpop.f32.mrb[0].mxu0
        %v3546 = vadd.f32 0.0, %v3545
        %v3547 = vpop.f32.mrb[0].mxu0
        %3548 = vdwg.mxu0
        %v3549 = vadd.f32 %v3170, %v3456
        %v3550 = vadd.f32 %v3171, %v3461
        %v3551 = vadd.f32 %v3172, %v3466
        %v3552 = vadd.f32 %v3173, %v3471
        %v3553 = vadd.f32 %v3174, %v3476
        %v3554 = vadd.f32 %v3175, %v3481
        %v3555 = vadd.f32 %v3176, %v3486
        %v3556 = vadd.f32 %v3177, %v3491
        %v3557 = vadd.f32 %v3178, %v3496
        %v3558 = vadd.f32 %v3179, %v3501
        %v3559 = vadd.f32 %v3180, %v3506
        %v3560 = vadd.f32 %v3181, %v3511
        %v3561 = vadd.f32 %v3182, %v3516
        %v3562 = vadd.f32 %v3183, %v3521
        %v3563 = vadd.f32 %v3184, %v3526
        %v3564 = vadd.f32 %v3185, %v3531
        %v3565 = vadd.f32 %v3186, %v3536
        %v3566 = vadd.f32 %v3187, %v3541
        %v3567 = vadd.f32 %v3188, %v3546
        %3568 = vrot.lane.b32.xlu0 %v397, 16
        %v3569 = vpop.permute.xlu0 %3568
        %3570 = vrot.lane.b32.xlu0 %v399, 16
        %v3571 = vpop.permute.xlu0 %3570
        %3572 = vrot.lane.b32.xlu0 %v401, 16
        %v3573 = vpop.permute.xlu0 %3572
        %3574 = vrot.lane.b32.xlu0 %v403, 16
        %v3575 = vpop.permute.xlu0 %3574
        %3576 = vrot.lane.b32.xlu0 %v405, 16
        %v3577 = vpop.permute.xlu0 %3576
        %3578 = vrot.lane.b32.xlu0 %v407, 16
        %v3579 = vpop.permute.xlu0 %3578
        %3580 = vrot.lane.b32.xlu0 %v409, 16
        %v3581 = vpop.permute.xlu0 %3580
        %3582 = vrot.lane.b32.xlu0 %v411, 16
        %v3583 = vpop.permute.xlu0 %3582
        %3584 = vrot.lane.b32.xlu0 %v413, 16
        %v3585 = vpop.permute.xlu0 %3584
        %3586 = vrot.lane.b32.xlu0 %v415, 16
        %v3587 = vpop.permute.xlu0 %3586
        %3588 = vrot.lane.b32.xlu0 %v417, 16
        %v3589 = vpop.permute.xlu0 %3588
        %3590 = vrot.lane.b32.xlu0 %v419, 16
        %v3591 = vpop.permute.xlu0 %3590
        %3592 = vrot.lane.b32.xlu0 %v421, 16
        %v3593 = vpop.permute.xlu0 %3592
        %3594 = vrot.lane.b32.xlu0 %v423, 16
        %v3595 = vpop.permute.xlu0 %3594
        %3596 = vrot.lane.b32.xlu0 %v425, 16
        %v3597 = vpop.permute.xlu0 %3596
        %3598 = vrot.lane.b32.xlu0 %v427, 16
        %v3599 = vpop.permute.xlu0 %3598
        %3600 = vrot.lane.b32.xlu0 %v429, 16
        %v3601 = vpop.permute.xlu0 %3600
        %3602 = vrot.lane.b32.xlu0 %v431, 16
        %v3603 = vpop.permute.xlu0 %3602
        %3604 = vrot.lane.b32.xlu0 %v433, 16
        %v3605 = vpop.permute.xlu0 %3604
        %v3606 = vsel %vm2866, %v2810, %v3569
        %v3607 = vsel %vm2866, %v2812, %v3571
        %v3608 = vsel %vm2866, %v2814, %v3573
        %v3609 = vsel %vm2866, %v2816, %v3575
        %v3610 = vsel %vm2866, %v2818, %v3577
        %v3611 = vsel %vm2866, %v2820, %v3579
        %v3612 = vsel %vm2866, %v2822, %v3581
        %v3613 = vsel %vm2866, %v2824, %v3583
        %v3614 = vsel %vm2866, %v2826, %v3585
        %v3615 = vsel %vm2866, %v2828, %v3587
        %v3616 = vsel %vm2866, %v2830, %v3589
        %v3617 = vsel %vm2866, %v2832, %v3591
        %v3618 = vsel %vm2866, %v2834, %v3593
        %v3619 = vsel %vm2866, %v2836, %v3595
        %v3620 = vsel %vm2866, %v2838, %v3597
        %v3621 = vsel %vm2866, %v2840, %v3599
        %v3622 = vsel %vm2866, %v2842, %v3601
        %v3623 = vsel %vm2866, %v2844, %v3603
        %v3624 = vsel %vm2866, %v2846, %v3605
        %v3663 = vsel %vm614, %v3606, %v539
        %v3664 = vsel %vm614, %v3607, %v543
        %v3665 = vsel %vm614, %v3608, %v547
        %v3666 = vsel %vm614, %v3609, %v551
        %v3667 = vsel %vm614, %v3610, %v555
        %v3668 = vsel %vm614, %v3611, %v559
        %v3669 = vsel %vm614, %v3612, %v563
        %v3670 = vsel %vm614, %v3613, %v567
        %v3671 = vsel %vm614, %v3614, %v571
        %v3672 = vsel %vm614, %v3615, %v575
        %v3673 = vsel %vm614, %v3616, %v579
        %v3674 = vsel %vm614, %v3617, %v583
        %v3675 = vsel %vm614, %v3618, %v587
        %v3676 = vsel %vm614, %v3619, %v591
        %v3677 = vsel %vm614, %v3620, %v595
        %v3678 = vsel %vm614, %v3621, %v599
        %v3679 = vsel %vm614, %v3622, %v603
        %v3680 = vsel %vm614, %v3623, %v607
        %v3681 = vsel %vm614, %v3624, %v611
        %v3682 = vmul.f32 %v396, %v3663
        %v3683 = vmul.f32 %v397, %v539
        %v3684 = vmul.f32 %v398, %v3664
        %v3685 = vmul.f32 %v399, %v543
        %v3686 = vmul.f32 %v400, %v3665
        %v3687 = vmul.f32 %v401, %v547
        %v3688 = vmul.f32 %v402, %v3666
        %v3689 = vmul.f32 %v403, %v551
        %v3690 = vmul.f32 %v404, %v3667
        %v3691 = vmul.f32 %v405, %v555
        %v3692 = vmul.f32 %v406, %v3668
        %v3693 = vmul.f32 %v407, %v559
        %v3694 = vmul.f32 %v408, %v3669
        %v3695 = vmul.f32 %v409, %v563
        %v3696 = vmul.f32 %v410, %v3670
        %v3697 = vmul.f32 %v411, %v567
        %v3698 = vmul.f32 %v412, %v3671
        %v3699 = vmul.f32 %v413, %v571
        %v3700 = vmul.f32 %v414, %v3672
        %v3701 = vmul.f32 %v415, %v575
        %v3702 = vmul.f32 %v416, %v3673
        %v3703 = vmul.f32 %v417, %v579
        %v3704 = vmul.f32 %v418, %v3674
        %v3705 = vmul.f32 %v419, %v583
        %v3706 = vmul.f32 %v420, %v3675
        %v3707 = vmul.f32 %v421, %v587
        %v3708 = vmul.f32 %v422, %v3676
        %v3709 = vmul.f32 %v423, %v591
        %v3710 = vmul.f32 %v424, %v3677
        %v3711 = vmul.f32 %v425, %v595
        %v3712 = vmul.f32 %v426, %v3678
        %v3713 = vmul.f32 %v427, %v599
        %v3714 = vmul.f32 %v428, %v3679
        %v3715 = vmul.f32 %v429, %v603
        %v3716 = vmul.f32 %v430, %v3680
        %v3717 = vmul.f32 %v431, %v607
        %v3718 = vmul.f32 %v432, %v3681
        %v3719 = vmul.f32 %v433, %v611
        %s3720 = scalar_lea.vmem [#allocation5], 1568
        %v3721 = vld [vmem:[%s3720] sm:$0xff]
        %v3722 = vld [vmem:[%s3720 + $0x8] sm:$0xff]
        %v3723 = vld [vmem:[%s3720 + $0x10] sm:$0xff]
        %v3724 = vld [vmem:[%s3720 + $0x18] sm:$0xff]
        %v3725 = vld [vmem:[%s3720 + $0x20] sm:$0xff]
        %v3726 = vld [vmem:[%s3720 + $0x28] sm:$0xff]
        %v3727 = vld [vmem:[%s3720 + $0x30] sm:$0xff]
        %v3728 = vld [vmem:[%s3720 + $0x38] sm:$0xff]
        %v3729 = vld [vmem:[%s3720 + $0x40] sm:$0xff]
        %v3730 = vld [vmem:[%s3720 + $0x48] sm:$0xff]
        %v3731 = vld [vmem:[%s3720 + $0x50] sm:$0xff]
        %v3732 = vld [vmem:[%s3720 + $0x58] sm:$0xff]
        %v3733 = vld [vmem:[%s3720 + $0x60] sm:$0xff]
        %v3734 = vld [vmem:[%s3720 + $0x68] sm:$0xff]
        %v3735 = vld [vmem:[%s3720 + $0x70] sm:$0xff]
        %v3736 = vld [vmem:[%s3720 + $0x78] sm:$0xff]
        %v3737 = vld [vmem:[%s3720 + $0x80] sm:$0xff]
        %v3738 = vld [vmem:[%s3720 + $0x88] sm:$0xff]
        %v3739 = vld [vmem:[%s3720 + $0x90] sm:$0xff]
        %v3740 = vld [vmem:[%s3720 + $0x98] sm:$0xff]
        %v3741 = vld [vmem:[%s3720 + $0xa0] sm:$0xff]
        %v3742 = vld [vmem:[%s3720 + $0xa8] sm:$0xff]
        %v3743 = vld [vmem:[%s3720 + $0xb0] sm:$0xff]
        %v3744 = vld [vmem:[%s3720 + $0xb8] sm:$0xff]
        %v3745 = vld [vmem:[%s3720 + $0xc0] sm:$0xff]
        %v3746 = vld [vmem:[%s3720 + $0xc8] sm:$0xff]
        %v3747 = vld [vmem:[%s3720 + $0xd0] sm:$0xff]
        %v3748 = vld [vmem:[%s3720 + $0xd8] sm:$0xff]
        %v3750 = vsel %vm816, %v3683, 0
        %v3753 = vsel %vm816, %v3685, 0
        %v3756 = vsel %vm816, %v3687, 0
        %v3759 = vsel %vm816, %v3689, 0
        %v3762 = vsel %vm816, %v3691, 0
        %v3765 = vsel %vm816, %v3693, 0
        %v3768 = vsel %vm816, %v3695, 0
        %v3771 = vsel %vm816, %v3697, 0
        %v3774 = vsel %vm816, %v3699, 0
        %v3777 = vsel %vm816, %v3701, 0
        %v3780 = vsel %vm816, %v3703, 0
        %v3783 = vsel %vm816, %v3705, 0
        %v3786 = vsel %vm816, %v3707, 0
        %v3789 = vsel %vm816, %v3709, 0
        %v3792 = vsel %vm816, %v3711, 0
        %v3795 = vsel %vm816, %v3713, 0
        %v3798 = vsel %vm816, %v3715, 0
        %v3801 = vsel %vm816, %v3717, 0
        %v3804 = vsel %vm816, %v3719, 0
        %3806 = vmatprep.subr.mxu0 0.0
        %3807 = vmatpush1.msra.mxu0 %v3721
        %3808 = vmatprep.subr.mxu0 0.0
        %3809 = vmatpush1.msra.mxu0 %v3722
        %3810 = vmatprep.subr.mxu0 0.0
        %3811 = vmatpush1.msra.mxu0 %v3723
        %3812 = vmatprep.subr.mxu0 0.0
        %3813 = vmatpush1.msra.mxu0 %v3724
        %3814 = vmatprep.subr.mxu0 0.0
        %3815 = vmatpush1.msra.mxu0 %v3725
        %3816 = vmatprep.subr.mxu0 0.0
        %3817 = vmatpush1.msra.mxu0 %v3726
        %3818 = vmatprep.subr.mxu0 0.0
        %3819 = vmatpush1.msra.mxu0 %v3727
        %3820 = vmatprep.subr.mxu0 0.0
        %3821 = vmatpush1.msra.mxu0 %v3728
        %3822 = vmatprep.subr.mxu0 0.0
        %3823 = vmatpush1.msra.mxu0 %v3729
        %3824 = vmatprep.subr.mxu0 0.0
        %3825 = vmatpush1.msra.mxu0 %v3730
        %3826 = vmatprep.subr.mxu0 0.0
        %3827 = vmatpush1.msra.mxu0 %v3731
        %3828 = vmatprep.subr.mxu0 0.0
        %3829 = vmatpush1.msra.mxu0 %v3732
        %3830 = vmatprep.subr.mxu0 0.0
        %3831 = vmatpush1.msra.mxu0 %v3733
        %3832 = vmatprep.subr.mxu0 0.0
        %3833 = vmatpush1.msra.mxu0 %v3734
        %3834 = vmatprep.subr.mxu0 0.0
        %3835 = vmatpush1.msra.mxu0 %v3735
        %3836 = vmatprep.subr.mxu0 0.0
        %3837 = vmatpush1.msra.mxu0 %v3736
        %3838 = vmatprep.subr.mxu0 0.0
        %3839 = vmatpush1.msra.mxu0 %v3737
        %3840 = vmatprep.subr.mxu0 0.0
        %3841 = vmatpush1.msra.mxu0 %v3738
        %3842 = vmatprep.subr.mxu0 0.0
        %3843 = vmatpush1.msra.mxu0 %v3739
        %3844 = vmatprep.subr.mxu0 0.0
        %3845 = vmatpush1.msra.mxu0 %v3740
        %3846 = vmatprep.subr.mxu0 0.0
        %3847 = vmatpush1.msra.mxu0 %v3741
        %3848 = vmatprep.subr.mxu0 0.0
        %3849 = vmatpush1.msra.mxu0 %v3742
        %3850 = vmatprep.subr.mxu0 0.0
        %3851 = vmatpush1.msra.mxu0 %v3743
        %3852 = vmatprep.subr.mxu0 0.0
        %3853 = vmatpush1.msra.mxu0 %v3744
        %3854 = vmatprep.subr.mxu0 0.0
        %3855 = vmatpush1.msra.mxu0 %v3745
        %3856 = vmatprep.subr.mxu0 0.0
        %3857 = vmatpush1.msra.mxu0 %v3746
        %3858 = vmatprep.subr.mxu0 0.0
        %3859 = vmatpush1.msra.mxu0 %v3747
        %3860 = vmatprep.subr.mxu0 0.0
        %3861 = vmatpush1.msra.mxu0 %v3748
        %3862 = vmatprep.subr.mxu0 0.0
        %3863 = vmatpush1.msra.mxu0 0.0
        %3864 = vmatprep.subr.mxu0 0.0
        %3865 = vmatpush1.msra.mxu0 0.0
        %3866 = vmatprep.subr.mxu0 0.0
        %3867 = vmatpush1.msra.mxu0 0.0
        %3868 = vmatprep.subr.mxu0 0.0
        %3869 = vmatpush1.msra.mxu0 0.0
        %3870 = vmatprep.mubr.f32.mxu0 %v3750
        %3871 = vmatmul.mubr.f32.gmra.mrb[0].mxu0 %v3682
        %v3872 = vpop.f32.mrb[0].mxu0
        %v3873 = vadd.f32 0.0, %v3872
        %v3874 = vpop.f32.mrb[0].mxu0
        %3875 = vmatprep.mubr.f32.mxu0 %v3753
        %3876 = vmatmul.mubr.f32.gmra.mrb[0].mxu0 %v3684
        %v3877 = vpop.f32.mrb[0].mxu0
        %v3878 = vadd.f32 0.0, %v3877
        %v3879 = vpop.f32.mrb[0].mxu0
        %3880 = vmatprep.mubr.f32.mxu0 %v3756
        %3881 = vmatmul.mubr.f32.gmra.mrb[0].mxu0 %v3686
        %v3882 = vpop.f32.mrb[0].mxu0
        %v3883 = vadd.f32 0.0, %v3882
        %v3884 = vpop.f32.mrb[0].mxu0
        %3885 = vmatprep.mubr.f32.mxu0 %v3759
        %3886 = vmatmul.mubr.f32.gmra.mrb[0].mxu0 %v3688
        %v3887 = vpop.f32.mrb[0].mxu0
        %v3888 = vadd.f32 0.0, %v3887
        %v3889 = vpop.f32.mrb[0].mxu0
        %3890 = vmatprep.mubr.f32.mxu0 %v3762
        %3891 = vmatmul.mubr.f32.gmra.mrb[0].mxu0 %v3690
        %v3892 = vpop.f32.mrb[0].mxu0
        %v3893 = vadd.f32 0.0, %v3892
        %v3894 = vpop.f32.mrb[0].mxu0
        %3895 = vmatprep.mubr.f32.mxu0 %v3765
        %3896 = vmatmul.mubr.f32.gmra.mrb[0].mxu0 %v3692
        %v3897 = vpop.f32.mrb[0].mxu0
        %v3898 = vadd.f32 0.0, %v3897
        %v3899 = vpop.f32.mrb[0].mxu0
        %3900 = vmatprep.mubr.f32.mxu0 %v3768
        %3901 = vmatmul.mubr.f32.gmra.mrb[0].mxu0 %v3694
        %v3902 = vpop.f32.mrb[0].mxu0
        %v3903 = vadd.f32 0.0, %v3902
        %v3904 = vpop.f32.mrb[0].mxu0
        %3905 = vmatprep.mubr.f32.mxu0 %v3771
        %3906 = vmatmul.mubr.f32.gmra.mrb[0].mxu0 %v3696
        %v3907 = vpop.f32.mrb[0].mxu0
        %v3908 = vadd.f32 0.0, %v3907
        %v3909 = vpop.f32.mrb[0].mxu0
        %3910 = vmatprep.mubr.f32.mxu0 %v3774
        %3911 = vmatmul.mubr.f32.gmra.mrb[0].mxu0 %v3698
        %v3912 = vpop.f32.mrb[0].mxu0
        %v3913 = vadd.f32 0.0, %v3912
        %v3914 = vpop.f32.mrb[0].mxu0
        %3915 = vmatprep.mubr.f32.mxu0 %v3777
        %3916 = vmatmul.mubr.f32.gmra.mrb[0].mxu0 %v3700
        %v3917 = vpop.f32.mrb[0].mxu0
        %v3918 = vadd.f32 0.0, %v3917
        %v3919 = vpop.f32.mrb[0].mxu0
        %3920 = vmatprep.mubr.f32.mxu0 %v3780
        %3921 = vmatmul.mubr.f32.gmra.mrb[0].mxu0 %v3702
        %v3922 = vpop.f32.mrb[0].mxu0
        %v3923 = vadd.f32 0.0, %v3922
        %v3924 = vpop.f32.mrb[0].mxu0
        %3925 = vmatprep.mubr.f32.mxu0 %v3783
        %3926 = vmatmul.mubr.f32.gmra.mrb[0].mxu0 %v3704
        %v3927 = vpop.f32.mrb[0].mxu0
        %v3928 = vadd.f32 0.0, %v3927
        %v3929 = vpop.f32.mrb[0].mxu0
        %3930 = vmatprep.mubr.f32.mxu0 %v3786
        %3931 = vmatmul.mubr.f32.gmra.mrb[0].mxu0 %v3706
        %v3932 = vpop.f32.mrb[0].mxu0
        %v3933 = vadd.f32 0.0, %v3932
        %v3934 = vpop.f32.mrb[0].mxu0
        %3935 = vmatprep.mubr.f32.mxu0 %v3789
        %3936 = vmatmul.mubr.f32.gmra.mrb[0].mxu0 %v3708
        %v3937 = vpop.f32.mrb[0].mxu0
        %v3938 = vadd.f32 0.0, %v3937
        %v3939 = vpop.f32.mrb[0].mxu0
        %3940 = vmatprep.mubr.f32.mxu0 %v3792
        %3941 = vmatmul.mubr.f32.gmra.mrb[0].mxu0 %v3710
        %v3942 = vpop.f32.mrb[0].mxu0
        %v3943 = vadd.f32 0.0, %v3942
        %v3944 = vpop.f32.mrb[0].mxu0
        %3945 = vmatprep.mubr.f32.mxu0 %v3795
        %3946 = vmatmul.mubr.f32.gmra.mrb[0].mxu0 %v3712
        %v3947 = vpop.f32.mrb[0].mxu0
        %v3948 = vadd.f32 0.0, %v3947
        %v3949 = vpop.f32.mrb[0].mxu0
        %3950 = vmatprep.mubr.f32.mxu0 %v3798
        %3951 = vmatmul.mubr.f32.gmra.mrb[0].mxu0 %v3714
        %v3952 = vpop.f32.mrb[0].mxu0
        %v3953 = vadd.f32 0.0, %v3952
        %v3954 = vpop.f32.mrb[0].mxu0
        %3955 = vmatprep.mubr.f32.mxu0 %v3801
        %3956 = vmatmul.mubr.f32.gmra.mrb[0].mxu0 %v3716
        %v3957 = vpop.f32.mrb[0].mxu0
        %v3958 = vadd.f32 0.0, %v3957
        %v3959 = vpop.f32.mrb[0].mxu0
        %3960 = vmatprep.mubr.f32.mxu0 %v3804
        %3961 = vmatmul.mubr.f32.gmra.mrb[0].mxu0 %v3718
        %v3962 = vpop.f32.mrb[0].mxu0
        %v3963 = vadd.f32 0.0, %v3962
        %v3964 = vpop.f32.mrb[0].mxu0
        %3965 = vdwg.mxu0
        %v3966 = vadd.f32 %v3549, %v3873
        %v3967 = vadd.f32 %v3550, %v3878
        %v3968 = vadd.f32 %v3551, %v3883
        %v3969 = vadd.f32 %v3552, %v3888
        %v3970 = vadd.f32 %v3553, %v3893
        %v3971 = vadd.f32 %v3554, %v3898
        %v3972 = vadd.f32 %v3555, %v3903
        %v3973 = vadd.f32 %v3556, %v3908
        %v3974 = vadd.f32 %v3557, %v3913
        %v3975 = vadd.f32 %v3558, %v3918
        %v3976 = vadd.f32 %v3559, %v3923
        %v3977 = vadd.f32 %v3560, %v3928
        %v3978 = vadd.f32 %v3561, %v3933
        %v3979 = vadd.f32 %v3562, %v3938
        %v3980 = vadd.f32 %v3563, %v3943
        %v3981 = vadd.f32 %v3564, %v3948
        %v3982 = vadd.f32 %v3565, %v3953
        %v3983 = vadd.f32 %v3566, %v3958
        %v3984 = vadd.f32 %v3567, %v3963
        %v3985 = vsel %vm614, %v3966, 0.0
        %3986 = vadd.xlane.f32.xlu0 %v3985
        %v3987 = vpop.xlane.xlu0 %3986
        %v3988 = vsel %vm614, %v3967, 0.0
        %3989 = vadd.xlane.f32.xlu0 %v3988
        %v3990 = vpop.xlane.xlu0 %3989
        %v3991 = vsel %vm614, %v3968, 0.0
        %3992 = vadd.xlane.f32.xlu0 %v3991
        %v3993 = vpop.xlane.xlu0 %3992
        %v3994 = vsel %vm614, %v3969, 0.0
        %3995 = vadd.xlane.f32.xlu0 %v3994
        %v3996 = vpop.xlane.xlu0 %3995
        %v3997 = vsel %vm614, %v3970, 0.0
        %3998 = vadd.xlane.f32.xlu0 %v3997
        %v3999 = vpop.xlane.xlu0 %3998
        %v4000 = vsel %vm614, %v3971, 0.0
        %4001 = vadd.xlane.f32.xlu0 %v4000
        %v4002 = vpop.xlane.xlu0 %4001
        %v4003 = vsel %vm614, %v3972, 0.0
        %4004 = vadd.xlane.f32.xlu0 %v4003
        %v4005 = vpop.xlane.xlu0 %4004
        %v4006 = vsel %vm614, %v3973, 0.0
        %4007 = vadd.xlane.f32.xlu0 %v4006
        %v4008 = vpop.xlane.xlu0 %4007
        %v4009 = vsel %vm614, %v3974, 0.0
        %4010 = vadd.xlane.f32.xlu0 %v4009
        %v4011 = vpop.xlane.xlu0 %4010
        %v4012 = vsel %vm614, %v3975, 0.0
        %4013 = vadd.xlane.f32.xlu0 %v4012
        %v4014 = vpop.xlane.xlu0 %4013
        %v4015 = vsel %vm614, %v3976, 0.0
        %4016 = vadd.xlane.f32.xlu0 %v4015
        %v4017 = vpop.xlane.xlu0 %4016
        %v4018 = vsel %vm614, %v3977, 0.0
        %4019 = vadd.xlane.f32.xlu0 %v4018
        %v4020 = vpop.xlane.xlu0 %4019
        %v4021 = vsel %vm614, %v3978, 0.0
        %4022 = vadd.xlane.f32.xlu0 %v4021
        %v4023 = vpop.xlane.xlu0 %4022
        %v4024 = vsel %vm614, %v3979, 0.0
        %4025 = vadd.xlane.f32.xlu0 %v4024
        %v4026 = vpop.xlane.xlu0 %4025
        %v4027 = vsel %vm614, %v3980, 0.0
        %4028 = vadd.xlane.f32.xlu0 %v4027
        %v4029 = vpop.xlane.xlu0 %4028
        %v4030 = vsel %vm614, %v3981, 0.0
        %4031 = vadd.xlane.f32.xlu0 %v4030
        %v4032 = vpop.xlane.xlu0 %4031
        %v4033 = vsel %vm614, %v3982, 0.0
        %4034 = vadd.xlane.f32.xlu0 %v4033
        %v4035 = vpop.xlane.xlu0 %4034
        %v4036 = vsel %vm614, %v3983, 0.0
        %4037 = vadd.xlane.f32.xlu0 %v4036
        %v4038 = vpop.xlane.xlu0 %4037
        %v4039 = vsel %vm614, %v3984, 0.0
        %4040 = vadd.xlane.f32.xlu0 %v4039
        %v4041 = vpop.xlane.xlu0 %4040
        %v4042 = vrcp.pop 112.0
        %v4043 = vmul.f32 %v3987, %v4042
        %v4044 = vmul.f32 %v3990, %v4042
        %v4045 = vmul.f32 %v3993, %v4042
        %v4046 = vmul.f32 %v3996, %v4042
        %v4047 = vmul.f32 %v3999, %v4042
        %v4048 = vmul.f32 %v4002, %v4042
        %v4049 = vmul.f32 %v4005, %v4042
        %v4050 = vmul.f32 %v4008, %v4042
        %v4051 = vmul.f32 %v4011, %v4042
        %v4052 = vmul.f32 %v4014, %v4042
        %v4053 = vmul.f32 %v4017, %v4042
        %v4054 = vmul.f32 %v4020, %v4042
        %v4055 = vmul.f32 %v4023, %v4042
        %v4056 = vmul.f32 %v4026, %v4042
        %v4057 = vmul.f32 %v4029, %v4042
        %v4058 = vmul.f32 %v4032, %v4042
        %v4059 = vmul.f32 %v4035, %v4042
        %v4060 = vmul.f32 %v4038, %v4042
        %v4061 = vmul.f32 %v4041, %v4042
        %v4062 = vsub.f32 %v3966, %v4043
        %v4063 = vsub.f32 %v3967, %v4044
        %v4064 = vsub.f32 %v3968, %v4045
        %v4065 = vsub.f32 %v3969, %v4046
        %v4066 = vsub.f32 %v3970, %v4047
        %v4067 = vsub.f32 %v3971, %v4048
        %v4068 = vsub.f32 %v3972, %v4049
        %v4069 = vsub.f32 %v3973, %v4050
        %v4070 = vsub.f32 %v3974, %v4051
        %v4071 = vsub.f32 %v3975, %v4052
        %v4072 = vsub.f32 %v3976, %v4053
        %v4073 = vsub.f32 %v3977, %v4054
        %v4074 = vsub.f32 %v3978, %v4055
        %v4075 = vsub.f32 %v3979, %v4056
        %v4076 = vsub.f32 %v3980, %v4057
        %v4077 = vsub.f32 %v3981, %v4058
        %v4078 = vsub.f32 %v3982, %v4059
        %v4079 = vsub.f32 %v3983, %v4060
        %v4080 = vsub.f32 %v3984, %v4061
        %v4081 = vmul.f32 %v4062, %v4062
        %v4082 = vmul.f32 %v4063, %v4063
        %v4083 = vmul.f32 %v4064, %v4064
        %v4084 = vmul.f32 %v4065, %v4065
        %v4085 = vmul.f32 %v4066, %v4066
        %v4086 = vmul.f32 %v4067, %v4067
        %v4087 = vmul.f32 %v4068, %v4068
        %v4088 = vmul.f32 %v4069, %v4069
        %v4089 = vmul.f32 %v4070, %v4070
        %v4090 = vmul.f32 %v4071, %v4071
        %v4091 = vmul.f32 %v4072, %v4072
        %v4092 = vmul.f32 %v4073, %v4073
        %v4093 = vmul.f32 %v4074, %v4074
        %v4094 = vmul.f32 %v4075, %v4075
        %v4095 = vmul.f32 %v4076, %v4076
        %v4096 = vmul.f32 %v4077, %v4077
        %v4097 = vmul.f32 %v4078, %v4078
        %v4098 = vmul.f32 %v4079, %v4079
        %v4099 = vmul.f32 %v4080, %v4080
        %v4100 = vsel %vm614, %v4081, 0.0
        %4101 = vadd.xlane.f32.xlu0 %v4100
        %v4102 = vpop.xlane.xlu0 %4101
        %v4103 = vsel %vm614, %v4082, 0.0
        %4104 = vadd.xlane.f32.xlu0 %v4103
        %v4105 = vpop.xlane.xlu0 %4104
        %v4106 = vsel %vm614, %v4083, 0.0
        %4107 = vadd.xlane.f32.xlu0 %v4106
        %v4108 = vpop.xlane.xlu0 %4107
        %v4109 = vsel %vm614, %v4084, 0.0
        %4110 = vadd.xlane.f32.xlu0 %v4109
        %v4111 = vpop.xlane.xlu0 %4110
        %v4112 = vsel %vm614, %v4085, 0.0
        %4113 = vadd.xlane.f32.xlu0 %v4112
        %v4114 = vpop.xlane.xlu0 %4113
        %v4115 = vsel %vm614, %v4086, 0.0
        %4116 = vadd.xlane.f32.xlu0 %v4115
        %v4117 = vpop.xlane.xlu0 %4116
        %v4118 = vsel %vm614, %v4087, 0.0
        %4119 = vadd.xlane.f32.xlu0 %v4118
        %v4120 = vpop.xlane.xlu0 %4119
        %v4121 = vsel %vm614, %v4088, 0.0
        %4122 = vadd.xlane.f32.xlu0 %v4121
        %v4123 = vpop.xlane.xlu0 %4122
        %v4124 = vsel %vm614, %v4089, 0.0
        %4125 = vadd.xlane.f32.xlu0 %v4124
        %v4126 = vpop.xlane.xlu0 %4125
        %v4127 = vsel %vm614, %v4090, 0.0
        %4128 = vadd.xlane.f32.xlu0 %v4127
        %v4129 = vpop.xlane.xlu0 %4128
        %v4130 = vsel %vm614, %v4091, 0.0
        %4131 = vadd.xlane.f32.xlu0 %v4130
        %v4132 = vpop.xlane.xlu0 %4131
        %v4133 = vsel %vm614, %v4092, 0.0
        %4134 = vadd.xlane.f32.xlu0 %v4133
        %v4135 = vpop.xlane.xlu0 %4134
        %v4136 = vsel %vm614, %v4093, 0.0
        %4137 = vadd.xlane.f32.xlu0 %v4136
        %v4138 = vpop.xlane.xlu0 %4137
        %v4139 = vsel %vm614, %v4094, 0.0
        %4140 = vadd.xlane.f32.xlu0 %v4139
        %v4141 = vpop.xlane.xlu0 %4140
        %v4142 = vsel %vm614, %v4095, 0.0
        %4143 = vadd.xlane.f32.xlu0 %v4142
        %v4144 = vpop.xlane.xlu0 %4143
        %v4145 = vsel %vm614, %v4096, 0.0
        %4146 = vadd.xlane.f32.xlu0 %v4145
        %v4147 = vpop.xlane.xlu0 %4146
        %v4148 = vsel %vm614, %v4097, 0.0
        %4149 = vadd.xlane.f32.xlu0 %v4148
        %v4150 = vpop.xlane.xlu0 %4149
        %v4151 = vsel %vm614, %v4098, 0.0
        %4152 = vadd.xlane.f32.xlu0 %v4151
        %v4153 = vpop.xlane.xlu0 %4152
        %v4154 = vsel %vm614, %v4099, 0.0
        %4155 = vadd.xlane.f32.xlu0 %v4154
        %v4156 = vpop.xlane.xlu0 %4155
        %v4157 = vmul.f32 %v4102, %v4042
        %v4158 = vmul.f32 %v4105, %v4042
        %v4159 = vmul.f32 %v4108, %v4042
        %v4160 = vmul.f32 %v4111, %v4042
        %v4161 = vmul.f32 %v4114, %v4042
        %v4162 = vmul.f32 %v4117, %v4042
        %v4163 = vmul.f32 %v4120, %v4042
        %v4164 = vmul.f32 %v4123, %v4042
        %v4165 = vmul.f32 %v4126, %v4042
        %v4166 = vmul.f32 %v4129, %v4042
        %v4167 = vmul.f32 %v4132, %v4042
        %v4168 = vmul.f32 %v4135, %v4042
        %v4169 = vmul.f32 %v4138, %v4042
        %v4170 = vmul.f32 %v4141, %v4042
        %v4171 = vmul.f32 %v4144, %v4042
        %v4172 = vmul.f32 %v4147, %v4042
        %v4173 = vmul.f32 %v4150, %v4042
        %v4174 = vmul.f32 %v4153, %v4042
        %v4175 = vmul.f32 %v4156, %v4042
        %v4176 = vadd.f32 %v4157, 1e-05
        %v4177 = vadd.f32 %v4158, 1e-05
        %v4178 = vadd.f32 %v4159, 1e-05
        %v4179 = vadd.f32 %v4160, 1e-05
        %v4180 = vadd.f32 %v4161, 1e-05
        %v4181 = vadd.f32 %v4162, 1e-05
        %v4182 = vadd.f32 %v4163, 1e-05
        %v4183 = vadd.f32 %v4164, 1e-05
        %v4184 = vadd.f32 %v4165, 1e-05
        %v4185 = vadd.f32 %v4166, 1e-05
        %v4186 = vadd.f32 %v4167, 1e-05
        %v4187 = vadd.f32 %v4168, 1e-05
        %v4188 = vadd.f32 %v4169, 1e-05
        %v4189 = vadd.f32 %v4170, 1e-05
        %v4190 = vadd.f32 %v4171, 1e-05
        %v4191 = vadd.f32 %v4172, 1e-05
        %v4192 = vadd.f32 %v4173, 1e-05
        %v4193 = vadd.f32 %v4174, 1e-05
        %v4194 = vadd.f32 %v4175, 1e-05
        %v4195 = vrsqrt.pop %v4176
        %v4196 = vrsqrt.pop %v4177
        %v4197 = vrsqrt.pop %v4178
        %v4198 = vrsqrt.pop %v4179
        %v4199 = vrsqrt.pop %v4180
        %v4200 = vrsqrt.pop %v4181
        %v4201 = vrsqrt.pop %v4182
        %v4202 = vrsqrt.pop %v4183
        %v4203 = vrsqrt.pop %v4184
        %v4204 = vrsqrt.pop %v4185
        %v4205 = vrsqrt.pop %v4186
        %v4206 = vrsqrt.pop %v4187
        %v4207 = vrsqrt.pop %v4188
        %v4208 = vrsqrt.pop %v4189
        %v4209 = vrsqrt.pop %v4190
        %v4210 = vrsqrt.pop %v4191
        %v4211 = vrsqrt.pop %v4192
        %v4212 = vrsqrt.pop %v4193
        %v4213 = vrsqrt.pop %v4194
        %v4214 = vmul.f32 %v4062, %v4195
        %v4215 = vmul.f32 %v4063, %v4196
        %v4216 = vmul.f32 %v4064, %v4197
        %v4217 = vmul.f32 %v4065, %v4198
        %v4218 = vmul.f32 %v4066, %v4199
        %v4219 = vmul.f32 %v4067, %v4200
        %v4220 = vmul.f32 %v4068, %v4201
        %v4221 = vmul.f32 %v4069, %v4202
        %v4222 = vmul.f32 %v4070, %v4203
        %v4223 = vmul.f32 %v4071, %v4204
        %v4224 = vmul.f32 %v4072, %v4205
        %v4225 = vmul.f32 %v4073, %v4206
        %v4226 = vmul.f32 %v4074, %v4207
        %v4227 = vmul.f32 %v4075, %v4208
        %v4228 = vmul.f32 %v4076, %v4209
        %v4229 = vmul.f32 %v4077, %v4210
        %v4230 = vmul.f32 %v4078, %v4211
        %v4231 = vmul.f32 %v4079, %v4212
        %v4232 = vmul.f32 %v4080, %v4213
        %v4233 = vld [vmem:[%s2] sm:$0x1]
        %v4235 = vlaneseq
        %v4236 = vshrl.u32 %v4235, 7
        %v4237 = vsub.s32 0, %v4236
        %v4238 = vrot.slane %v4233, %v4237
        %v4240 = vmul.f32 %v4214, %v4238
        %v4241 = vmul.f32 %v4215, %v4238
        %v4242 = vmul.f32 %v4216, %v4238
        %v4243 = vmul.f32 %v4217, %v4238
        %v4244 = vmul.f32 %v4218, %v4238
        %v4245 = vmul.f32 %v4219, %v4238
        %v4246 = vmul.f32 %v4220, %v4238
        %v4247 = vmul.f32 %v4221, %v4238
        %v4248 = vmul.f32 %v4222, %v4238
        %v4249 = vmul.f32 %v4223, %v4238
        %v4250 = vmul.f32 %v4224, %v4238
        %v4251 = vmul.f32 %v4225, %v4238
        %v4252 = vmul.f32 %v4226, %v4238
        %v4253 = vmul.f32 %v4227, %v4238
        %v4254 = vmul.f32 %v4228, %v4238
        %v4255 = vmul.f32 %v4229, %v4238
        %v4256 = vmul.f32 %v4230, %v4238
        %v4257 = vmul.f32 %v4231, %v4238
        %v4258 = vmul.f32 %v4232, %v4238
        %v4259 = vld [vmem:[%s3] sm:$0x1]
        %v4261 = vlaneseq
        %v4262 = vshrl.u32 %v4261, 7
        %v4263 = vsub.s32 0, %v4262
        %v4264 = vrot.slane %v4259, %v4263
        %v4266 = vadd.f32 %v4240, %v4264
        %v4267 = vadd.f32 %v4241, %v4264
        %v4268 = vadd.f32 %v4242, %v4264
        %v4269 = vadd.f32 %v4243, %v4264
        %v4270 = vadd.f32 %v4244, %v4264
        %v4271 = vadd.f32 %v4245, %v4264
        %v4272 = vadd.f32 %v4246, %v4264
        %v4273 = vadd.f32 %v4247, %v4264
        %v4274 = vadd.f32 %v4248, %v4264
        %v4275 = vadd.f32 %v4249, %v4264
        %v4276 = vadd.f32 %v4250, %v4264
        %v4277 = vadd.f32 %v4251, %v4264
        %v4278 = vadd.f32 %v4252, %v4264
        %v4279 = vadd.f32 %v4253, %v4264
        %v4280 = vadd.f32 %v4254, %v4264
        %v4281 = vadd.f32 %v4255, %v4264
        %v4282 = vadd.f32 %v4256, %v4264
        %v4283 = vadd.f32 %v4257, %v4264
        %v4284 = vadd.f32 %v4258, %v4264
        %v4285 = vld [vmem:[%s4] sm:$0xff]
        %v4286 = vld [vmem:[%s4 + $0x8] sm:$0xff]
        %v4287 = vld [vmem:[%s4 + $0x10] sm:$0xff]
        %v4288 = vld [vmem:[%s4 + $0x18] sm:$0xff]
        %v4289 = vld [vmem:[%s4 + $0x20] sm:$0xff]
        %v4290 = vld [vmem:[%s4 + $0x28] sm:$0xff]
        %v4291 = vld [vmem:[%s4 + $0x30] sm:$0xff]
        %v4292 = vld [vmem:[%s4 + $0x38] sm:$0xff]
        %v4293 = vld [vmem:[%s4 + $0x40] sm:$0xff]
        %v4294 = vld [vmem:[%s4 + $0x48] sm:$0xff]
        %v4295 = vld [vmem:[%s4 + $0x50] sm:$0xff]
        %v4296 = vld [vmem:[%s4 + $0x58] sm:$0xff]
        %v4297 = vld [vmem:[%s4 + $0x60] sm:$0xff]
        %v4298 = vld [vmem:[%s4 + $0x68] sm:$0xff]
        %v4299 = vld [vmem:[%s5] sm:$0x1]
        %v4301 = vlaneseq
        %v4302 = vshrl.u32 %v4301, 7
        %v4303 = vsub.s32 0, %v4302
        %v4304 = vrot.slane %v4299, %v4303
        %v4307 = vsel %vm614, %v4266, 0
        %v4310 = vsel %vm614, %v4267, 0
        %v4313 = vsel %vm614, %v4268, 0
        %v4316 = vsel %vm614, %v4269, 0
        %v4319 = vsel %vm614, %v4270, 0
        %v4322 = vsel %vm614, %v4271, 0
        %v4325 = vsel %vm614, %v4272, 0
        %v4328 = vsel %vm614, %v4273, 0
        %v4331 = vsel %vm614, %v4274, 0
        %v4334 = vsel %vm614, %v4275, 0
        %v4337 = vsel %vm614, %v4276, 0
        %v4340 = vsel %vm614, %v4277, 0
        %v4343 = vsel %vm614, %v4278, 0
        %v4346 = vsel %vm614, %v4279, 0
        %v4349 = vsel %vm614, %v4280, 0
        %v4352 = vsel %vm614, %v4281, 0
        %v4355 = vsel %vm614, %v4282, 0
        %v4358 = vsel %vm614, %v4283, 0
        %v4361 = vsel %vm614, %v4284, 0
        %4363 = vmatprep.subr.mxu0 0.0
        %4364 = vmatpush1.msra.mxu0 %v4285
        %4365 = vmatprep.subr.mxu0 0.0
        %4366 = vmatpush1.msra.mxu0 %v4286
        %4367 = vmatprep.subr.mxu0 0.0
        %4368 = vmatpush1.msra.mxu0 %v4287
        %4369 = vmatprep.subr.mxu0 0.0
        %4370 = vmatpush1.msra.mxu0 %v4288
        %4371 = vmatprep.subr.mxu0 0.0
        %4372 = vmatpush1.msra.mxu0 %v4289
        %4373 = vmatprep.subr.mxu0 0.0
        %4374 = vmatpush1.msra.mxu0 %v4290
        %4375 = vmatprep.subr.mxu0 0.0
        %4376 = vmatpush1.msra.mxu0 %v4291
        %4377 = vmatprep.subr.mxu0 0.0
        %4378 = vmatpush1.msra.mxu0 %v4292
        %4379 = vmatprep.subr.mxu0 0.0
        %4380 = vmatpush1.msra.mxu0 %v4293
        %4381 = vmatprep.subr.mxu0 0.0
        %4382 = vmatpush1.msra.mxu0 %v4294
        %4383 = vmatprep.subr.mxu0 0.0
        %4384 = vmatpush1.msra.mxu0 %v4295
        %4385 = vmatprep.subr.mxu0 0.0
        %4386 = vmatpush1.msra.mxu0 %v4296
        %4387 = vmatprep.subr.mxu0 0.0
        %4388 = vmatpush1.msra.mxu0 %v4297
        %4389 = vmatprep.subr.mxu0 0.0
        %4390 = vmatpush1.msra.mxu0 %v4298
        %4391 = vmatprep.subr.mxu0 0.0
        %4392 = vmatpush1.msra.mxu0 0.0
        %4393 = vmatprep.subr.mxu0 0.0
        %4394 = vmatpush1.msra.mxu0 0.0
        %4395 = vmatprep.subr.mxu0 0.0
        %4396 = vmatpush1.msra.mxu0 0.0
        %4397 = vmatprep.subr.mxu0 0.0
        %4398 = vmatpush1.msra.mxu0 0.0
        %4399 = vmatprep.subr.mxu0 0.0
        %4400 = vmatpush1.msra.mxu0 0.0
        %4401 = vmatprep.subr.mxu0 0.0
        %4402 = vmatpush1.msra.mxu0 0.0
        %4403 = vmatprep.subr.mxu0 0.0
        %4404 = vmatpush1.msra.mxu0 0.0
        %4405 = vmatprep.subr.mxu0 0.0
        %4406 = vmatpush1.msra.mxu0 0.0
        %4407 = vmatprep.subr.mxu0 0.0
        %4408 = vmatpush1.msra.mxu0 0.0
        %4409 = vmatprep.subr.mxu0 0.0
        %4410 = vmatpush1.msra.mxu0 0.0
        %4411 = vmatprep.subr.mxu0 0.0
        %4412 = vmatpush1.msra.mxu0 0.0
        %4413 = vmatprep.subr.mxu0 0.0
        %4414 = vmatpush1.msra.mxu0 0.0
        %4415 = vmatprep.subr.mxu0 0.0
        %4416 = vmatpush1.msra.mxu0 0.0
        %4417 = vmatprep.subr.mxu0 0.0
        %4418 = vmatpush1.msra.mxu0 0.0
        %4419 = vmatprep.subr.mxu0 0.0
        %4420 = vmatpush1.msra.mxu0 0.0
        %4421 = vmatprep.subr.mxu0 0.0
        %4422 = vmatpush1.msra.mxu0 0.0
        %4423 = vmatprep.subr.mxu0 0.0
        %4424 = vmatpush1.msra.mxu0 0.0
        %4425 = vmatprep.subr.mxu0 0.0
        %4426 = vmatpush1.msra.mxu0 0.0
        %4427 = vmatprep.mubr.f32.mxu0 0.0
        %4428 = vmatmul.mubr.f32.gmra.mrb[0].mxu0 %v4307
        %v4429 = vpop.f32.mrb[0].mxu0
        %v4430 = vadd.f32 %v4304, %v4429
        %v4431 = vpop.f32.mrb[0].mxu0
        %4432 = vmatprep.mubr.f32.mxu0 0.0
        %4433 = vmatmul.mubr.f32.gmra.mrb[0].mxu0 %v4310
        %v4434 = vpop.f32.mrb[0].mxu0
        %v4435 = vadd.f32 %v4304, %v4434
        %v4436 = vpop.f32.mrb[0].mxu0
        %4437 = vmatprep.mubr.f32.mxu0 0.0
        %4438 = vmatmul.mubr.f32.gmra.mrb[0].mxu0 %v4313
        %v4439 = vpop.f32.mrb[0].mxu0
        %v4440 = vadd.f32 %v4304, %v4439
        %v4441 = vpop.f32.mrb[0].mxu0
        %4442 = vmatprep.mubr.f32.mxu0 0.0
        %4443 = vmatmul.mubr.f32.gmra.mrb[0].mxu0 %v4316
        %v4444 = vpop.f32.mrb[0].mxu0
        %v4445 = vadd.f32 %v4304, %v4444
        %v4446 = vpop.f32.mrb[0].mxu0
        %4447 = vmatprep.mubr.f32.mxu0 0.0
        %4448 = vmatmul.mubr.f32.gmra.mrb[0].mxu0 %v4319
        %v4449 = vpop.f32.mrb[0].mxu0
        %v4450 = vadd.f32 %v4304, %v4449
        %v4451 = vpop.f32.mrb[0].mxu0
        %4452 = vmatprep.mubr.f32.mxu0 0.0
        %4453 = vmatmul.mubr.f32.gmra.mrb[0].mxu0 %v4322
        %v4454 = vpop.f32.mrb[0].mxu0
        %v4455 = vadd.f32 %v4304, %v4454
        %v4456 = vpop.f32.mrb[0].mxu0
        %4457 = vmatprep.mubr.f32.mxu0 0.0
        %4458 = vmatmul.mubr.f32.gmra.mrb[0].mxu0 %v4325
        %v4459 = vpop.f32.mrb[0].mxu0
        %v4460 = vadd.f32 %v4304, %v4459
        %v4461 = vpop.f32.mrb[0].mxu0
        %4462 = vmatprep.mubr.f32.mxu0 0.0
        %4463 = vmatmul.mubr.f32.gmra.mrb[0].mxu0 %v4328
        %v4464 = vpop.f32.mrb[0].mxu0
        %v4465 = vadd.f32 %v4304, %v4464
        %v4466 = vpop.f32.mrb[0].mxu0
        %4467 = vmatprep.mubr.f32.mxu0 0.0
        %4468 = vmatmul.mubr.f32.gmra.mrb[0].mxu0 %v4331
        %v4469 = vpop.f32.mrb[0].mxu0
        %v4470 = vadd.f32 %v4304, %v4469
        %v4471 = vpop.f32.mrb[0].mxu0
        %4472 = vmatprep.mubr.f32.mxu0 0.0
        %4473 = vmatmul.mubr.f32.gmra.mrb[0].mxu0 %v4334
        %v4474 = vpop.f32.mrb[0].mxu0
        %v4475 = vadd.f32 %v4304, %v4474
        %v4476 = vpop.f32.mrb[0].mxu0
        %4477 = vmatprep.mubr.f32.mxu0 0.0
        %4478 = vmatmul.mubr.f32.gmra.mrb[0].mxu0 %v4337
        %v4479 = vpop.f32.mrb[0].mxu0
        %v4480 = vadd.f32 %v4304, %v4479
        %v4481 = vpop.f32.mrb[0].mxu0
        %4482 = vmatprep.mubr.f32.mxu0 0.0
        %4483 = vmatmul.mubr.f32.gmra.mrb[0].mxu0 %v4340
        %v4484 = vpop.f32.mrb[0].mxu0
        %v4485 = vadd.f32 %v4304, %v4484
        %v4486 = vpop.f32.mrb[0].mxu0
        %4487 = vmatprep.mubr.f32.mxu0 0.0
        %4488 = vmatmul.mubr.f32.gmra.mrb[0].mxu0 %v4343
        %v4489 = vpop.f32.mrb[0].mxu0
        %v4490 = vadd.f32 %v4304, %v4489
        %v4491 = vpop.f32.mrb[0].mxu0
        %4492 = vmatprep.mubr.f32.mxu0 0.0
        %4493 = vmatmul.mubr.f32.gmra.mrb[0].mxu0 %v4346
        %v4494 = vpop.f32.mrb[0].mxu0
        %v4495 = vadd.f32 %v4304, %v4494
        %v4496 = vpop.f32.mrb[0].mxu0
        %4497 = vmatprep.mubr.f32.mxu0 0.0
        %4498 = vmatmul.mubr.f32.gmra.mrb[0].mxu0 %v4349
        %v4499 = vpop.f32.mrb[0].mxu0
        %v4500 = vadd.f32 %v4304, %v4499
        %v4501 = vpop.f32.mrb[0].mxu0
        %4502 = vmatprep.mubr.f32.mxu0 0.0
        %4503 = vmatmul.mubr.f32.gmra.mrb[0].mxu0 %v4352
        %v4504 = vpop.f32.mrb[0].mxu0
        %v4505 = vadd.f32 %v4304, %v4504
        %v4506 = vpop.f32.mrb[0].mxu0
        %4507 = vmatprep.mubr.f32.mxu0 0.0
        %4508 = vmatmul.mubr.f32.gmra.mrb[0].mxu0 %v4355
        %v4509 = vpop.f32.mrb[0].mxu0
        %v4510 = vadd.f32 %v4304, %v4509
        %v4511 = vpop.f32.mrb[0].mxu0
        %4512 = vmatprep.mubr.f32.mxu0 0.0
        %4513 = vmatmul.mubr.f32.gmra.mrb[0].mxu0 %v4358
        %v4514 = vpop.f32.mrb[0].mxu0
        %v4515 = vadd.f32 %v4304, %v4514
        %v4516 = vpop.f32.mrb[0].mxu0
        %4517 = vmatprep.mubr.f32.mxu0 0.0
        %4518 = vmatmul.mubr.f32.gmra.mrb[0].mxu0 %v4361
        %v4519 = vpop.f32.mrb[0].mxu0
        %v4520 = vadd.f32 %v4304, %v4519
        %v4521 = vpop.f32.mrb[0].mxu0
        %4522 = vdwg.mxu0
        %v4523 = vmax.f32 %v4430, 0.0
        %v4524 = vmax.f32 %v4435, 0.0
        %v4525 = vmax.f32 %v4440, 0.0
        %v4526 = vmax.f32 %v4445, 0.0
        %v4527 = vmax.f32 %v4450, 0.0
        %v4528 = vmax.f32 %v4455, 0.0
        %v4529 = vmax.f32 %v4460, 0.0
        %v4530 = vmax.f32 %v4465, 0.0
        %v4531 = vmax.f32 %v4470, 0.0
        %v4532 = vmax.f32 %v4475, 0.0
        %v4533 = vmax.f32 %v4480, 0.0
        %v4534 = vmax.f32 %v4485, 0.0
        %v4535 = vmax.f32 %v4490, 0.0
        %v4536 = vmax.f32 %v4495, 0.0
        %v4537 = vmax.f32 %v4500, 0.0
        %v4538 = vmax.f32 %v4505, 0.0
        %v4539 = vmax.f32 %v4510, 0.0
        %v4540 = vmax.f32 %v4515, 0.0
        %v4541 = vmax.f32 %v4520, 0.0
        %v4542 = vld [vmem:[%s6] sm:$0xff]
        %v4543 = vld [vmem:[%s6 + $0x8] sm:$0xff]
        %v4544 = vld [vmem:[%s6 + $0x10] sm:$0xff]
        %v4545 = vld [vmem:[%s6 + $0x18] sm:$0xff]
        %v4546 = vld [vmem:[%s7] sm:$0x1]
        %v4548 = vlaneseq
        %v4549 = vshrl.u32 %v4548, 7
        %v4550 = vsub.s32 0, %v4549
        %v4551 = vrot.slane %v4546, %v4550
        %v4554 = vsel %vm2391, %v4523, 0
        %v4557 = vsel %vm2391, %v4524, 0
        %v4560 = vsel %vm2391, %v4525, 0
        %v4563 = vsel %vm2391, %v4526, 0
        %v4566 = vsel %vm2391, %v4527, 0
        %v4569 = vsel %vm2391, %v4528, 0
        %v4572 = vsel %vm2391, %v4529, 0
        %v4575 = vsel %vm2391, %v4530, 0
        %v4578 = vsel %vm2391, %v4531, 0
        %v4581 = vsel %vm2391, %v4532, 0
        %v4584 = vsel %vm2391, %v4533, 0
        %v4587 = vsel %vm2391, %v4534, 0
        %v4590 = vsel %vm2391, %v4535, 0
        %v4593 = vsel %vm2391, %v4536, 0
        %v4596 = vsel %vm2391, %v4537, 0
        %v4599 = vsel %vm2391, %v4538, 0
        %v4602 = vsel %vm2391, %v4539, 0
        %v4605 = vsel %vm2391, %v4540, 0
        %v4608 = vsel %vm2391, %v4541, 0
        %4610 = vmatprep.subr.mxu0 0.0
        %4611 = vmatpush1.msra.mxu0 %v4542
        %4612 = vmatprep.subr.mxu0 0.0
        %4613 = vmatpush1.msra.mxu0 %v4543
        %4614 = vmatprep.subr.mxu0 0.0
        %4615 = vmatpush1.msra.mxu0 %v4544
        %4616 = vmatprep.subr.mxu0 0.0
        %4617 = vmatpush1.msra.mxu0 %v4545
        %4618 = vmatprep.subr.mxu0 0.0
        %4619 = vmatpush1.msra.mxu0 0.0
        %4620 = vmatprep.subr.mxu0 0.0
        %4621 = vmatpush1.msra.mxu0 0.0
        %4622 = vmatprep.subr.mxu0 0.0
        %4623 = vmatpush1.msra.mxu0 0.0
        %4624 = vmatprep.subr.mxu0 0.0
        %4625 = vmatpush1.msra.mxu0 0.0
        %4626 = vmatprep.subr.mxu0 0.0
        %4627 = vmatpush1.msra.mxu0 0.0
        %4628 = vmatprep.subr.mxu0 0.0
        %4629 = vmatpush1.msra.mxu0 0.0
        %4630 = vmatprep.subr.mxu0 0.0
        %4631 = vmatpush1.msra.mxu0 0.0
        %4632 = vmatprep.subr.mxu0 0.0
        %4633 = vmatpush1.msra.mxu0 0.0
        %4634 = vmatprep.subr.mxu0 0.0
        %4635 = vmatpush1.msra.mxu0 0.0
        %4636 = vmatprep.subr.mxu0 0.0
        %4637 = vmatpush1.msra.mxu0 0.0
        %4638 = vmatprep.subr.mxu0 0.0
        %4639 = vmatpush1.msra.mxu0 0.0
        %4640 = vmatprep.subr.mxu0 0.0
        %4641 = vmatpush1.msra.mxu0 0.0
        %4642 = vmatprep.subr.mxu0 0.0
        %4643 = vmatpush1.msra.mxu0 0.0
        %4644 = vmatprep.subr.mxu0 0.0
        %4645 = vmatpush1.msra.mxu0 0.0
        %4646 = vmatprep.subr.mxu0 0.0
        %4647 = vmatpush1.msra.mxu0 0.0
        %4648 = vmatprep.subr.mxu0 0.0
        %4649 = vmatpush1.msra.mxu0 0.0
        %4650 = vmatprep.subr.mxu0 0.0
        %4651 = vmatpush1.msra.mxu0 0.0
        %4652 = vmatprep.subr.mxu0 0.0
        %4653 = vmatpush1.msra.mxu0 0.0
        %4654 = vmatprep.subr.mxu0 0.0
        %4655 = vmatpush1.msra.mxu0 0.0
        %4656 = vmatprep.subr.mxu0 0.0
        %4657 = vmatpush1.msra.mxu0 0.0
        %4658 = vmatprep.subr.mxu0 0.0
        %4659 = vmatpush1.msra.mxu0 0.0
        %4660 = vmatprep.subr.mxu0 0.0
        %4661 = vmatpush1.msra.mxu0 0.0
        %4662 = vmatprep.subr.mxu0 0.0
        %4663 = vmatpush1.msra.mxu0 0.0
        %4664 = vmatprep.subr.mxu0 0.0
        %4665 = vmatpush1.msra.mxu0 0.0
        %4666 = vmatprep.subr.mxu0 0.0
        %4667 = vmatpush1.msra.mxu0 0.0
        %4668 = vmatprep.subr.mxu0 0.0
        %4669 = vmatpush1.msra.mxu0 0.0
        %4670 = vmatprep.subr.mxu0 0.0
        %4671 = vmatpush1.msra.mxu0 0.0
        %4672 = vmatprep.subr.mxu0 0.0
        %4673 = vmatpush1.msra.mxu0 0.0
        %4674 = vmatprep.mubr.f32.mxu0 0.0
        %4675 = vmatmul.mubr.f32.gmra.mrb[0].mxu0 %v4554
        %v4676 = vpop.f32.mrb[0].mxu0
        %v4677 = vadd.f32 %v4551, %v4676
        %v4678 = vpop.f32.mrb[0].mxu0
        %4679 = vmatprep.mubr.f32.mxu0 0.0
        %4680 = vmatmul.mubr.f32.gmra.mrb[0].mxu0 %v4557
        %v4681 = vpop.f32.mrb[0].mxu0
        %v4682 = vadd.f32 %v4551, %v4681
        %v4683 = vpop.f32.mrb[0].mxu0
        %4684 = vmatprep.mubr.f32.mxu0 0.0
        %4685 = vmatmul.mubr.f32.gmra.mrb[0].mxu0 %v4560
        %v4686 = vpop.f32.mrb[0].mxu0
        %v4687 = vadd.f32 %v4551, %v4686
        %v4688 = vpop.f32.mrb[0].mxu0
        %4689 = vmatprep.mubr.f32.mxu0 0.0
        %4690 = vmatmul.mubr.f32.gmra.mrb[0].mxu0 %v4563
        %v4691 = vpop.f32.mrb[0].mxu0
        %v4692 = vadd.f32 %v4551, %v4691
        %v4693 = vpop.f32.mrb[0].mxu0
        %4694 = vmatprep.mubr.f32.mxu0 0.0
        %4695 = vmatmul.mubr.f32.gmra.mrb[0].mxu0 %v4566
        %v4696 = vpop.f32.mrb[0].mxu0
        %v4697 = vadd.f32 %v4551, %v4696
        %v4698 = vpop.f32.mrb[0].mxu0
        %4699 = vmatprep.mubr.f32.mxu0 0.0
        %4700 = vmatmul.mubr.f32.gmra.mrb[0].mxu0 %v4569
        %v4701 = vpop.f32.mrb[0].mxu0
        %v4702 = vadd.f32 %v4551, %v4701
        %v4703 = vpop.f32.mrb[0].mxu0
        %4704 = vmatprep.mubr.f32.mxu0 0.0
        %4705 = vmatmul.mubr.f32.gmra.mrb[0].mxu0 %v4572
        %v4706 = vpop.f32.mrb[0].mxu0
        %v4707 = vadd.f32 %v4551, %v4706
        %v4708 = vpop.f32.mrb[0].mxu0
        %4709 = vmatprep.mubr.f32.mxu0 0.0
        %4710 = vmatmul.mubr.f32.gmra.mrb[0].mxu0 %v4575
        %v4711 = vpop.f32.mrb[0].mxu0
        %v4712 = vadd.f32 %v4551, %v4711
        %v4713 = vpop.f32.mrb[0].mxu0
        %4714 = vmatprep.mubr.f32.mxu0 0.0
        %4715 = vmatmul.mubr.f32.gmra.mrb[0].mxu0 %v4578
        %v4716 = vpop.f32.mrb[0].mxu0
        %v4717 = vadd.f32 %v4551, %v4716
        %v4718 = vpop.f32.mrb[0].mxu0
        %4719 = vmatprep.mubr.f32.mxu0 0.0
        %4720 = vmatmul.mubr.f32.gmra.mrb[0].mxu0 %v4581
        %v4721 = vpop.f32.mrb[0].mxu0
        %v4722 = vadd.f32 %v4551, %v4721
        %v4723 = vpop.f32.mrb[0].mxu0
        %4724 = vmatprep.mubr.f32.mxu0 0.0
        %4725 = vmatmul.mubr.f32.gmra.mrb[0].mxu0 %v4584
        %v4726 = vpop.f32.mrb[0].mxu0
        %v4727 = vadd.f32 %v4551, %v4726
        %v4728 = vpop.f32.mrb[0].mxu0
        %4729 = vmatprep.mubr.f32.mxu0 0.0
        %4730 = vmatmul.mubr.f32.gmra.mrb[0].mxu0 %v4587
        %v4731 = vpop.f32.mrb[0].mxu0
        %v4732 = vadd.f32 %v4551, %v4731
        %v4733 = vpop.f32.mrb[0].mxu0
        %4734 = vmatprep.mubr.f32.mxu0 0.0
        %4735 = vmatmul.mubr.f32.gmra.mrb[0].mxu0 %v4590
        %v4736 = vpop.f32.mrb[0].mxu0
        %v4737 = vadd.f32 %v4551, %v4736
        %v4738 = vpop.f32.mrb[0].mxu0
        %4739 = vmatprep.mubr.f32.mxu0 0.0
        %4740 = vmatmul.mubr.f32.gmra.mrb[0].mxu0 %v4593
        %v4741 = vpop.f32.mrb[0].mxu0
        %v4742 = vadd.f32 %v4551, %v4741
        %v4743 = vpop.f32.mrb[0].mxu0
        %4744 = vmatprep.mubr.f32.mxu0 0.0
        %4745 = vmatmul.mubr.f32.gmra.mrb[0].mxu0 %v4596
        %v4746 = vpop.f32.mrb[0].mxu0
        %v4747 = vadd.f32 %v4551, %v4746
        %v4748 = vpop.f32.mrb[0].mxu0
        %4749 = vmatprep.mubr.f32.mxu0 0.0
        %4750 = vmatmul.mubr.f32.gmra.mrb[0].mxu0 %v4599
        %v4751 = vpop.f32.mrb[0].mxu0
        %v4752 = vadd.f32 %v4551, %v4751
        %v4753 = vpop.f32.mrb[0].mxu0
        %4754 = vmatprep.mubr.f32.mxu0 0.0
        %4755 = vmatmul.mubr.f32.gmra.mrb[0].mxu0 %v4602
        %v4756 = vpop.f32.mrb[0].mxu0
        %v4757 = vadd.f32 %v4551, %v4756
        %v4758 = vpop.f32.mrb[0].mxu0
        %4759 = vmatprep.mubr.f32.mxu0 0.0
        %4760 = vmatmul.mubr.f32.gmra.mrb[0].mxu0 %v4605
        %v4761 = vpop.f32.mrb[0].mxu0
        %v4762 = vadd.f32 %v4551, %v4761
        %v4763 = vpop.f32.mrb[0].mxu0
        %4764 = vmatprep.mubr.f32.mxu0 0.0
        %4765 = vmatmul.mubr.f32.gmra.mrb[0].mxu0 %v4608
        %v4766 = vpop.f32.mrb[0].mxu0
        %v4767 = vadd.f32 %v4551, %v4766
        %v4768 = vpop.f32.mrb[0].mxu0
        %4769 = vdwg.mxu0
        %v4770 = vmax.f32 %v4677, 0.0
        %v4771 = vmax.f32 %v4682, 0.0
        %v4772 = vmax.f32 %v4687, 0.0
        %v4773 = vmax.f32 %v4692, 0.0
        %v4774 = vmax.f32 %v4697, 0.0
        %v4775 = vmax.f32 %v4702, 0.0
        %v4776 = vmax.f32 %v4707, 0.0
        %v4777 = vmax.f32 %v4712, 0.0
        %v4778 = vmax.f32 %v4717, 0.0
        %v4779 = vmax.f32 %v4722, 0.0
        %v4780 = vmax.f32 %v4727, 0.0
        %v4781 = vmax.f32 %v4732, 0.0
        %v4782 = vmax.f32 %v4737, 0.0
        %v4783 = vmax.f32 %v4742, 0.0
        %v4784 = vmax.f32 %v4747, 0.0
        %v4785 = vmax.f32 %v4752, 0.0
        %v4786 = vmax.f32 %v4757, 0.0
        %v4787 = vmax.f32 %v4762, 0.0
        %v4788 = vmax.f32 %v4767, 0.0
        %v4789 = vld [vmem:[%s8] sm:$0xff]
        %v4790 = vld [vmem:[%s8 + $0x8] sm:$0xff]
        %v4791 = vld [vmem:[%s8 + $0x10] sm:$0xff]
        %v4792 = vld [vmem:[%s8 + $0x18] sm:$0xff]
        %v4793 = vld [vmem:[%s9] sm:$0x1]
        %v4795 = vlaneseq
        %v4796 = vshrl.u32 %v4795, 7
        %v4797 = vsub.s32 0, %v4796
        %v4798 = vrot.slane %v4793, %v4797
        %v4801 = vsel %vm2391, %v4770, 0
        %v4804 = vsel %vm2391, %v4771, 0
        %v4807 = vsel %vm2391, %v4772, 0
        %v4810 = vsel %vm2391, %v4773, 0
        %v4813 = vsel %vm2391, %v4774, 0
        %v4816 = vsel %vm2391, %v4775, 0
        %v4819 = vsel %vm2391, %v4776, 0
        %v4822 = vsel %vm2391, %v4777, 0
        %v4825 = vsel %vm2391, %v4778, 0
        %v4828 = vsel %vm2391, %v4779, 0
        %v4831 = vsel %vm2391, %v4780, 0
        %v4834 = vsel %vm2391, %v4781, 0
        %v4837 = vsel %vm2391, %v4782, 0
        %v4840 = vsel %vm2391, %v4783, 0
        %v4843 = vsel %vm2391, %v4784, 0
        %v4846 = vsel %vm2391, %v4785, 0
        %v4849 = vsel %vm2391, %v4786, 0
        %v4852 = vsel %vm2391, %v4787, 0
        %v4855 = vsel %vm2391, %v4788, 0
        %4857 = vmatprep.subr.mxu0 0.0
        %4858 = vmatpush1.msra.mxu0 %v4789
        %4859 = vmatprep.subr.mxu0 0.0
        %4860 = vmatpush1.msra.mxu0 %v4790
        %4861 = vmatprep.subr.mxu0 0.0
        %4862 = vmatpush1.msra.mxu0 %v4791
        %4863 = vmatprep.subr.mxu0 0.0
        %4864 = vmatpush1.msra.mxu0 %v4792
        %4865 = vmatprep.subr.mxu0 0.0
        %4866 = vmatpush1.msra.mxu0 0.0
        %4867 = vmatprep.subr.mxu0 0.0
        %4868 = vmatpush1.msra.mxu0 0.0
        %4869 = vmatprep.subr.mxu0 0.0
        %4870 = vmatpush1.msra.mxu0 0.0
        %4871 = vmatprep.subr.mxu0 0.0
        %4872 = vmatpush1.msra.mxu0 0.0
        %4873 = vmatprep.subr.mxu0 0.0
        %4874 = vmatpush1.msra.mxu0 0.0
        %4875 = vmatprep.subr.mxu0 0.0
        %4876 = vmatpush1.msra.mxu0 0.0
        %4877 = vmatprep.subr.mxu0 0.0
        %4878 = vmatpush1.msra.mxu0 0.0
        %4879 = vmatprep.subr.mxu0 0.0
        %4880 = vmatpush1.msra.mxu0 0.0
        %4881 = vmatprep.subr.mxu0 0.0
        %4882 = vmatpush1.msra.mxu0 0.0
        %4883 = vmatprep.subr.mxu0 0.0
        %4884 = vmatpush1.msra.mxu0 0.0
        %4885 = vmatprep.subr.mxu0 0.0
        %4886 = vmatpush1.msra.mxu0 0.0
        %4887 = vmatprep.subr.mxu0 0.0
        %4888 = vmatpush1.msra.mxu0 0.0
        %4889 = vmatprep.subr.mxu0 0.0
        %4890 = vmatpush1.msra.mxu0 0.0
        %4891 = vmatprep.subr.mxu0 0.0
        %4892 = vmatpush1.msra.mxu0 0.0
        %4893 = vmatprep.subr.mxu0 0.0
        %4894 = vmatpush1.msra.mxu0 0.0
        %4895 = vmatprep.subr.mxu0 0.0
        %4896 = vmatpush1.msra.mxu0 0.0
        %4897 = vmatprep.subr.mxu0 0.0
        %4898 = vmatpush1.msra.mxu0 0.0
        %4899 = vmatprep.subr.mxu0 0.0
        %4900 = vmatpush1.msra.mxu0 0.0
        %4901 = vmatprep.subr.mxu0 0.0
        %4902 = vmatpush1.msra.mxu0 0.0
        %4903 = vmatprep.subr.mxu0 0.0
        %4904 = vmatpush1.msra.mxu0 0.0
        %4905 = vmatprep.subr.mxu0 0.0
        %4906 = vmatpush1.msra.mxu0 0.0
        %4907 = vmatprep.subr.mxu0 0.0
        %4908 = vmatpush1.msra.mxu0 0.0
        %4909 = vmatprep.subr.mxu0 0.0
        %4910 = vmatpush1.msra.mxu0 0.0
        %4911 = vmatprep.subr.mxu0 0.0
        %4912 = vmatpush1.msra.mxu0 0.0
        %4913 = vmatprep.subr.mxu0 0.0
        %4914 = vmatpush1.msra.mxu0 0.0
        %4915 = vmatprep.subr.mxu0 0.0
        %4916 = vmatpush1.msra.mxu0 0.0
        %4917 = vmatprep.subr.mxu0 0.0
        %4918 = vmatpush1.msra.mxu0 0.0
        %4919 = vmatprep.subr.mxu0 0.0
        %4920 = vmatpush1.msra.mxu0 0.0
        %4921 = vmatprep.mubr.f32.mxu0 0.0
        %4922 = vmatmul.mubr.f32.gmra.mrb[0].mxu0 %v4801
        %v4923 = vpop.f32.mrb[0].mxu0
        %v4924 = vadd.f32 %v4798, %v4923
        %v4925 = vpop.f32.mrb[0].mxu0
        %4926 = vmatprep.mubr.f32.mxu0 0.0
        %4927 = vmatmul.mubr.f32.gmra.mrb[0].mxu0 %v4804
        %v4928 = vpop.f32.mrb[0].mxu0
        %v4929 = vadd.f32 %v4798, %v4928
        %v4930 = vpop.f32.mrb[0].mxu0
        %4931 = vmatprep.mubr.f32.mxu0 0.0
        %4932 = vmatmul.mubr.f32.gmra.mrb[0].mxu0 %v4807
        %v4933 = vpop.f32.mrb[0].mxu0
        %v4934 = vadd.f32 %v4798, %v4933
        %v4935 = vpop.f32.mrb[0].mxu0
        %4936 = vmatprep.mubr.f32.mxu0 0.0
        %4937 = vmatmul.mubr.f32.gmra.mrb[0].mxu0 %v4810
        %v4938 = vpop.f32.mrb[0].mxu0
        %v4939 = vadd.f32 %v4798, %v4938
        %v4940 = vpop.f32.mrb[0].mxu0
        %4941 = vmatprep.mubr.f32.mxu0 0.0
        %4942 = vmatmul.mubr.f32.gmra.mrb[0].mxu0 %v4813
        %v4943 = vpop.f32.mrb[0].mxu0
        %v4944 = vadd.f32 %v4798, %v4943
        %v4945 = vpop.f32.mrb[0].mxu0
        %4946 = vmatprep.mubr.f32.mxu0 0.0
        %4947 = vmatmul.mubr.f32.gmra.mrb[0].mxu0 %v4816
        %v4948 = vpop.f32.mrb[0].mxu0
        %v4949 = vadd.f32 %v4798, %v4948
        %v4950 = vpop.f32.mrb[0].mxu0
        %4951 = vmatprep.mubr.f32.mxu0 0.0
        %4952 = vmatmul.mubr.f32.gmra.mrb[0].mxu0 %v4819
        %v4953 = vpop.f32.mrb[0].mxu0
        %v4954 = vadd.f32 %v4798, %v4953
        %v4955 = vpop.f32.mrb[0].mxu0
        %4956 = vmatprep.mubr.f32.mxu0 0.0
        %4957 = vmatmul.mubr.f32.gmra.mrb[0].mxu0 %v4822
        %v4958 = vpop.f32.mrb[0].mxu0
        %v4959 = vadd.f32 %v4798, %v4958
        %v4960 = vpop.f32.mrb[0].mxu0
        %4961 = vmatprep.mubr.f32.mxu0 0.0
        %4962 = vmatmul.mubr.f32.gmra.mrb[0].mxu0 %v4825
        %v4963 = vpop.f32.mrb[0].mxu0
        %v4964 = vadd.f32 %v4798, %v4963
        %v4965 = vpop.f32.mrb[0].mxu0
        %4966 = vmatprep.mubr.f32.mxu0 0.0
        %4967 = vmatmul.mubr.f32.gmra.mrb[0].mxu0 %v4828
        %v4968 = vpop.f32.mrb[0].mxu0
        %v4969 = vadd.f32 %v4798, %v4968
        %v4970 = vpop.f32.mrb[0].mxu0
        %4971 = vmatprep.mubr.f32.mxu0 0.0
        %4972 = vmatmul.mubr.f32.gmra.mrb[0].mxu0 %v4831
        %v4973 = vpop.f32.mrb[0].mxu0
        %v4974 = vadd.f32 %v4798, %v4973
        %v4975 = vpop.f32.mrb[0].mxu0
        %4976 = vmatprep.mubr.f32.mxu0 0.0
        %4977 = vmatmul.mubr.f32.gmra.mrb[0].mxu0 %v4834
        %v4978 = vpop.f32.mrb[0].mxu0
        %v4979 = vadd.f32 %v4798, %v4978
        %v4980 = vpop.f32.mrb[0].mxu0
        %4981 = vmatprep.mubr.f32.mxu0 0.0
        %4982 = vmatmul.mubr.f32.gmra.mrb[0].mxu0 %v4837
        %v4983 = vpop.f32.mrb[0].mxu0
        %v4984 = vadd.f32 %v4798, %v4983
        %v4985 = vpop.f32.mrb[0].mxu0
        %4986 = vmatprep.mubr.f32.mxu0 0.0
        %4987 = vmatmul.mubr.f32.gmra.mrb[0].mxu0 %v4840
        %v4988 = vpop.f32.mrb[0].mxu0
        %v4989 = vadd.f32 %v4798, %v4988
        %v4990 = vpop.f32.mrb[0].mxu0
        %4991 = vmatprep.mubr.f32.mxu0 0.0
        %4992 = vmatmul.mubr.f32.gmra.mrb[0].mxu0 %v4843
        %v4993 = vpop.f32.mrb[0].mxu0
        %v4994 = vadd.f32 %v4798, %v4993
        %v4995 = vpop.f32.mrb[0].mxu0
        %4996 = vmatprep.mubr.f32.mxu0 0.0
        %4997 = vmatmul.mubr.f32.gmra.mrb[0].mxu0 %v4846
        %v4998 = vpop.f32.mrb[0].mxu0
        %v4999 = vadd.f32 %v4798, %v4998
        %v5000 = vpop.f32.mrb[0].mxu0
        %5001 = vmatprep.mubr.f32.mxu0 0.0
        %5002 = vmatmul.mubr.f32.gmra.mrb[0].mxu0 %v4849
        %v5003 = vpop.f32.mrb[0].mxu0
        %v5004 = vadd.f32 %v4798, %v5003
        %v5005 = vpop.f32.mrb[0].mxu0
        %5006 = vmatprep.mubr.f32.mxu0 0.0
        %5007 = vmatmul.mubr.f32.gmra.mrb[0].mxu0 %v4852
        %v5008 = vpop.f32.mrb[0].mxu0
        %v5009 = vadd.f32 %v4798, %v5008
        %v5010 = vpop.f32.mrb[0].mxu0
        %5011 = vmatprep.mubr.f32.mxu0 0.0
        %5012 = vmatmul.mubr.f32.gmra.mrb[0].mxu0 %v4855
        %v5013 = vpop.f32.mrb[0].mxu0
        %v5014 = vadd.f32 %v4798, %v5013
        %v5015 = vpop.f32.mrb[0].mxu0
        %5016 = vdwg.mxu0
        %v5017 = vmax.f32 %v4924, 0.0
        %v5018 = vmax.f32 %v4929, 0.0
        %v5019 = vmax.f32 %v4934, 0.0
        %v5020 = vmax.f32 %v4939, 0.0
        %v5021 = vmax.f32 %v4944, 0.0
        %v5022 = vmax.f32 %v4949, 0.0
        %v5023 = vmax.f32 %v4954, 0.0
        %v5024 = vmax.f32 %v4959, 0.0
        %v5025 = vmax.f32 %v4964, 0.0
        %v5026 = vmax.f32 %v4969, 0.0
        %v5027 = vmax.f32 %v4974, 0.0
        %v5028 = vmax.f32 %v4979, 0.0
        %v5029 = vmax.f32 %v4984, 0.0
        %v5030 = vmax.f32 %v4989, 0.0
        %v5031 = vmax.f32 %v4994, 0.0
        %v5032 = vmax.f32 %v4999, 0.0
        %v5033 = vmax.f32 %v5004, 0.0
        %v5034 = vmax.f32 %v5009, 0.0
        %v5035 = vmax.f32 %v5014, 0.0
        %5036 = vst [vmem:[%s393] sm:$0xff] %v5017
        %5037 = vst [vmem:[%s393 + $0x8] sm:$0xff] %v5018
        %5038 = vst [vmem:[%s393 + $0x10] sm:$0xff] %v5019
        %5039 = vst [vmem:[%s393 + $0x18] sm:$0xff] %v5020
        %5040 = vst [vmem:[%s393 + $0x20] sm:$0xff] %v5021
        %5041 = vst [vmem:[%s393 + $0x28] sm:$0xff] %v5022
        %5042 = vst [vmem:[%s393 + $0x30] sm:$0xff] %v5023
        %5043 = vst [vmem:[%s393 + $0x38] sm:$0xff] %v5024
        %5044 = vst [vmem:[%s393 + $0x40] sm:$0xff] %v5025
        %5045 = vst [vmem:[%s393 + $0x48] sm:$0xff] %v5026
        %5046 = vst [vmem:[%s393 + $0x50] sm:$0xff] %v5027
        %5047 = vst [vmem:[%s393 + $0x58] sm:$0xff] %v5028
        %5048 = vst [vmem:[%s393 + $0x60] sm:$0xff] %v5029
        %5049 = vst [vmem:[%s393 + $0x68] sm:$0xff] %v5030
        %5050 = vst [vmem:[%s393 + $0x70] sm:$0xff] %v5031
        %5051 = vst [vmem:[%s393 + $0x78] sm:$0xff] %v5032
        %5052 = vst [vmem:[%s393 + $0x80] sm:$0xff] %v5033
        %5053 = vst [vmem:[%s393 + $0x88] sm:$0xff] %v5034
        %5054 = vst [vmem:[%s393 + $0x90] sm:$0xff] %v5035
        %s5055 = sand.u32 %s251, 1
        %s5056 = scalar_lea.sflag [#allocation4], %s5055
        %s5057 = sand.u32 %s251, 1
        %s5058 = smul.addr %s5057, 152
        %s5059 = scalar_lea.vmem [#allocation7], %s5058
        // Predicated region
        $region69: #{tpu_custom_call.1} parent=59 // pred_check
          %p5060 = pneg %p261
        $region70: #{tpu_custom_call.1} parent=59 // pred_check_branch
          %5062 = sbr.rel (%p5060) target = $region72
        $region71: #{tpu_custom_call.1} parent=59 // pred_region
          %s5063 = smul.u32 19, %s28
          %s5065 = ssub.s32 2432, 2432
          %5066 = vsyncadd %s5056, %s5065
          %s5067 = smul.addr %s5063, 128
          %s5068 = scalar_lea.hbm %s10, %s5067
          %s5069 = sshll.u32 %s5059, 4
          %s5070 = int_to_ptr.vmem [resolvable:$true] %s5069
          %5075 = dma.vmem_to_hbm [thread:$0]  %s5070, 2432, %s5068, %s5056, 128, 128, 8
        $region72: #{tpu_custom_call.1} parent=59 // pred_fallthru
          _
      $region60: #{tpu_custom_call.1} parent=5 // pred_fallthru
        _
      %p5076 = scmp.le.s32.totalorder 2, %s23
      // Predicated region
      $region73: #{tpu_custom_call.1} parent=5 // pred_check
        %p5077 = pneg %p5076
      $region74: #{tpu_custom_call.1} parent=5 // pred_check_branch
        %5079 = sbr.rel (%p5077) target = $region76
      $region75: #{tpu_custom_call.1} parent=5 // pred_region
        %s5080 = ssub.s32 %s23, 2
        // Predicated region
        $region77: #{tpu_custom_call.1} parent=75 // pred_check
          %p5081 = pneg %p267
        $region78: #{tpu_custom_call.1} parent=75 // pred_check_branch
          %5083 = sbr.rel (%p5081) target = $region80
        $region79: #{tpu_custom_call.1} parent=75 // pred_region
          %s5084 = sand.u32 %s252, 1
          %s5085 = scalar_lea.sflag [#allocation4], %s5084
          %s5086 = sand.u32 %s252, 1
          %s5087 = smul.addr %s5086, 152
          %s5088 = scalar_lea.vmem [#allocation7], %s5087
          %5089 = dma.done %s5085, 2432
        $region80: #{tpu_custom_call.1} parent=75 // pred_fallthru
          _
      $region76: #{tpu_custom_call.1} parent=5 // pred_fallthru
        _
    $region6: #{tpu_custom_call.1} parent=1 // loop_footer
      %s27 = sadd.s32 1, %s23
    $region7: #{tpu_custom_call.1} parent=1 // loop_footer_branch
      %22 = sbr.rel target = $region3
    $region8: #{tpu_custom_call.1} parent=1 // loop_exit
      _
    %5090 = vsyncpa [#allocation3], 1
    %s5091 = scalar_lea.sflag [#allocation3], 1
    %5092 = vsyncpa %s5091, 1
    %5093 = vsyncpa [#allocation6], 1
    %5094 = vsyncpa [#allocation4], 1
    %s5095 = scalar_lea.sflag [#allocation4], 1
    %5096 = vsyncpa %s5095, 1

</llo_original>
